<compile_context>
chip_gen: v6e
topology: v6e:2x2x1
jax: 0.10.0
libtpu: 0.0.40
codegen_flags: <defaults>
</compile_context>

<pallas_src>
import math

import jax
import jax.numpy as jnp
from jax import lax
from jax.experimental import pallas as pl
from jax.experimental.pallas import tpu as pltpu

# ----------------------------- model config ---------------------------------
B = 2            # batch
T = 8            # sequence length (block_size)
BT = B * T
C = 32           # n_embd
N_HEAD = 2
HD = C // N_HEAD # head dim
N_LAYER = 2
VOCAB = 32
COND_DIM = 4     # dimensionality of the conditioning features
MLP_H = 4 * C
LN_EPS = 1e-5


# ----------------------------- kernel helpers --------------------------------
def _layernorm(v, w, b):
    mu = jnp.mean(v, axis=-1, keepdims=True)
    var = jnp.mean((v - mu) ** 2, axis=-1, keepdims=True)
    return (v - mu) * lax.rsqrt(var + LN_EPS) * w + b


def _erf(x):
    # Abramowitz & Stegun 7.1.26 polynomial approximation of erf
    # (max abs error ~1.5e-7).  exp / mul / add / select only.
    a1, a2, a3, a4, a5 = 0.254829592, -0.284496736, 1.421413741, -1.453152027, 1.061405429
    pp = 0.3275911
    sgn = jnp.where(x >= 0.0, 1.0, -1.0)
    ax = jnp.abs(x)
    t = 1.0 / (1.0 + pp * ax)
    poly = ((((a5 * t + a4) * t + a3) * t + a2) * t + a1) * t
    return sgn * (1.0 - poly * jnp.exp(-ax * ax))


def _gelu_exact(x):
    # nn.GELU() default (exact, erf-based)
    return 0.5 * x * (1.0 + _erf(x * (1.0 / math.sqrt(2.0))))


# ----------------------------- fused GPT kernel ------------------------------
def gpt_kernel(idx_ref, cond_ref, mask_ref,
               wte_ref, wpe_ref, cond_w_ref, cond_b_ref,
               ln1w_ref, ln1b_ref, qkvw_ref, qkvb_ref, projw_ref, projb_ref,
               ln2w_ref, ln2b_ref, fcw_ref, fcb_ref, fc2w_ref, fc2b_ref,
               lnfw_ref, lnfb_ref, headw_ref,
               o_ref):
    f32, bf16 = jnp.float32, jnp.bfloat16

    # ---- fused embedding: one-hot MXU gather + positional + cond projection ----
    idx = idx_ref[...]                                              # (BT, 1) int32
    vocab_iota = lax.broadcasted_iota(jnp.int32, (BT, VOCAB), 1)
    onehot = jnp.where(vocab_iota == idx, 1.0, 0.0).astype(bf16)    # (BT, VOCAB)
    x = jnp.dot(onehot, wte_ref[...], preferred_element_type=f32)   # (BT, C)
    x = x + wpe_ref[...]                                            # pre-tiled (BT, C)
    x = x + jnp.dot(cond_ref[...].astype(bf16), cond_w_ref[...],
                    preferred_element_type=f32) + cond_b_ref[...]

    # Block-diagonal-causal additive mask (0 / -1e30), precomputed host-side.
    mask = mask_ref[...]                                            # (BT, BT) f32

    for l in range(N_LAYER):                                        # static unroll
        # ---- causal multi-head self-attention (all 2-D) ----
        h = _layernorm(x, ln1w_ref[l], ln1b_ref[l]).astype(bf16)    # LN in f32, cast once
        x = x + projb_ref[l]                                        # proj bias added once
        for hh in range(N_HEAD):                                    # static unroll
            base = (l * N_HEAD + hh) * 3
            # 1/sqrt(HD) is pre-folded into the Q weight/bias at pack time.
            q = jnp.dot(h, qkvw_ref[base + 0], preferred_element_type=f32) + qkvb_ref[base + 0]
            k = jnp.dot(h, qkvw_ref[base + 1], preferred_element_type=f32) + qkvb_ref[base + 1]
            v = jnp.dot(h, qkvw_ref[base + 2], preferred_element_type=f32) + qkvb_ref[base + 2]
            s = lax.dot_general(q.astype(bf16), k.astype(bf16),
                                (((1,), (1,)), ((), ())),
                                preferred_element_type=f32) + mask   # (BT, BT)
            # scores are O(1) after the folded scale; masked entries exp to 0,
            # so the per-row max subtraction is dropped (validated vs. reference).
            p = jnp.exp(s)
            p = p * pl.reciprocal(jnp.sum(p, axis=-1, keepdims=True), approx=True)
            o_h = jnp.dot(p.astype(bf16), v.astype(bf16), preferred_element_type=f32)
            # per-head projection accumulate (no lane-axis concat)
            x = x + jnp.dot(o_h.astype(bf16), projw_ref[l * N_HEAD + hh],
                            preferred_element_type=f32)

        # ---- MLP ----
        h2 = _layernorm(x, ln2w_ref[l], ln2b_ref[l])
        h2 = jnp.dot(h2.astype(bf16), fcw_ref[l], preferred_element_type=f32) + fcb_ref[l]
        h2 = _gelu_exact(h2)
        x = x + jnp.dot(h2.astype(bf16), fc2w_ref[l], preferred_element_type=f32) + fc2b_ref[l]

    # ---- final LayerNorm + lm_head ----
    hf = _layernorm(x, lnfw_ref[...], lnfb_ref[...])
    o_ref[...] = jnp.dot(hf.astype(bf16), headw_ref[...], preferred_element_type=f32)


# ----------------------------- parameter init --------------------------------
def init_params(key):
    ks = iter(jax.random.split(key, 64))
    n = lambda shape, s=0.02: (jax.random.normal(next(ks), shape, jnp.float32) * s)
    params = {
        "wte": n((VOCAB, C)),
        "wpe": n((T, C)),
        "cond_w": n((COND_DIM, C)),
        "cond_b": jnp.zeros((1, C), jnp.float32),
        "lnf_w": jnp.ones((1, C), jnp.float32),
        "lnf_b": jnp.zeros((1, C), jnp.float32),
        "head_w": n((C, VOCAB)),
        "blocks": [],
    }
    for _ in range(N_LAYER):
        params["blocks"].append({
            "ln1_w": jnp.ones((1, C), jnp.float32),
            "ln1_b": jnp.zeros((1, C), jnp.float32),
            "qkv_w": n((C, 3 * C)),
            "qkv_b": jnp.zeros((1, 3 * C), jnp.float32),
            "proj_w": n((C, C)),
            "proj_b": jnp.zeros((1, C), jnp.float32),
            "ln2_w": jnp.ones((1, C), jnp.float32),
            "ln2_b": jnp.zeros((1, C), jnp.float32),
            "fc_w": n((C, MLP_H)),
            "fc_b": jnp.zeros((1, MLP_H), jnp.float32),
            "fc2_w": n((MLP_H, C)),
            "fc2_b": jnp.zeros((1, C), jnp.float32),
        })
    return params


def pack_params(p):
    """Repack weights for the fused kernel (done once):
       * matmul weights cast to bf16 (elementwise params stay f32),
       * QKV split per (layer, head, q/k/v) with the 1/sqrt(HD) scale folded
         into the Q weight/bias,
       * proj_w split into per-head row slabs,
       * positional embedding pre-tiled to (B*T, C),
       * block-diagonal-causal additive mask precomputed."""
    bf = lambda a: a.astype(jnp.bfloat16)
    scale = 1.0 / math.sqrt(HD)

    qkv_w_list, qkv_b_list, proj_w_list = [], [], []
    for blk in p["blocks"]:
        w_full, b_full = blk["qkv_w"], blk["qkv_b"]
        for hh in range(N_HEAD):
            sl_q = slice(hh * HD, (hh + 1) * HD)
            sl_k = slice(C + hh * HD, C + (hh + 1) * HD)
            sl_v = slice(2 * C + hh * HD, 2 * C + (hh + 1) * HD)
            qkv_w_list += [w_full[:, sl_q] * scale, w_full[:, sl_k], w_full[:, sl_v]]
            qkv_b_list += [b_full[:, sl_q] * scale, b_full[:, sl_k], b_full[:, sl_v]]
            proj_w_list.append(blk["proj_w"][hh * HD:(hh + 1) * HD, :])

    stack = lambda name: jnp.stack([blk[name] for blk in p["blocks"]], axis=0)

    bt = jnp.arange(BT)
    bi, ti = bt // T, bt % T
    allowed = (bi[:, None] == bi[None, :]) & (ti[None, :] <= ti[:, None])
    mask = jnp.where(allowed, 0.0, -1e30).astype(jnp.float32)

    return {
        "mask": mask,                                         # (BT, BT) f32
        "wte": bf(p["wte"]),                                  # (VOCAB, C) bf16
        "wpe": jnp.tile(p["wpe"], (B, 1)).astype(jnp.float32),  # (BT, C) f32
        "cond_w": bf(p["cond_w"]), "cond_b": p["cond_b"],
        "ln1_w": stack("ln1_w"), "ln1_b": stack("ln1_b"),
        "qkv_w": bf(jnp.stack(qkv_w_list, 0)),                # (L*NH*3, C, HD) bf16
        "qkv_b": jnp.stack(qkv_b_list, 0),                    # (L*NH*3, 1, HD) f32
        "proj_w": bf(jnp.stack(proj_w_list, 0)),              # (L*NH, HD, C) bf16
        "proj_b": stack("proj_b"),
        "ln2_w": stack("ln2_w"), "ln2_b": stack("ln2_b"),
        "fc_w": bf(stack("fc_w")), "fc_b": stack("fc_b"),
        "fc2_w": bf(stack("fc2_w")), "fc2_b": stack("fc2_b"),
        "lnf_w": p["lnf_w"], "lnf_b": p["lnf_b"],
        "head_w": bf(p["head_w"]),
    }


# ----------------------------- forward pass ----------------------------------
@jax.jit
def forward(kp, idx, cond):
    # Only (free) reshapes remain outside the kernel — embedding gather, the
    # positional add and the cond projection are fused into the pallas_call.
    idx2 = idx.reshape(BT, 1).astype(jnp.int32)
    cond2 = cond.reshape(BT, COND_DIM).astype(jnp.float32)

    args = (idx2, cond2, kp["mask"],
            kp["wte"], kp["wpe"], kp["cond_w"], kp["cond_b"],
            kp["ln1_w"], kp["ln1_b"], kp["qkv_w"], kp["qkv_b"],
            kp["proj_w"], kp["proj_b"], kp["ln2_w"], kp["ln2_b"],
            kp["fc_w"], kp["fc_b"], kp["fc2_w"], kp["fc2_b"],
            kp["lnf_w"], kp["lnf_b"], kp["head_w"])

    logits = pl.pallas_call(
        gpt_kernel,
        out_shape=jax.ShapeDtypeStruct((BT, VOCAB), jnp.float32),
        in_specs=[pl.BlockSpec(memory_space=pltpu.MemorySpace.VMEM) for _ in args],
        out_specs=pl.BlockSpec(memory_space=pltpu.MemorySpace.VMEM),
    )(*args)
    return logits.reshape(B, T, VOCAB)


# Pure-JAX reference (true module semantics, un-packed f32 params).
def forward_ref(params, idx, cond):
    def ln(v, w, b):
        mu = jnp.mean(v, axis=-1, keepdims=True)
        var = jnp.mean((v - mu) ** 2, axis=-1, keepdims=True)
        return (v - mu) * lax.rsqrt(var + LN_EPS) * w + b

    x = (jnp.take(params["wte"], idx, axis=0) + params["wpe"][:T]
         + cond @ params["cond_w"] + params["cond_b"])
    causal = jnp.tril(jnp.ones((T, T), bool))
    for p in params["blocks"]:
        h = ln(x, p["ln1_w"], p["ln1_b"])
        qkv = h @ p["qkv_w"] + p["qkv_b"]
        q, k, v = qkv[..., :C], qkv[..., C:2 * C], qkv[..., 2 * C:]
        q = q.reshape(B, T, N_HEAD, HD).transpose(0, 2, 1, 3)
        k = k.reshape(B, T, N_HEAD, HD).transpose(0, 2, 1, 3)
        v = v.reshape(B, T, N_HEAD, HD).transpose(0, 2, 1, 3)
        s = jnp.einsum("bhqd,bhkd->bhqk", q, k) / math.sqrt(HD)
        s = jnp.where(causal, s, -1e30)
        a = jax.nn.softmax(s, axis=-1)
        y = jnp.einsum("bhqk,bhkd->bhqd", a, v).transpose(0, 2, 1, 3).reshape(B, T, C)
        x = x + y @ p["proj_w"] + p["proj_b"]
        h2 = ln(x, p["ln2_w"], p["ln2_b"])
        h2 = jax.nn.gelu(h2 @ p["fc_w"] + p["fc_b"], approximate=False)
        x = x + h2 @ p["fc2_w"] + p["fc2_b"]
    return ln(x, params["lnf_w"], params["lnf_b"]) @ params["head_w"]


if __name__ == "__main__":
    key = jax.random.PRNGKey(0)
    k_par, ki, kc = jax.random.split(key, 3)
    params = init_params(k_par)
    kparams = pack_params(params)
    idx = jax.random.randint(ki, (B, T), 0, VOCAB, dtype=jnp.int32)
    # TODO(synk): exact nanogpt `cond` handling in lpu3dnet is not public here;
    # we assume per-token continuous conditioning features projected to n_embd.
    cond = jax.random.normal(kc, (B, T, COND_DIM), jnp.float32)

    logits = forward(kparams, idx, cond)
    logits = jax.block_until_ready(logits)

    ref = forward_ref(params, idx, cond)
    assert logits.shape == (B, T, VOCAB)
    assert jnp.allclose(logits, ref, atol=5e-2, rtol=5e-2), "mismatch vs reference"
    print("KERNEL_OK")
</pallas_src>

<mosaic_0001>
module attributes {stable_mosaic.version = 11 : i64} {
  func.func @gpt_kernel(%arg0: memref<16x1xi32, #tpu.memory_space<vmem>>, %arg1: memref<16x4xf32, #tpu.memory_space<vmem>>, %arg2: memref<16x16xf32, #tpu.memory_space<vmem>>, %arg3: memref<32x32xbf16, #tpu.memory_space<vmem>>, %arg4: memref<16x32xf32, #tpu.memory_space<vmem>>, %arg5: memref<4x32xbf16, #tpu.memory_space<vmem>>, %arg6: memref<1x32xf32, #tpu.memory_space<vmem>>, %arg7: memref<2x1x32xf32, #tpu.memory_space<vmem>>, %arg8: memref<2x1x32xf32, #tpu.memory_space<vmem>>, %arg9: memref<12x32x16xbf16, #tpu.memory_space<vmem>>, %arg10: memref<12x1x16xf32, #tpu.memory_space<vmem>>, %arg11: memref<4x16x32xbf16, #tpu.memory_space<vmem>>, %arg12: memref<2x1x32xf32, #tpu.memory_space<vmem>>, %arg13: memref<2x1x32xf32, #tpu.memory_space<vmem>>, %arg14: memref<2x1x32xf32, #tpu.memory_space<vmem>>, %arg15: memref<2x32x128xbf16, #tpu.memory_space<vmem>>, %arg16: memref<2x1x128xf32, #tpu.memory_space<vmem>>, %arg17: memref<2x128x32xbf16, #tpu.memory_space<vmem>>, %arg18: memref<2x1x32xf32, #tpu.memory_space<vmem>>, %arg19: memref<1x32xf32, #tpu.memory_space<vmem>>, %arg20: memref<1x32xf32, #tpu.memory_space<vmem>>, %arg21: memref<32x32xbf16, #tpu.memory_space<vmem>>, %arg22: memref<16x32xf32, #tpu.memory_space<vmem>>) attributes {dimension_semantics = [], scalar_prefetch = 0 : i64, scratch_operands = 0 : i64, tpu.core_type = #tpu.core_type<tc>} {
    %c0 = arith.constant 0 : index
    %c0_0 = arith.constant 0 : index
    %0 = vector.load %arg0[%c0, %c0_0] : memref<16x1xi32, #tpu.memory_space<vmem>>, vector<16x1xi32>
    %1 = tpu.iota {dimensions = array<i32: 1>} : vector<16x32xi32>
    %2 = vector.broadcast %0 : vector<16x1xi32> to vector<16x32xi32>
    %3 = arith.cmpi eq, %1, %2 : vector<16x32xi32>
    %cst = arith.constant 1.000000e+00 : f32
    %cst_1 = arith.constant 0.000000e+00 : f32
    %4 = vector.broadcast %cst : f32 to vector<16x32xf32>
    %5 = vector.broadcast %cst_1 : f32 to vector<16x32xf32>
    %6 = arith.select %3, %4, %5 : vector<16x32xi1>, vector<16x32xf32>
    %7 = arith.truncf %6 : vector<16x32xf32> to vector<16x32xbf16>
    %c0_2 = arith.constant 0 : index
    %c0_3 = arith.constant 0 : index
    %8 = vector.load %arg3[%c0_2, %c0_3] : memref<32x32xbf16, #tpu.memory_space<vmem>>, vector<32x32xbf16>
    %cst_4 = arith.constant dense<0.000000e+00> : vector<16x32xf32>
    %9 = tpu.matmul %7, %8, %cst_4 {dimension_numbers = #tpu.dot_dimension_numbers<[1], [0], [0], [1], [0, 0, 1, 1], [], []>} : vector<16x32xbf16>, vector<32x32xbf16>, vector<16x32xf32> -> vector<16x32xf32>
    %c0_5 = arith.constant 0 : index
    %c0_6 = arith.constant 0 : index
    %10 = vector.load %arg4[%c0_5, %c0_6] : memref<16x32xf32, #tpu.memory_space<vmem>>, vector<16x32xf32>
    %11 = arith.addf %9, %10 : vector<16x32xf32>
    %c0_7 = arith.constant 0 : index
    %c0_8 = arith.constant 0 : index
    %12 = vector.load %arg1[%c0_7, %c0_8] : memref<16x4xf32, #tpu.memory_space<vmem>>, vector<16x4xf32>
    %13 = arith.truncf %12 : vector<16x4xf32> to vector<16x4xbf16>
    %c0_9 = arith.constant 0 : index
    %c0_10 = arith.constant 0 : index
    %14 = vector.load %arg5[%c0_9, %c0_10] : memref<4x32xbf16, #tpu.memory_space<vmem>>, vector<4x32xbf16>
    %cst_11 = arith.constant dense<0.000000e+00> : vector<16x32xf32>
    %15 = tpu.matmul %13, %14, %cst_11 {dimension_numbers = #tpu.dot_dimension_numbers<[1], [0], [0], [1], [0, 0, 1, 1], [], []>} : vector<16x4xbf16>, vector<4x32xbf16>, vector<16x32xf32> -> vector<16x32xf32>
    %16 = arith.addf %11, %15 : vector<16x32xf32>
    %c0_12 = arith.constant 0 : index
    %c0_13 = arith.constant 0 : index
    %17 = vector.load %arg6[%c0_12, %c0_13] : memref<1x32xf32, #tpu.memory_space<vmem>>, vector<1x32xf32>
    %18 = vector.broadcast %17 : vector<1x32xf32> to vector<16x32xf32>
    %19 = arith.addf %16, %18 : vector<16x32xf32>
    %c0_14 = arith.constant 0 : index
    %c0_15 = arith.constant 0 : index
    %20 = vector.load %arg2[%c0_14, %c0_15] : memref<16x16xf32, #tpu.memory_space<vmem>>, vector<16x16xf32>
    %c0_16 = arith.constant 0 : index
    %c0_17 = arith.constant 0 : index
    %c0_18 = arith.constant 0 : index
    %21 = vector.load %arg7[%c0_16, %c0_17, %c0_18] : memref<2x1x32xf32, #tpu.memory_space<vmem>>, vector<1x1x32xf32>
    %22 = vector.shape_cast %21 : vector<1x1x32xf32> to vector<1x32xf32>
    %c0_19 = arith.constant 0 : index
    %c0_20 = arith.constant 0 : index
    %c0_21 = arith.constant 0 : index
    %23 = vector.load %arg8[%c0_19, %c0_20, %c0_21] : memref<2x1x32xf32, #tpu.memory_space<vmem>>, vector<1x1x32xf32>
    %24 = vector.shape_cast %23 : vector<1x1x32xf32> to vector<1x32xf32>
    %cst_22 = arith.constant dense<0.000000e+00> : vector<16xf32>
    %25 = vector.multi_reduction <add>, %19, %cst_22 [1] : vector<16x32xf32> to vector<16xf32>
    %26 = vector.shape_cast %25 : vector<16xf32> to vector<16x1xf32>
    %cst_23 = arith.constant 3.200000e+01 : f32
    %27 = vector.broadcast %cst_23 : f32 to vector<16x1xf32>
    %28 = arith.divf %26, %27 : vector<16x1xf32>
    %29 = vector.broadcast %28 : vector<16x1xf32> to vector<16x32xf32>
    %30 = arith.subf %19, %29 : vector<16x32xf32>
    %31 = arith.mulf %30, %30 : vector<16x32xf32>
    %cst_24 = arith.constant dense<0.000000e+00> : vector<16xf32>
    %32 = vector.multi_reduction <add>, %31, %cst_24 [1] : vector<16x32xf32> to vector<16xf32>
    %33 = vector.shape_cast %32 : vector<16xf32> to vector<16x1xf32>
    %cst_25 = arith.constant 3.200000e+01 : f32
    %34 = vector.broadcast %cst_25 : f32 to vector<16x1xf32>
    %35 = arith.divf %33, %34 : vector<16x1xf32>
    %36 = vector.broadcast %28 : vector<16x1xf32> to vector<16x32xf32>
    %37 = arith.subf %19, %36 : vector<16x32xf32>
    %cst_26 = arith.constant 9.99999974E-6 : f32
    %38 = vector.broadcast %cst_26 : f32 to vector<16x1xf32>
    %39 = arith.addf %35, %38 : vector<16x1xf32>
    %40 = math.rsqrt %39 : vector<16x1xf32>
    %41 = vector.broadcast %40 : vector<16x1xf32> to vector<16x32xf32>
    %42 = arith.mulf %37, %41 : vector<16x32xf32>
    %43 = vector.broadcast %22 : vector<1x32xf32> to vector<16x32xf32>
    %44 = arith.mulf %42, %43 : vector<16x32xf32>
    %45 = vector.broadcast %24 : vector<1x32xf32> to vector<16x32xf32>
    %46 = arith.addf %44, %45 : vector<16x32xf32>
    %47 = arith.truncf %46 : vector<16x32xf32> to vector<16x32xbf16>
    %c0_27 = arith.constant 0 : index
    %c0_28 = arith.constant 0 : index
    %c0_29 = arith.constant 0 : index
    %48 = vector.load %arg12[%c0_27, %c0_28, %c0_29] : memref<2x1x32xf32, #tpu.memory_space<vmem>>, vector<1x1x32xf32>
    %49 = vector.shape_cast %48 : vector<1x1x32xf32> to vector<1x32xf32>
    %50 = vector.broadcast %49 : vector<1x32xf32> to vector<16x32xf32>
    %51 = arith.addf %19, %50 : vector<16x32xf32>
    %c0_30 = arith.constant 0 : index
    %c0_31 = arith.constant 0 : index
    %c0_32 = arith.constant 0 : index
    %52 = vector.load %arg9[%c0_30, %c0_31, %c0_32] : memref<12x32x16xbf16, #tpu.memory_space<vmem>>, vector<1x32x16xbf16>
    %53 = vector.shape_cast %52 : vector<1x32x16xbf16> to vector<32x16xbf16>
    %cst_33 = arith.constant dense<0.000000e+00> : vector<16x16xf32>
    %54 = tpu.matmul %47, %53, %cst_33 {dimension_numbers = #tpu.dot_dimension_numbers<[1], [0], [0], [1], [0, 0, 1, 1], [], []>} : vector<16x32xbf16>, vector<32x16xbf16>, vector<16x16xf32> -> vector<16x16xf32>
    %c0_34 = arith.constant 0 : index
    %c0_35 = arith.constant 0 : index
    %c0_36 = arith.constant 0 : index
    %55 = vector.load %arg10[%c0_34, %c0_35, %c0_36] : memref<12x1x16xf32, #tpu.memory_space<vmem>>, vector<1x1x16xf32>
    %56 = vector.shape_cast %55 : vector<1x1x16xf32> to vector<1x16xf32>
    %57 = vector.broadcast %56 : vector<1x16xf32> to vector<16x16xf32>
    %58 = arith.addf %54, %57 : vector<16x16xf32>
    %c1 = arith.constant 1 : index
    %c0_37 = arith.constant 0 : index
    %c0_38 = arith.constant 0 : index
    %59 = vector.load %arg9[%c1, %c0_37, %c0_38] : memref<12x32x16xbf16, #tpu.memory_space<vmem>>, vector<1x32x16xbf16>
    %60 = vector.shape_cast %59 : vector<1x32x16xbf16> to vector<32x16xbf16>
    %cst_39 = arith.constant dense<0.000000e+00> : vector<16x16xf32>
    %61 = tpu.matmul %47, %60, %cst_39 {dimension_numbers = #tpu.dot_dimension_numbers<[1], [0], [0], [1], [0, 0, 1, 1], [], []>} : vector<16x32xbf16>, vector<32x16xbf16>, vector<16x16xf32> -> vector<16x16xf32>
    %c1_40 = arith.constant 1 : index
    %c0_41 = arith.constant 0 : index
    %c0_42 = arith.constant 0 : index
    %62 = vector.load %arg10[%c1_40, %c0_41, %c0_42] : memref<12x1x16xf32, #tpu.memory_space<vmem>>, vector<1x1x16xf32>
    %63 = vector.shape_cast %62 : vector<1x1x16xf32> to vector<1x16xf32>
    %64 = vector.broadcast %63 : vector<1x16xf32> to vector<16x16xf32>
    %65 = arith.addf %61, %64 : vector<16x16xf32>
    %c2 = arith.constant 2 : index
    %c0_43 = arith.constant 0 : index
    %c0_44 = arith.constant 0 : index
    %66 = vector.load %arg9[%c2, %c0_43, %c0_44] : memref<12x32x16xbf16, #tpu.memory_space<vmem>>, vector<1x32x16xbf16>
    %67 = vector.shape_cast %66 : vector<1x32x16xbf16> to vector<32x16xbf16>
    %cst_45 = arith.constant dense<0.000000e+00> : vector<16x16xf32>
    %68 = tpu.matmul %47, %67, %cst_45 {dimension_numbers = #tpu.dot_dimension_numbers<[1], [0], [0], [1], [0, 0, 1, 1], [], []>} : vector<16x32xbf16>, vector<32x16xbf16>, vector<16x16xf32> -> vector<16x16xf32>
    %c2_46 = arith.constant 2 : index
    %c0_47 = arith.constant 0 : index
    %c0_48 = arith.constant 0 : index
    %69 = vector.load %arg10[%c2_46, %c0_47, %c0_48] : memref<12x1x16xf32, #tpu.memory_space<vmem>>, vector<1x1x16xf32>
    %70 = vector.shape_cast %69 : vector<1x1x16xf32> to vector<1x16xf32>
    %71 = vector.broadcast %70 : vector<1x16xf32> to vector<16x16xf32>
    %72 = arith.addf %68, %71 : vector<16x16xf32>
    %73 = arith.truncf %58 : vector<16x16xf32> to vector<16x16xbf16>
    %74 = arith.truncf %65 : vector<16x16xf32> to vector<16x16xbf16>
    %cst_49 = arith.constant dense<0.000000e+00> : vector<16x16xf32>
    %75 = tpu.matmul %73, %74, %cst_49 {dimension_numbers = #tpu.dot_dimension_numbers<[1], [1], [0], [0], [0, 0, 1, 0], [], []>} : vector<16x16xbf16>, vector<16x16xbf16>, vector<16x16xf32> -> vector<16x16xf32>
    %76 = arith.addf %75, %20 : vector<16x16xf32>
    %77 = math.exp %76 : vector<16x16xf32>
    %cst_50 = arith.constant dense<0.000000e+00> : vector<16xf32>
    %78 = vector.multi_reduction <add>, %77, %cst_50 [1] : vector<16x16xf32> to vector<16xf32>
    %79 = vector.shape_cast %78 : vector<16xf32> to vector<16x1xf32>
    %80 = tpu.reciprocal %79 {approx = true} : vector<16x1xf32> -> vector<16x1xf32>
    %81 = vector.broadcast %80 : vector<16x1xf32> to vector<16x16xf32>
    %82 = arith.mulf %77, %81 : vector<16x16xf32>
    %83 = arith.truncf %82 : vector<16x16xf32> to vector<16x16xbf16>
    %84 = arith.truncf %72 : vector<16x16xf32> to vector<16x16xbf16>
    %cst_51 = arith.constant dense<0.000000e+00> : vector<16x16xf32>
    %85 = tpu.matmul %83, %84, %cst_51 {dimension_numbers = #tpu.dot_dimension_numbers<[1], [0], [0], [1], [0, 0, 1, 1], [], []>} : vector<16x16xbf16>, vector<16x16xbf16>, vector<16x16xf32> -> vector<16x16xf32>
    %86 = arith.truncf %85 : vector<16x16xf32> to vector<16x16xbf16>
    %c0_52 = arith.constant 0 : index
    %c0_53 = arith.constant 0 : index
    %c0_54 = arith.constant 0 : index
    %87 = vector.load %arg11[%c0_52, %c0_53, %c0_54] : memref<4x16x32xbf16, #tpu.memory_space<vmem>>, vector<1x16x32xbf16>
    %88 = vector.shape_cast %87 : vector<1x16x32xbf16> to vector<16x32xbf16>
    %cst_55 = arith.constant dense<0.000000e+00> : vector<16x32xf32>
    %89 = tpu.matmul %86, %88, %cst_55 {dimension_numbers = #tpu.dot_dimension_numbers<[1], [0], [0], [1], [0, 0, 1, 1], [], []>} : vector<16x16xbf16>, vector<16x32xbf16>, vector<16x32xf32> -> vector<16x32xf32>
    %90 = arith.addf %51, %89 : vector<16x32xf32>
    %c3 = arith.constant 3 : index
    %c0_56 = arith.constant 0 : index
    %c0_57 = arith.constant 0 : index
    %91 = vector.load %arg9[%c3, %c0_56, %c0_57] : memref<12x32x16xbf16, #tpu.memory_space<vmem>>, vector<1x32x16xbf16>
    %92 = vector.shape_cast %91 : vector<1x32x16xbf16> to vector<32x16xbf16>
    %cst_58 = arith.constant dense<0.000000e+00> : vector<16x16xf32>
    %93 = tpu.matmul %47, %92, %cst_58 {dimension_numbers = #tpu.dot_dimension_numbers<[1], [0], [0], [1], [0, 0, 1, 1], [], []>} : vector<16x32xbf16>, vector<32x16xbf16>, vector<16x16xf32> -> vector<16x16xf32>
    %c3_59 = arith.constant 3 : index
    %c0_60 = arith.constant 0 : index
    %c0_61 = arith.constant 0 : index
    %94 = vector.load %arg10[%c3_59, %c0_60, %c0_61] : memref<12x1x16xf32, #tpu.memory_space<vmem>>, vector<1x1x16xf32>
    %95 = vector.shape_cast %94 : vector<1x1x16xf32> to vector<1x16xf32>
    %96 = vector.broadcast %95 : vector<1x16xf32> to vector<16x16xf32>
    %97 = arith.addf %93, %96 : vector<16x16xf32>
    %c4 = arith.constant 4 : index
    %c0_62 = arith.constant 0 : index
    %c0_63 = arith.constant 0 : index
    %98 = vector.load %arg9[%c4, %c0_62, %c0_63] : memref<12x32x16xbf16, #tpu.memory_space<vmem>>, vector<1x32x16xbf16>
    %99 = vector.shape_cast %98 : vector<1x32x16xbf16> to vector<32x16xbf16>
    %cst_64 = arith.constant dense<0.000000e+00> : vector<16x16xf32>
    %100 = tpu.matmul %47, %99, %cst_64 {dimension_numbers = #tpu.dot_dimension_numbers<[1], [0], [0], [1], [0, 0, 1, 1], [], []>} : vector<16x32xbf16>, vector<32x16xbf16>, vector<16x16xf32> -> vector<16x16xf32>
    %c4_65 = arith.constant 4 : index
    %c0_66 = arith.constant 0 : index
    %c0_67 = arith.constant 0 : index
    %101 = vector.load %arg10[%c4_65, %c0_66, %c0_67] : memref<12x1x16xf32, #tpu.memory_space<vmem>>, vector<1x1x16xf32>
    %102 = vector.shape_cast %101 : vector<1x1x16xf32> to vector<1x16xf32>
    %103 = vector.broadcast %102 : vector<1x16xf32> to vector<16x16xf32>
    %104 = arith.addf %100, %103 : vector<16x16xf32>
    %c5 = arith.constant 5 : index
    %c0_68 = arith.constant 0 : index
    %c0_69 = arith.constant 0 : index
    %105 = vector.load %arg9[%c5, %c0_68, %c0_69] : memref<12x32x16xbf16, #tpu.memory_space<vmem>>, vector<1x32x16xbf16>
    %106 = vector.shape_cast %105 : vector<1x32x16xbf16> to vector<32x16xbf16>
    %cst_70 = arith.constant dense<0.000000e+00> : vector<16x16xf32>
    %107 = tpu.matmul %47, %106, %cst_70 {dimension_numbers = #tpu.dot_dimension_numbers<[1], [0], [0], [1], [0, 0, 1, 1], [], []>} : vector<16x32xbf16>, vector<32x16xbf16>, vector<16x16xf32> -> vector<16x16xf32>
    %c5_71 = arith.constant 5 : index
    %c0_72 = arith.constant 0 : index
    %c0_73 = arith.constant 0 : index
    %108 = vector.load %arg10[%c5_71, %c0_72, %c0_73] : memref<12x1x16xf32, #tpu.memory_space<vmem>>, vector<1x1x16xf32>
    %109 = vector.shape_cast %108 : vector<1x1x16xf32> to vector<1x16xf32>
    %110 = vector.broadcast %109 : vector<1x16xf32> to vector<16x16xf32>
    %111 = arith.addf %107, %110 : vector<16x16xf32>
    %112 = arith.truncf %97 : vector<16x16xf32> to vector<16x16xbf16>
    %113 = arith.truncf %104 : vector<16x16xf32> to vector<16x16xbf16>
    %cst_74 = arith.constant dense<0.000000e+00> : vector<16x16xf32>
    %114 = tpu.matmul %112, %113, %cst_74 {dimension_numbers = #tpu.dot_dimension_numbers<[1], [1], [0], [0], [0, 0, 1, 0], [], []>} : vector<16x16xbf16>, vector<16x16xbf16>, vector<16x16xf32> -> vector<16x16xf32>
    %115 = arith.addf %114, %20 : vector<16x16xf32>
    %116 = math.exp %115 : vector<16x16xf32>
    %cst_75 = arith.constant dense<0.000000e+00> : vector<16xf32>
    %117 = vector.multi_reduction <add>, %116, %cst_75 [1] : vector<16x16xf32> to vector<16xf32>
    %118 = vector.shape_cast %117 : vector<16xf32> to vector<16x1xf32>
    %119 = tpu.reciprocal %118 {approx = true} : vector<16x1xf32> -> vector<16x1xf32>
    %120 = vector.broadcast %119 : vector<16x1xf32> to vector<16x16xf32>
    %121 = arith.mulf %116, %120 : vector<16x16xf32>
    %122 = arith.truncf %121 : vector<16x16xf32> to vector<16x16xbf16>
    %123 = arith.truncf %111 : vector<16x16xf32> to vector<16x16xbf16>
    %cst_76 = arith.constant dense<0.000000e+00> : vector<16x16xf32>
    %124 = tpu.matmul %122, %123, %cst_76 {dimension_numbers = #tpu.dot_dimension_numbers<[1], [0], [0], [1], [0, 0, 1, 1], [], []>} : vector<16x16xbf16>, vector<16x16xbf16>, vector<16x16xf32> -> vector<16x16xf32>
    %125 = arith.truncf %124 : vector<16x16xf32> to vector<16x16xbf16>
    %c1_77 = arith.constant 1 : index
    %c0_78 = arith.constant 0 : index
    %c0_79 = arith.constant 0 : index
    %126 = vector.load %arg11[%c1_77, %c0_78, %c0_79] : memref<4x16x32xbf16, #tpu.memory_space<vmem>>, vector<1x16x32xbf16>
    %127 = vector.shape_cast %126 : vector<1x16x32xbf16> to vector<16x32xbf16>
    %cst_80 = arith.constant dense<0.000000e+00> : vector<16x32xf32>
    %128 = tpu.matmul %125, %127, %cst_80 {dimension_numbers = #tpu.dot_dimension_numbers<[1], [0], [0], [1], [0, 0, 1, 1], [], []>} : vector<16x16xbf16>, vector<16x32xbf16>, vector<16x32xf32> -> vector<16x32xf32>
    %129 = arith.addf %90, %128 : vector<16x32xf32>
    %c0_81 = arith.constant 0 : index
    %c0_82 = arith.constant 0 : index
    %c0_83 = arith.constant 0 : index
    %130 = vector.load %arg13[%c0_81, %c0_82, %c0_83] : memref<2x1x32xf32, #tpu.memory_space<vmem>>, vector<1x1x32xf32>
    %131 = vector.shape_cast %130 : vector<1x1x32xf32> to vector<1x32xf32>
    %c0_84 = arith.constant 0 : index
    %c0_85 = arith.constant 0 : index
    %c0_86 = arith.constant 0 : index
    %132 = vector.load %arg14[%c0_84, %c0_85, %c0_86] : memref<2x1x32xf32, #tpu.memory_space<vmem>>, vector<1x1x32xf32>
    %133 = vector.shape_cast %132 : vector<1x1x32xf32> to vector<1x32xf32>
    %cst_87 = arith.constant dense<0.000000e+00> : vector<16xf32>
    %134 = vector.multi_reduction <add>, %129, %cst_87 [1] : vector<16x32xf32> to vector<16xf32>
    %135 = vector.shape_cast %134 : vector<16xf32> to vector<16x1xf32>
    %cst_88 = arith.constant 3.200000e+01 : f32
    %136 = vector.broadcast %cst_88 : f32 to vector<16x1xf32>
    %137 = arith.divf %135, %136 : vector<16x1xf32>
    %138 = vector.broadcast %137 : vector<16x1xf32> to vector<16x32xf32>
    %139 = arith.subf %129, %138 : vector<16x32xf32>
    %140 = arith.mulf %139, %139 : vector<16x32xf32>
    %cst_89 = arith.constant dense<0.000000e+00> : vector<16xf32>
    %141 = vector.multi_reduction <add>, %140, %cst_89 [1] : vector<16x32xf32> to vector<16xf32>
    %142 = vector.shape_cast %141 : vector<16xf32> to vector<16x1xf32>
    %cst_90 = arith.constant 3.200000e+01 : f32
    %143 = vector.broadcast %cst_90 : f32 to vector<16x1xf32>
    %144 = arith.divf %142, %143 : vector<16x1xf32>
    %145 = vector.broadcast %137 : vector<16x1xf32> to vector<16x32xf32>
    %146 = arith.subf %129, %145 : vector<16x32xf32>
    %cst_91 = arith.constant 9.99999974E-6 : f32
    %147 = vector.broadcast %cst_91 : f32 to vector<16x1xf32>
    %148 = arith.addf %144, %147 : vector<16x1xf32>
    %149 = math.rsqrt %148 : vector<16x1xf32>
    %150 = vector.broadcast %149 : vector<16x1xf32> to vector<16x32xf32>
    %151 = arith.mulf %146, %150 : vector<16x32xf32>
    %152 = vector.broadcast %131 : vector<1x32xf32> to vector<16x32xf32>
    %153 = arith.mulf %151, %152 : vector<16x32xf32>
    %154 = vector.broadcast %133 : vector<1x32xf32> to vector<16x32xf32>
    %155 = arith.addf %153, %154 : vector<16x32xf32>
    %156 = arith.truncf %155 : vector<16x32xf32> to vector<16x32xbf16>
    %c0_92 = arith.constant 0 : index
    %c0_93 = arith.constant 0 : index
    %c0_94 = arith.constant 0 : index
    %157 = vector.load %arg15[%c0_92, %c0_93, %c0_94] : memref<2x32x128xbf16, #tpu.memory_space<vmem>>, vector<1x32x128xbf16>
    %158 = vector.shape_cast %157 : vector<1x32x128xbf16> to vector<32x128xbf16>
    %cst_95 = arith.constant dense<0.000000e+00> : vector<16x128xf32>
    %159 = tpu.matmul %156, %158, %cst_95 {dimension_numbers = #tpu.dot_dimension_numbers<[1], [0], [0], [1], [0, 0, 1, 1], [], []>} : vector<16x32xbf16>, vector<32x128xbf16>, vector<16x128xf32> -> vector<16x128xf32>
    %c0_96 = arith.constant 0 : index
    %c0_97 = arith.constant 0 : index
    %c0_98 = arith.constant 0 : index
    %160 = vector.load %arg16[%c0_96, %c0_97, %c0_98] : memref<2x1x128xf32, #tpu.memory_space<vmem>>, vector<1x1x128xf32>
    %161 = vector.shape_cast %160 : vector<1x1x128xf32> to vector<1x128xf32>
    %162 = vector.broadcast %161 : vector<1x128xf32> to vector<16x128xf32>
    %163 = arith.addf %159, %162 : vector<16x128xf32>
    %cst_99 = arith.constant 5.000000e-01 : f32
    %164 = vector.broadcast %cst_99 : f32 to vector<16x128xf32>
    %165 = arith.mulf %164, %163 : vector<16x128xf32>
    %cst_100 = arith.constant 0.707106769 : f32
    %166 = vector.broadcast %cst_100 : f32 to vector<16x128xf32>
    %167 = arith.mulf %163, %166 : vector<16x128xf32>
    %cst_101 = arith.constant 0.000000e+00 : f32
    %168 = vector.broadcast %cst_101 : f32 to vector<16x128xf32>
    %169 = arith.cmpf oge, %167, %168 : vector<16x128xf32>
    %cst_102 = arith.constant 1.000000e+00 : f32
    %cst_103 = arith.constant -1.000000e+00 : f32
    %170 = vector.broadcast %cst_102 : f32 to vector<16x128xf32>
    %171 = vector.broadcast %cst_103 : f32 to vector<16x128xf32>
    %172 = arith.select %169, %170, %171 : vector<16x128xi1>, vector<16x128xf32>
    %173 = math.absf %167 : vector<16x128xf32>
    %cst_104 = arith.constant 0.327591091 : f32
    %174 = vector.broadcast %cst_104 : f32 to vector<16x128xf32>
    %175 = arith.mulf %174, %173 : vector<16x128xf32>
    %cst_105 = arith.constant 1.000000e+00 : f32
    %176 = vector.broadcast %cst_105 : f32 to vector<16x128xf32>
    %177 = arith.addf %176, %175 : vector<16x128xf32>
    %cst_106 = arith.constant 1.000000e+00 : f32
    %178 = vector.broadcast %cst_106 : f32 to vector<16x128xf32>
    %179 = arith.divf %178, %177 : vector<16x128xf32>
    %cst_107 = arith.constant 1.06140542 : f32
    %180 = vector.broadcast %cst_107 : f32 to vector<16x128xf32>
    %181 = arith.mulf %180, %179 : vector<16x128xf32>
    %cst_108 = arith.constant -1.45315206 : f32
    %182 = vector.broadcast %cst_108 : f32 to vector<16x128xf32>
    %183 = arith.addf %181, %182 : vector<16x128xf32>
    %184 = arith.mulf %183, %179 : vector<16x128xf32>
    %cst_109 = arith.constant 1.42141378 : f32
    %185 = vector.broadcast %cst_109 : f32 to vector<16x128xf32>
    %186 = arith.addf %184, %185 : vector<16x128xf32>
    %187 = arith.mulf %186, %179 : vector<16x128xf32>
    %cst_110 = arith.constant -0.284496725 : f32
    %188 = vector.broadcast %cst_110 : f32 to vector<16x128xf32>
    %189 = arith.addf %187, %188 : vector<16x128xf32>
    %190 = arith.mulf %189, %179 : vector<16x128xf32>
    %cst_111 = arith.constant 0.254829586 : f32
    %191 = vector.broadcast %cst_111 : f32 to vector<16x128xf32>
    %192 = arith.addf %190, %191 : vector<16x128xf32>
    %193 = arith.mulf %192, %179 : vector<16x128xf32>
    %cst_112 = arith.constant 0.000000e+00 : f32
    %194 = vector.broadcast %cst_112 : f32 to vector<16x128xf32>
    %195 = arith.subf %194, %173 : vector<16x128xf32>
    %196 = arith.mulf %195, %173 : vector<16x128xf32>
    %197 = math.exp %196 : vector<16x128xf32>
    %198 = arith.mulf %193, %197 : vector<16x128xf32>
    %cst_113 = arith.constant 1.000000e+00 : f32
    %199 = vector.broadcast %cst_113 : f32 to vector<16x128xf32>
    %200 = arith.subf %199, %198 : vector<16x128xf32>
    %201 = arith.mulf %172, %200 : vector<16x128xf32>
    %cst_114 = arith.constant 1.000000e+00 : f32
    %202 = vector.broadcast %cst_114 : f32 to vector<16x128xf32>
    %203 = arith.addf %202, %201 : vector<16x128xf32>
    %204 = arith.mulf %165, %203 : vector<16x128xf32>
    %205 = arith.truncf %204 : vector<16x128xf32> to vector<16x128xbf16>
    %c0_115 = arith.constant 0 : index
    %c0_116 = arith.constant 0 : index
    %c0_117 = arith.constant 0 : index
    %206 = vector.load %arg17[%c0_115, %c0_116, %c0_117] : memref<2x128x32xbf16, #tpu.memory_space<vmem>>, vector<1x128x32xbf16>
    %207 = vector.shape_cast %206 : vector<1x128x32xbf16> to vector<128x32xbf16>
    %cst_118 = arith.constant dense<0.000000e+00> : vector<16x32xf32>
    %208 = tpu.matmul %205, %207, %cst_118 {dimension_numbers = #tpu.dot_dimension_numbers<[1], [0], [0], [1], [0, 0, 1, 1], [], []>} : vector<16x128xbf16>, vector<128x32xbf16>, vector<16x32xf32> -> vector<16x32xf32>
    %209 = arith.addf %129, %208 : vector<16x32xf32>
    %c0_119 = arith.constant 0 : index
    %c0_120 = arith.constant 0 : index
    %c0_121 = arith.constant 0 : index
    %210 = vector.load %arg18[%c0_119, %c0_120, %c0_121] : memref<2x1x32xf32, #tpu.memory_space<vmem>>, vector<1x1x32xf32>
    %211 = vector.shape_cast %210 : vector<1x1x32xf32> to vector<1x32xf32>
    %212 = vector.broadcast %211 : vector<1x32xf32> to vector<16x32xf32>
    %213 = arith.addf %209, %212 : vector<16x32xf32>
    %c1_122 = arith.constant 1 : index
    %c0_123 = arith.constant 0 : index
    %c0_124 = arith.constant 0 : index
    %214 = vector.load %arg7[%c1_122, %c0_123, %c0_124] : memref<2x1x32xf32, #tpu.memory_space<vmem>>, vector<1x1x32xf32>
    %215 = vector.shape_cast %214 : vector<1x1x32xf32> to vector<1x32xf32>
    %c1_125 = arith.constant 1 : index
    %c0_126 = arith.constant 0 : index
    %c0_127 = arith.constant 0 : index
    %216 = vector.load %arg8[%c1_125, %c0_126, %c0_127] : memref<2x1x32xf32, #tpu.memory_space<vmem>>, vector<1x1x32xf32>
    %217 = vector.shape_cast %216 : vector<1x1x32xf32> to vector<1x32xf32>
    %cst_128 = arith.constant dense<0.000000e+00> : vector<16xf32>
    %218 = vector.multi_reduction <add>, %213, %cst_128 [1] : vector<16x32xf32> to vector<16xf32>
    %219 = vector.shape_cast %218 : vector<16xf32> to vector<16x1xf32>
    %cst_129 = arith.constant 3.200000e+01 : f32
    %220 = vector.broadcast %cst_129 : f32 to vector<16x1xf32>
    %221 = arith.divf %219, %220 : vector<16x1xf32>
    %222 = vector.broadcast %221 : vector<16x1xf32> to vector<16x32xf32>
    %223 = arith.subf %213, %222 : vector<16x32xf32>
    %224 = arith.mulf %223, %223 : vector<16x32xf32>
    %cst_130 = arith.constant dense<0.000000e+00> : vector<16xf32>
    %225 = vector.multi_reduction <add>, %224, %cst_130 [1] : vector<16x32xf32> to vector<16xf32>
    %226 = vector.shape_cast %225 : vector<16xf32> to vector<16x1xf32>
    %cst_131 = arith.constant 3.200000e+01 : f32
    %227 = vector.broadcast %cst_131 : f32 to vector<16x1xf32>
    %228 = arith.divf %226, %227 : vector<16x1xf32>
    %229 = vector.broadcast %221 : vector<16x1xf32> to vector<16x32xf32>
    %230 = arith.subf %213, %229 : vector<16x32xf32>
    %cst_132 = arith.constant 9.99999974E-6 : f32
    %231 = vector.broadcast %cst_132 : f32 to vector<16x1xf32>
    %232 = arith.addf %228, %231 : vector<16x1xf32>
    %233 = math.rsqrt %232 : vector<16x1xf32>
    %234 = vector.broadcast %233 : vector<16x1xf32> to vector<16x32xf32>
    %235 = arith.mulf %230, %234 : vector<16x32xf32>
    %236 = vector.broadcast %215 : vector<1x32xf32> to vector<16x32xf32>
    %237 = arith.mulf %235, %236 : vector<16x32xf32>
    %238 = vector.broadcast %217 : vector<1x32xf32> to vector<16x32xf32>
    %239 = arith.addf %237, %238 : vector<16x32xf32>
    %240 = arith.truncf %239 : vector<16x32xf32> to vector<16x32xbf16>
    %c1_133 = arith.constant 1 : index
    %c0_134 = arith.constant 0 : index
    %c0_135 = arith.constant 0 : index
    %241 = vector.load %arg12[%c1_133, %c0_134, %c0_135] : memref<2x1x32xf32, #tpu.memory_space<vmem>>, vector<1x1x32xf32>
    %242 = vector.shape_cast %241 : vector<1x1x32xf32> to vector<1x32xf32>
    %243 = vector.broadcast %242 : vector<1x32xf32> to vector<16x32xf32>
    %244 = arith.addf %213, %243 : vector<16x32xf32>
    %c6 = arith.constant 6 : index
    %c0_136 = arith.constant 0 : index
    %c0_137 = arith.constant 0 : index
    %245 = vector.load %arg9[%c6, %c0_136, %c0_137] : memref<12x32x16xbf16, #tpu.memory_space<vmem>>, vector<1x32x16xbf16>
    %246 = vector.shape_cast %245 : vector<1x32x16xbf16> to vector<32x16xbf16>
    %cst_138 = arith.constant dense<0.000000e+00> : vector<16x16xf32>
    %247 = tpu.matmul %240, %246, %cst_138 {dimension_numbers = #tpu.dot_dimension_numbers<[1], [0], [0], [1], [0, 0, 1, 1], [], []>} : vector<16x32xbf16>, vector<32x16xbf16>, vector<16x16xf32> -> vector<16x16xf32>
    %c6_139 = arith.constant 6 : index
    %c0_140 = arith.constant 0 : index
    %c0_141 = arith.constant 0 : index
    %248 = vector.load %arg10[%c6_139, %c0_140, %c0_141] : memref<12x1x16xf32, #tpu.memory_space<vmem>>, vector<1x1x16xf32>
    %249 = vector.shape_cast %248 : vector<1x1x16xf32> to vector<1x16xf32>
    %250 = vector.broadcast %249 : vector<1x16xf32> to vector<16x16xf32>
    %251 = arith.addf %247, %250 : vector<16x16xf32>
    %c7 = arith.constant 7 : index
    %c0_142 = arith.constant 0 : index
    %c0_143 = arith.constant 0 : index
    %252 = vector.load %arg9[%c7, %c0_142, %c0_143] : memref<12x32x16xbf16, #tpu.memory_space<vmem>>, vector<1x32x16xbf16>
    %253 = vector.shape_cast %252 : vector<1x32x16xbf16> to vector<32x16xbf16>
    %cst_144 = arith.constant dense<0.000000e+00> : vector<16x16xf32>
    %254 = tpu.matmul %240, %253, %cst_144 {dimension_numbers = #tpu.dot_dimension_numbers<[1], [0], [0], [1], [0, 0, 1, 1], [], []>} : vector<16x32xbf16>, vector<32x16xbf16>, vector<16x16xf32> -> vector<16x16xf32>
    %c7_145 = arith.constant 7 : index
    %c0_146 = arith.constant 0 : index
    %c0_147 = arith.constant 0 : index
    %255 = vector.load %arg10[%c7_145, %c0_146, %c0_147] : memref<12x1x16xf32, #tpu.memory_space<vmem>>, vector<1x1x16xf32>
    %256 = vector.shape_cast %255 : vector<1x1x16xf32> to vector<1x16xf32>
    %257 = vector.broadcast %256 : vector<1x16xf32> to vector<16x16xf32>
    %258 = arith.addf %254, %257 : vector<16x16xf32>
    %c8 = arith.constant 8 : index
    %c0_148 = arith.constant 0 : index
    %c0_149 = arith.constant 0 : index
    %259 = vector.load %arg9[%c8, %c0_148, %c0_149] : memref<12x32x16xbf16, #tpu.memory_space<vmem>>, vector<1x32x16xbf16>
    %260 = vector.shape_cast %259 : vector<1x32x16xbf16> to vector<32x16xbf16>
    %cst_150 = arith.constant dense<0.000000e+00> : vector<16x16xf32>
    %261 = tpu.matmul %240, %260, %cst_150 {dimension_numbers = #tpu.dot_dimension_numbers<[1], [0], [0], [1], [0, 0, 1, 1], [], []>} : vector<16x32xbf16>, vector<32x16xbf16>, vector<16x16xf32> -> vector<16x16xf32>
    %c8_151 = arith.constant 8 : index
    %c0_152 = arith.constant 0 : index
    %c0_153 = arith.constant 0 : index
    %262 = vector.load %arg10[%c8_151, %c0_152, %c0_153] : memref<12x1x16xf32, #tpu.memory_space<vmem>>, vector<1x1x16xf32>
    %263 = vector.shape_cast %262 : vector<1x1x16xf32> to vector<1x16xf32>
    %264 = vector.broadcast %263 : vector<1x16xf32> to vector<16x16xf32>
    %265 = arith.addf %261, %264 : vector<16x16xf32>
    %266 = arith.truncf %251 : vector<16x16xf32> to vector<16x16xbf16>
    %267 = arith.truncf %258 : vector<16x16xf32> to vector<16x16xbf16>
    %cst_154 = arith.constant dense<0.000000e+00> : vector<16x16xf32>
    %268 = tpu.matmul %266, %267, %cst_154 {dimension_numbers = #tpu.dot_dimension_numbers<[1], [1], [0], [0], [0, 0, 1, 0], [], []>} : vector<16x16xbf16>, vector<16x16xbf16>, vector<16x16xf32> -> vector<16x16xf32>
    %269 = arith.addf %268, %20 : vector<16x16xf32>
    %270 = math.exp %269 : vector<16x16xf32>
    %cst_155 = arith.constant dense<0.000000e+00> : vector<16xf32>
    %271 = vector.multi_reduction <add>, %270, %cst_155 [1] : vector<16x16xf32> to vector<16xf32>
    %272 = vector.shape_cast %271 : vector<16xf32> to vector<16x1xf32>
    %273 = tpu.reciprocal %272 {approx = true} : vector<16x1xf32> -> vector<16x1xf32>
    %274 = vector.broadcast %273 : vector<16x1xf32> to vector<16x16xf32>
    %275 = arith.mulf %270, %274 : vector<16x16xf32>
    %276 = arith.truncf %275 : vector<16x16xf32> to vector<16x16xbf16>
    %277 = arith.truncf %265 : vector<16x16xf32> to vector<16x16xbf16>
    %cst_156 = arith.constant dense<0.000000e+00> : vector<16x16xf32>
    %278 = tpu.matmul %276, %277, %cst_156 {dimension_numbers = #tpu.dot_dimension_numbers<[1], [0], [0], [1], [0, 0, 1, 1], [], []>} : vector<16x16xbf16>, vector<16x16xbf16>, vector<16x16xf32> -> vector<16x16xf32>
    %279 = arith.truncf %278 : vector<16x16xf32> to vector<16x16xbf16>
    %c2_157 = arith.constant 2 : index
    %c0_158 = arith.constant 0 : index
    %c0_159 = arith.constant 0 : index
    %280 = vector.load %arg11[%c2_157, %c0_158, %c0_159] : memref<4x16x32xbf16, #tpu.memory_space<vmem>>, vector<1x16x32xbf16>
    %281 = vector.shape_cast %280 : vector<1x16x32xbf16> to vector<16x32xbf16>
    %cst_160 = arith.constant dense<0.000000e+00> : vector<16x32xf32>
    %282 = tpu.matmul %279, %281, %cst_160 {dimension_numbers = #tpu.dot_dimension_numbers<[1], [0], [0], [1], [0, 0, 1, 1], [], []>} : vector<16x16xbf16>, vector<16x32xbf16>, vector<16x32xf32> -> vector<16x32xf32>
    %283 = arith.addf %244, %282 : vector<16x32xf32>
    %c9 = arith.constant 9 : index
    %c0_161 = arith.constant 0 : index
    %c0_162 = arith.constant 0 : index
    %284 = vector.load %arg9[%c9, %c0_161, %c0_162] : memref<12x32x16xbf16, #tpu.memory_space<vmem>>, vector<1x32x16xbf16>
    %285 = vector.shape_cast %284 : vector<1x32x16xbf16> to vector<32x16xbf16>
    %cst_163 = arith.constant dense<0.000000e+00> : vector<16x16xf32>
    %286 = tpu.matmul %240, %285, %cst_163 {dimension_numbers = #tpu.dot_dimension_numbers<[1], [0], [0], [1], [0, 0, 1, 1], [], []>} : vector<16x32xbf16>, vector<32x16xbf16>, vector<16x16xf32> -> vector<16x16xf32>
    %c9_164 = arith.constant 9 : index
    %c0_165 = arith.constant 0 : index
    %c0_166 = arith.constant 0 : index
    %287 = vector.load %arg10[%c9_164, %c0_165, %c0_166] : memref<12x1x16xf32, #tpu.memory_space<vmem>>, vector<1x1x16xf32>
    %288 = vector.shape_cast %287 : vector<1x1x16xf32> to vector<1x16xf32>
    %289 = vector.broadcast %288 : vector<1x16xf32> to vector<16x16xf32>
    %290 = arith.addf %286, %289 : vector<16x16xf32>
    %c10 = arith.constant 10 : index
    %c0_167 = arith.constant 0 : index
    %c0_168 = arith.constant 0 : index
    %291 = vector.load %arg9[%c10, %c0_167, %c0_168] : memref<12x32x16xbf16, #tpu.memory_space<vmem>>, vector<1x32x16xbf16>
    %292 = vector.shape_cast %291 : vector<1x32x16xbf16> to vector<32x16xbf16>
    %cst_169 = arith.constant dense<0.000000e+00> : vector<16x16xf32>
    %293 = tpu.matmul %240, %292, %cst_169 {dimension_numbers = #tpu.dot_dimension_numbers<[1], [0], [0], [1], [0, 0, 1, 1], [], []>} : vector<16x32xbf16>, vector<32x16xbf16>, vector<16x16xf32> -> vector<16x16xf32>
    %c10_170 = arith.constant 10 : index
    %c0_171 = arith.constant 0 : index
    %c0_172 = arith.constant 0 : index
    %294 = vector.load %arg10[%c10_170, %c0_171, %c0_172] : memref<12x1x16xf32, #tpu.memory_space<vmem>>, vector<1x1x16xf32>
    %295 = vector.shape_cast %294 : vector<1x1x16xf32> to vector<1x16xf32>
    %296 = vector.broadcast %295 : vector<1x16xf32> to vector<16x16xf32>
    %297 = arith.addf %293, %296 : vector<16x16xf32>
    %c11 = arith.constant 11 : index
    %c0_173 = arith.constant 0 : index
    %c0_174 = arith.constant 0 : index
    %298 = vector.load %arg9[%c11, %c0_173, %c0_174] : memref<12x32x16xbf16, #tpu.memory_space<vmem>>, vector<1x32x16xbf16>
    %299 = vector.shape_cast %298 : vector<1x32x16xbf16> to vector<32x16xbf16>
    %cst_175 = arith.constant dense<0.000000e+00> : vector<16x16xf32>
    %300 = tpu.matmul %240, %299, %cst_175 {dimension_numbers = #tpu.dot_dimension_numbers<[1], [0], [0], [1], [0, 0, 1, 1], [], []>} : vector<16x32xbf16>, vector<32x16xbf16>, vector<16x16xf32> -> vector<16x16xf32>
    %c11_176 = arith.constant 11 : index
    %c0_177 = arith.constant 0 : index
    %c0_178 = arith.constant 0 : index
    %301 = vector.load %arg10[%c11_176, %c0_177, %c0_178] : memref<12x1x16xf32, #tpu.memory_space<vmem>>, vector<1x1x16xf32>
    %302 = vector.shape_cast %301 : vector<1x1x16xf32> to vector<1x16xf32>
    %303 = vector.broadcast %302 : vector<1x16xf32> to vector<16x16xf32>
    %304 = arith.addf %300, %303 : vector<16x16xf32>
    %305 = arith.truncf %290 : vector<16x16xf32> to vector<16x16xbf16>
    %306 = arith.truncf %297 : vector<16x16xf32> to vector<16x16xbf16>
    %cst_179 = arith.constant dense<0.000000e+00> : vector<16x16xf32>
    %307 = tpu.matmul %305, %306, %cst_179 {dimension_numbers = #tpu.dot_dimension_numbers<[1], [1], [0], [0], [0, 0, 1, 0], [], []>} : vector<16x16xbf16>, vector<16x16xbf16>, vector<16x16xf32> -> vector<16x16xf32>
    %308 = arith.addf %307, %20 : vector<16x16xf32>
    %309 = math.exp %308 : vector<16x16xf32>
    %cst_180 = arith.constant dense<0.000000e+00> : vector<16xf32>
    %310 = vector.multi_reduction <add>, %309, %cst_180 [1] : vector<16x16xf32> to vector<16xf32>
    %311 = vector.shape_cast %310 : vector<16xf32> to vector<16x1xf32>
    %312 = tpu.reciprocal %311 {approx = true} : vector<16x1xf32> -> vector<16x1xf32>
    %313 = vector.broadcast %312 : vector<16x1xf32> to vector<16x16xf32>
    %314 = arith.mulf %309, %313 : vector<16x16xf32>
    %315 = arith.truncf %314 : vector<16x16xf32> to vector<16x16xbf16>
    %316 = arith.truncf %304 : vector<16x16xf32> to vector<16x16xbf16>
    %cst_181 = arith.constant dense<0.000000e+00> : vector<16x16xf32>
    %317 = tpu.matmul %315, %316, %cst_181 {dimension_numbers = #tpu.dot_dimension_numbers<[1], [0], [0], [1], [0, 0, 1, 1], [], []>} : vector<16x16xbf16>, vector<16x16xbf16>, vector<16x16xf32> -> vector<16x16xf32>
    %318 = arith.truncf %317 : vector<16x16xf32> to vector<16x16xbf16>
    %c3_182 = arith.constant 3 : index
    %c0_183 = arith.constant 0 : index
    %c0_184 = arith.constant 0 : index
    %319 = vector.load %arg11[%c3_182, %c0_183, %c0_184] : memref<4x16x32xbf16, #tpu.memory_space<vmem>>, vector<1x16x32xbf16>
    %320 = vector.shape_cast %319 : vector<1x16x32xbf16> to vector<16x32xbf16>
    %cst_185 = arith.constant dense<0.000000e+00> : vector<16x32xf32>
    %321 = tpu.matmul %318, %320, %cst_185 {dimension_numbers = #tpu.dot_dimension_numbers<[1], [0], [0], [1], [0, 0, 1, 1], [], []>} : vector<16x16xbf16>, vector<16x32xbf16>, vector<16x32xf32> -> vector<16x32xf32>
    %322 = arith.addf %283, %321 : vector<16x32xf32>
    %c1_186 = arith.constant 1 : index
    %c0_187 = arith.constant 0 : index
    %c0_188 = arith.constant 0 : index
    %323 = vector.load %arg13[%c1_186, %c0_187, %c0_188] : memref<2x1x32xf32, #tpu.memory_space<vmem>>, vector<1x1x32xf32>
    %324 = vector.shape_cast %323 : vector<1x1x32xf32> to vector<1x32xf32>
    %c1_189 = arith.constant 1 : index
    %c0_190 = arith.constant 0 : index
    %c0_191 = arith.constant 0 : index
    %325 = vector.load %arg14[%c1_189, %c0_190, %c0_191] : memref<2x1x32xf32, #tpu.memory_space<vmem>>, vector<1x1x32xf32>
    %326 = vector.shape_cast %325 : vector<1x1x32xf32> to vector<1x32xf32>
    %cst_192 = arith.constant dense<0.000000e+00> : vector<16xf32>
    %327 = vector.multi_reduction <add>, %322, %cst_192 [1] : vector<16x32xf32> to vector<16xf32>
    %328 = vector.shape_cast %327 : vector<16xf32> to vector<16x1xf32>
    %cst_193 = arith.constant 3.200000e+01 : f32
    %329 = vector.broadcast %cst_193 : f32 to vector<16x1xf32>
    %330 = arith.divf %328, %329 : vector<16x1xf32>
    %331 = vector.broadcast %330 : vector<16x1xf32> to vector<16x32xf32>
    %332 = arith.subf %322, %331 : vector<16x32xf32>
    %333 = arith.mulf %332, %332 : vector<16x32xf32>
    %cst_194 = arith.constant dense<0.000000e+00> : vector<16xf32>
    %334 = vector.multi_reduction <add>, %333, %cst_194 [1] : vector<16x32xf32> to vector<16xf32>
    %335 = vector.shape_cast %334 : vector<16xf32> to vector<16x1xf32>
    %cst_195 = arith.constant 3.200000e+01 : f32
    %336 = vector.broadcast %cst_195 : f32 to vector<16x1xf32>
    %337 = arith.divf %335, %336 : vector<16x1xf32>
    %338 = vector.broadcast %330 : vector<16x1xf32> to vector<16x32xf32>
    %339 = arith.subf %322, %338 : vector<16x32xf32>
    %cst_196 = arith.constant 9.99999974E-6 : f32
    %340 = vector.broadcast %cst_196 : f32 to vector<16x1xf32>
    %341 = arith.addf %337, %340 : vector<16x1xf32>
    %342 = math.rsqrt %341 : vector<16x1xf32>
    %343 = vector.broadcast %342 : vector<16x1xf32> to vector<16x32xf32>
    %344 = arith.mulf %339, %343 : vector<16x32xf32>
    %345 = vector.broadcast %324 : vector<1x32xf32> to vector<16x32xf32>
    %346 = arith.mulf %344, %345 : vector<16x32xf32>
    %347 = vector.broadcast %326 : vector<1x32xf32> to vector<16x32xf32>
    %348 = arith.addf %346, %347 : vector<16x32xf32>
    %349 = arith.truncf %348 : vector<16x32xf32> to vector<16x32xbf16>
    %c1_197 = arith.constant 1 : index
    %c0_198 = arith.constant 0 : index
    %c0_199 = arith.constant 0 : index
    %350 = vector.load %arg15[%c1_197, %c0_198, %c0_199] : memref<2x32x128xbf16, #tpu.memory_space<vmem>>, vector<1x32x128xbf16>
    %351 = vector.shape_cast %350 : vector<1x32x128xbf16> to vector<32x128xbf16>
    %cst_200 = arith.constant dense<0.000000e+00> : vector<16x128xf32>
    %352 = tpu.matmul %349, %351, %cst_200 {dimension_numbers = #tpu.dot_dimension_numbers<[1], [0], [0], [1], [0, 0, 1, 1], [], []>} : vector<16x32xbf16>, vector<32x128xbf16>, vector<16x128xf32> -> vector<16x128xf32>
    %c1_201 = arith.constant 1 : index
    %c0_202 = arith.constant 0 : index
    %c0_203 = arith.constant 0 : index
    %353 = vector.load %arg16[%c1_201, %c0_202, %c0_203] : memref<2x1x128xf32, #tpu.memory_space<vmem>>, vector<1x1x128xf32>
    %354 = vector.shape_cast %353 : vector<1x1x128xf32> to vector<1x128xf32>
    %355 = vector.broadcast %354 : vector<1x128xf32> to vector<16x128xf32>
    %356 = arith.addf %352, %355 : vector<16x128xf32>
    %cst_204 = arith.constant 5.000000e-01 : f32
    %357 = vector.broadcast %cst_204 : f32 to vector<16x128xf32>
    %358 = arith.mulf %357, %356 : vector<16x128xf32>
    %cst_205 = arith.constant 0.707106769 : f32
    %359 = vector.broadcast %cst_205 : f32 to vector<16x128xf32>
    %360 = arith.mulf %356, %359 : vector<16x128xf32>
    %cst_206 = arith.constant 0.000000e+00 : f32
    %361 = vector.broadcast %cst_206 : f32 to vector<16x128xf32>
    %362 = arith.cmpf oge, %360, %361 : vector<16x128xf32>
    %cst_207 = arith.constant 1.000000e+00 : f32
    %cst_208 = arith.constant -1.000000e+00 : f32
    %363 = vector.broadcast %cst_207 : f32 to vector<16x128xf32>
    %364 = vector.broadcast %cst_208 : f32 to vector<16x128xf32>
    %365 = arith.select %362, %363, %364 : vector<16x128xi1>, vector<16x128xf32>
    %366 = math.absf %360 : vector<16x128xf32>
    %cst_209 = arith.constant 0.327591091 : f32
    %367 = vector.broadcast %cst_209 : f32 to vector<16x128xf32>
    %368 = arith.mulf %367, %366 : vector<16x128xf32>
    %cst_210 = arith.constant 1.000000e+00 : f32
    %369 = vector.broadcast %cst_210 : f32 to vector<16x128xf32>
    %370 = arith.addf %369, %368 : vector<16x128xf32>
    %cst_211 = arith.constant 1.000000e+00 : f32
    %371 = vector.broadcast %cst_211 : f32 to vector<16x128xf32>
    %372 = arith.divf %371, %370 : vector<16x128xf32>
    %cst_212 = arith.constant 1.06140542 : f32
    %373 = vector.broadcast %cst_212 : f32 to vector<16x128xf32>
    %374 = arith.mulf %373, %372 : vector<16x128xf32>
    %cst_213 = arith.constant -1.45315206 : f32
    %375 = vector.broadcast %cst_213 : f32 to vector<16x128xf32>
    %376 = arith.addf %374, %375 : vector<16x128xf32>
    %377 = arith.mulf %376, %372 : vector<16x128xf32>
    %cst_214 = arith.constant 1.42141378 : f32
    %378 = vector.broadcast %cst_214 : f32 to vector<16x128xf32>
    %379 = arith.addf %377, %378 : vector<16x128xf32>
    %380 = arith.mulf %379, %372 : vector<16x128xf32>
    %cst_215 = arith.constant -0.284496725 : f32
    %381 = vector.broadcast %cst_215 : f32 to vector<16x128xf32>
    %382 = arith.addf %380, %381 : vector<16x128xf32>
    %383 = arith.mulf %382, %372 : vector<16x128xf32>
    %cst_216 = arith.constant 0.254829586 : f32
    %384 = vector.broadcast %cst_216 : f32 to vector<16x128xf32>
    %385 = arith.addf %383, %384 : vector<16x128xf32>
    %386 = arith.mulf %385, %372 : vector<16x128xf32>
    %cst_217 = arith.constant 0.000000e+00 : f32
    %387 = vector.broadcast %cst_217 : f32 to vector<16x128xf32>
    %388 = arith.subf %387, %366 : vector<16x128xf32>
    %389 = arith.mulf %388, %366 : vector<16x128xf32>
    %390 = math.exp %389 : vector<16x128xf32>
    %391 = arith.mulf %386, %390 : vector<16x128xf32>
    %cst_218 = arith.constant 1.000000e+00 : f32
    %392 = vector.broadcast %cst_218 : f32 to vector<16x128xf32>
    %393 = arith.subf %392, %391 : vector<16x128xf32>
    %394 = arith.mulf %365, %393 : vector<16x128xf32>
    %cst_219 = arith.constant 1.000000e+00 : f32
    %395 = vector.broadcast %cst_219 : f32 to vector<16x128xf32>
    %396 = arith.addf %395, %394 : vector<16x128xf32>
    %397 = arith.mulf %358, %396 : vector<16x128xf32>
    %398 = arith.truncf %397 : vector<16x128xf32> to vector<16x128xbf16>
    %c1_220 = arith.constant 1 : index
    %c0_221 = arith.constant 0 : index
    %c0_222 = arith.constant 0 : index
    %399 = vector.load %arg17[%c1_220, %c0_221, %c0_222] : memref<2x128x32xbf16, #tpu.memory_space<vmem>>, vector<1x128x32xbf16>
    %400 = vector.shape_cast %399 : vector<1x128x32xbf16> to vector<128x32xbf16>
    %cst_223 = arith.constant dense<0.000000e+00> : vector<16x32xf32>
    %401 = tpu.matmul %398, %400, %cst_223 {dimension_numbers = #tpu.dot_dimension_numbers<[1], [0], [0], [1], [0, 0, 1, 1], [], []>} : vector<16x128xbf16>, vector<128x32xbf16>, vector<16x32xf32> -> vector<16x32xf32>
    %402 = arith.addf %322, %401 : vector<16x32xf32>
    %c1_224 = arith.constant 1 : index
    %c0_225 = arith.constant 0 : index
    %c0_226 = arith.constant 0 : index
    %403 = vector.load %arg18[%c1_224, %c0_225, %c0_226] : memref<2x1x32xf32, #tpu.memory_space<vmem>>, vector<1x1x32xf32>
    %404 = vector.shape_cast %403 : vector<1x1x32xf32> to vector<1x32xf32>
    %405 = vector.broadcast %404 : vector<1x32xf32> to vector<16x32xf32>
    %406 = arith.addf %402, %405 : vector<16x32xf32>
    %c0_227 = arith.constant 0 : index
    %c0_228 = arith.constant 0 : index
    %407 = vector.load %arg19[%c0_227, %c0_228] : memref<1x32xf32, #tpu.memory_space<vmem>>, vector<1x32xf32>
    %c0_229 = arith.constant 0 : index
    %c0_230 = arith.constant 0 : index
    %408 = vector.load %arg20[%c0_229, %c0_230] : memref<1x32xf32, #tpu.memory_space<vmem>>, vector<1x32xf32>
    %cst_231 = arith.constant dense<0.000000e+00> : vector<16xf32>
    %409 = vector.multi_reduction <add>, %406, %cst_231 [1] : vector<16x32xf32> to vector<16xf32>
    %410 = vector.shape_cast %409 : vector<16xf32> to vector<16x1xf32>
    %cst_232 = arith.constant 3.200000e+01 : f32
    %411 = vector.broadcast %cst_232 : f32 to vector<16x1xf32>
    %412 = arith.divf %410, %411 : vector<16x1xf32>
    %413 = vector.broadcast %412 : vector<16x1xf32> to vector<16x32xf32>
    %414 = arith.subf %406, %413 : vector<16x32xf32>
    %415 = arith.mulf %414, %414 : vector<16x32xf32>
    %cst_233 = arith.constant dense<0.000000e+00> : vector<16xf32>
    %416 = vector.multi_reduction <add>, %415, %cst_233 [1] : vector<16x32xf32> to vector<16xf32>
    %417 = vector.shape_cast %416 : vector<16xf32> to vector<16x1xf32>
    %cst_234 = arith.constant 3.200000e+01 : f32
    %418 = vector.broadcast %cst_234 : f32 to vector<16x1xf32>
    %419 = arith.divf %417, %418 : vector<16x1xf32>
    %420 = vector.broadcast %412 : vector<16x1xf32> to vector<16x32xf32>
    %421 = arith.subf %406, %420 : vector<16x32xf32>
    %cst_235 = arith.constant 9.99999974E-6 : f32
    %422 = vector.broadcast %cst_235 : f32 to vector<16x1xf32>
    %423 = arith.addf %419, %422 : vector<16x1xf32>
    %424 = math.rsqrt %423 : vector<16x1xf32>
    %425 = vector.broadcast %424 : vector<16x1xf32> to vector<16x32xf32>
    %426 = arith.mulf %421, %425 : vector<16x32xf32>
    %427 = vector.broadcast %407 : vector<1x32xf32> to vector<16x32xf32>
    %428 = arith.mulf %426, %427 : vector<16x32xf32>
    %429 = vector.broadcast %408 : vector<1x32xf32> to vector<16x32xf32>
    %430 = arith.addf %428, %429 : vector<16x32xf32>
    %431 = arith.truncf %430 : vector<16x32xf32> to vector<16x32xbf16>
    %c0_236 = arith.constant 0 : index
    %c0_237 = arith.constant 0 : index
    %432 = vector.load %arg21[%c0_236, %c0_237] : memref<32x32xbf16, #tpu.memory_space<vmem>>, vector<32x32xbf16>
    %cst_238 = arith.constant dense<0.000000e+00> : vector<16x32xf32>
    %433 = tpu.matmul %431, %432, %cst_238 {dimension_numbers = #tpu.dot_dimension_numbers<[1], [0], [0], [1], [0, 0, 1, 1], [], []>} : vector<16x32xbf16>, vector<32x32xbf16>, vector<16x32xf32> -> vector<16x32xf32>
    %c0_239 = arith.constant 0 : index
    %c0_240 = arith.constant 0 : index
    %434 = vector.load %arg22[%c0_239, %c0_240] : memref<16x32xf32, #tpu.memory_space<vmem>>, vector<16x32xf32>
    tpu.vector_store %arg22[%c0_239, %c0_240], %433 {strides = array<i32>} : memref<16x32xf32, #tpu.memory_space<vmem>>, vector<16x32xf32>,
    return
  }
}

</mosaic_0001>

<llo_original>
// kernel: forward.1
$region0: #{forward.1}
  #allocation0 [shape = 'u32[]', space=smem, size = 0x4, offset = 0x4, fixed_abs, tag = 'smem constant byte address 0x4 - core index']
  #allocation1 [shape = 'u32[144,128]{1,0:T(1,128)}', space=vmem, size = 0x12000, scoped, tag = 'internal scratch']
  %s0 = inlined_call_operand.vmem [shape: s32[16,1], index: 0, kind: input, shape index: {}]
  %s1 = inlined_call_operand.vmem [shape: f32[16,4], index: 1, kind: input, shape index: {}]
  %s2 = inlined_call_operand.vmem [shape: f32[16,16], index: 2, kind: input, shape index: {}]
  %s3 = inlined_call_operand.vmem [shape: bf16[32,32], index: 3, kind: input, shape index: {}]
  %s4 = inlined_call_operand.vmem [shape: f32[16,32], index: 4, kind: input, shape index: {}]
  %s5 = inlined_call_operand.vmem [shape: bf16[4,32], index: 5, kind: input, shape index: {}]
  %s6 = inlined_call_operand.vmem [shape: f32[1,32], index: 6, kind: input, shape index: {}]
  %s7 = inlined_call_operand.vmem [shape: f32[2,1,32], index: 7, kind: input, shape index: {}]
  %s8 = inlined_call_operand.vmem [shape: f32[2,1,32], index: 8, kind: input, shape index: {}]
  %s9 = inlined_call_operand.vmem [shape: bf16[12,32,16], index: 9, kind: input, shape index: {}]
  %s10 = inlined_call_operand.vmem [shape: f32[12,1,16], index: 10, kind: input, shape index: {}]
  %s11 = inlined_call_operand.vmem [shape: bf16[4,16,32], index: 11, kind: input, shape index: {}]
  %s12 = inlined_call_operand.vmem [shape: f32[2,1,32], index: 12, kind: input, shape index: {}]
  %s13 = inlined_call_operand.vmem [shape: f32[2,1,32], index: 13, kind: input, shape index: {}]
  %s14 = inlined_call_operand.vmem [shape: f32[2,1,32], index: 14, kind: input, shape index: {}]
  %s15 = inlined_call_operand.vmem [shape: bf16[2,32,128], index: 15, kind: input, shape index: {}]
  %s16 = inlined_call_operand.vmem [shape: f32[2,1,128], index: 16, kind: input, shape index: {}]
  %s17 = inlined_call_operand.vmem [shape: bf16[2,128,32], index: 17, kind: input, shape index: {}]
  %s18 = inlined_call_operand.vmem [shape: f32[2,1,32], index: 18, kind: input, shape index: {}]
  %s19 = inlined_call_operand.vmem [shape: f32[1,32], index: 19, kind: input, shape index: {}]
  %s20 = inlined_call_operand.vmem [shape: f32[1,32], index: 20, kind: input, shape index: {}]
  %s21 = inlined_call_operand.vmem [shape: bf16[32,32], index: 21, kind: input, shape index: {}]
  %s22 = inlined_call_operand.hbm [shape: f32[16,32], index: 22, kind: output, shape index: {}]
  %s23 = sld [smem:[#allocation0]]
  $region98: #{forward.1} parent=0
    _
  %s25 = ssub.s32 1, %s23
  %s26 = scalar_select 0, %s25, %s23
  $region1: #{forward.1} parent=0
    #allocation2 [shape = 'u8[8192]{0}', space=vmem, size = 0x2000, scoped, tag = 'output window, operand 0, single buffered']
    #allocation3 [shape = 's32[1]{0}', space=sflag, size = 0x4, scoped, tag = 'scoped memory for forward.1']
    %27 = vsyncpa [#allocation3], 0
    // Predicated region
    $region2: #{forward.1} parent=1 // pred_check
      _
    $region3: #{forward.1} parent=1 // pred_check_branch
      %29 = sbr.rel (0) target = $region5
    $region4: #{forward.1} parent=1 // pred_region
      _
    $region5: #{forward.1} parent=1 // pred_fallthru
      _
    // Predicated region
    $region6: #{forward.1} parent=1 // pred_check
      _
    $region7: #{forward.1} parent=1 // pred_check_branch
      %31 = sbr.rel (0) target = $region9
    $region8: #{forward.1} parent=1 // pred_region
      _
    $region9: #{forward.1} parent=1 // pred_fallthru
      _
    // Predicated region
    $region10: #{forward.1} parent=1 // pred_check
      _
    $region11: #{forward.1} parent=1 // pred_check_branch
      %33 = sbr.rel (0) target = $region13
    $region12: #{forward.1} parent=1 // pred_region
      _
    $region13: #{forward.1} parent=1 // pred_fallthru
      _
    // Predicated region
    $region14: #{forward.1} parent=1 // pred_check
      _
    $region15: #{forward.1} parent=1 // pred_check_branch
      %35 = sbr.rel (0) target = $region17
    $region16: #{forward.1} parent=1 // pred_region
      _
    $region17: #{forward.1} parent=1 // pred_fallthru
      _
    // Predicated region
    $region18: #{forward.1} parent=1 // pred_check
      _
    $region19: #{forward.1} parent=1 // pred_check_branch
      %37 = sbr.rel (0) target = $region21
    $region20: #{forward.1} parent=1 // pred_region
      _
    $region21: #{forward.1} parent=1 // pred_fallthru
      _
    // Predicated region
    $region22: #{forward.1} parent=1 // pred_check
      _
    $region23: #{forward.1} parent=1 // pred_check_branch
      %39 = sbr.rel (0) target = $region25
    $region24: #{forward.1} parent=1 // pred_region
      _
    $region25: #{forward.1} parent=1 // pred_fallthru
      _
    // Predicated region
    $region26: #{forward.1} parent=1 // pred_check
      _
    $region27: #{forward.1} parent=1 // pred_check_branch
      %41 = sbr.rel (0) target = $region29
    $region28: #{forward.1} parent=1 // pred_region
      _
    $region29: #{forward.1} parent=1 // pred_fallthru
      _
    // Predicated region
    $region30: #{forward.1} parent=1 // pred_check
      _
    $region31: #{forward.1} parent=1 // pred_check_branch
      %43 = sbr.rel (0) target = $region33
    $region32: #{forward.1} parent=1 // pred_region
      _
    $region33: #{forward.1} parent=1 // pred_fallthru
      _
    // Predicated region
    $region34: #{forward.1} parent=1 // pred_check
      _
    $region35: #{forward.1} parent=1 // pred_check_branch
      %45 = sbr.rel (0) target = $region37
    $region36: #{forward.1} parent=1 // pred_region
      _
    $region37: #{forward.1} parent=1 // pred_fallthru
      _
    // Predicated region
    $region38: #{forward.1} parent=1 // pred_check
      _
    $region39: #{forward.1} parent=1 // pred_check_branch
      %47 = sbr.rel (0) target = $region41
    $region40: #{forward.1} parent=1 // pred_region
      _
    $region41: #{forward.1} parent=1 // pred_fallthru
      _
    // Predicated region
    $region42: #{forward.1} parent=1 // pred_check
      _
    $region43: #{forward.1} parent=1 // pred_check_branch
      %49 = sbr.rel (0) target = $region45
    $region44: #{forward.1} parent=1 // pred_region
      _
    $region45: #{forward.1} parent=1 // pred_fallthru
      _
    // Predicated region
    $region46: #{forward.1} parent=1 // pred_check
      _
    $region47: #{forward.1} parent=1 // pred_check_branch
      %51 = sbr.rel (0) target = $region49
    $region48: #{forward.1} parent=1 // pred_region
      _
    $region49: #{forward.1} parent=1 // pred_fallthru
      _
    // Predicated region
    $region50: #{forward.1} parent=1 // pred_check
      _
    $region51: #{forward.1} parent=1 // pred_check_branch
      %53 = sbr.rel (0) target = $region53
    $region52: #{forward.1} parent=1 // pred_region
      _
    $region53: #{forward.1} parent=1 // pred_fallthru
      _
    // Predicated region
    $region54: #{forward.1} parent=1 // pred_check
      _
    $region55: #{forward.1} parent=1 // pred_check_branch
      %55 = sbr.rel (0) target = $region57
    $region56: #{forward.1} parent=1 // pred_region
      _
    $region57: #{forward.1} parent=1 // pred_fallthru
      _
    // Predicated region
    $region58: #{forward.1} parent=1 // pred_check
      _
    $region59: #{forward.1} parent=1 // pred_check_branch
      %57 = sbr.rel (0) target = $region61
    $region60: #{forward.1} parent=1 // pred_region
      _
    $region61: #{forward.1} parent=1 // pred_fallthru
      _
    // Predicated region
    $region62: #{forward.1} parent=1 // pred_check
      _
    $region63: #{forward.1} parent=1 // pred_check_branch
      %59 = sbr.rel (0) target = $region65
    $region64: #{forward.1} parent=1 // pred_region
      _
    $region65: #{forward.1} parent=1 // pred_fallthru
      _
    // Predicated region
    $region66: #{forward.1} parent=1 // pred_check
      _
    $region67: #{forward.1} parent=1 // pred_check_branch
      %61 = sbr.rel (0) target = $region69
    $region68: #{forward.1} parent=1 // pred_region
      _
    $region69: #{forward.1} parent=1 // pred_fallthru
      _
    // Predicated region
    $region70: #{forward.1} parent=1 // pred_check
      _
    $region71: #{forward.1} parent=1 // pred_check_branch
      %63 = sbr.rel (0) target = $region73
    $region72: #{forward.1} parent=1 // pred_region
      _
    $region73: #{forward.1} parent=1 // pred_fallthru
      _
    // Predicated region
    $region74: #{forward.1} parent=1 // pred_check
      _
    $region75: #{forward.1} parent=1 // pred_check_branch
      %65 = sbr.rel (0) target = $region77
    $region76: #{forward.1} parent=1 // pred_region
      _
    $region77: #{forward.1} parent=1 // pred_fallthru
      _
    // Predicated region
    $region78: #{forward.1} parent=1 // pred_check
      _
    $region79: #{forward.1} parent=1 // pred_check_branch
      %67 = sbr.rel (0) target = $region81
    $region80: #{forward.1} parent=1 // pred_region
      _
    $region81: #{forward.1} parent=1 // pred_fallthru
      _
    // Predicated region
    $region82: #{forward.1} parent=1 // pred_check
      _
    $region83: #{forward.1} parent=1 // pred_check_branch
      %69 = sbr.rel (0) target = $region85
    $region84: #{forward.1} parent=1 // pred_region
      _
    $region85: #{forward.1} parent=1 // pred_fallthru
      _
    // Predicated region
    $region86: #{forward.1} parent=1 // pred_check
      _
    $region87: #{forward.1} parent=1 // pred_check_branch
      %71 = sbr.rel (0) target = $region89
    $region88: #{forward.1} parent=1 // pred_region
      _
    $region89: #{forward.1} parent=1 // pred_fallthru
      _
    %v73 = vld [vmem:[%s0] sm:$0xff]
    %v74 = vld [vmem:[%s0 + $0x8] sm:$0xff]
    %v75 = vlaneseq
    %v76 = vand.u32 %v75, 127
    %77 = vset.pattern.permute.xlu0 0
    %78 = vperm.xlu0 %77, %v73
    %v79 = vpop.permute.xlu0 %78
    %80 = vset.pattern.permute.xlu0 0
    %81 = vperm.xlu0 %80, %v74
    %v82 = vpop.permute.xlu0 %81
    %vm83 = vcmp.eq.s32.totalorder %v76, %v79
    %vm84 = vcmp.eq.s32.totalorder %v76, %v82
    %v85 = vsel %vm83, 1.0, 0.0
    %v86 = vsel %vm84, 1.0, 0.0
    %v87 = vpack.c.bf16 %v86, %v85
    %v88 = vld [vmem:[%s3] sm:$0xf]
    %v89 = vld [vmem:[%s3 + $0x4] sm:$0xf]
    %v90 = vld [vmem:[%s3 + $0x8] sm:$0xf]
    %v91 = vld [vmem:[%s3 + $0xc] sm:$0xf]
    %v92 = vld [vmem:[%s4] sm:$0xff]
    %v93 = vld [vmem:[%s4 + $0x8] sm:$0xff]
    %v98 = vunpack.c.l.b16 %v88
    %v99 = vunpack.c.l.b16 %v89
    %v100 = vunpack.c.l.b16 %v90
    %v101 = vunpack.c.l.b16 %v91
    %v102 = vpack.c.b16 %v99, %v98
    %v103 = vpack.c.b16 %v101, %v100
    %vm106 = vcmask 261120
    %v108 = vsel %vm106, %v87, 0
    %110 = vmatprep.subr.bf16.mxu0 0
    %111 = vmatpush1.bf16.msra.mxu0 0
    %112 = vmatprep.subr.bf16.mxu0 0
    %113 = vmatpush1.bf16.msra.mxu0 0
    %114 = vmatprep.subr.bf16.mxu0 0
    %115 = vmatpush1.bf16.msra.mxu0 0
    %116 = vmatprep.subr.bf16.mxu0 0
    %117 = vmatpush1.bf16.msra.mxu0 0
    %118 = vmatprep.subr.bf16.mxu0 0
    %119 = vmatpush1.bf16.msra.mxu0 0
    %120 = vmatprep.subr.bf16.mxu0 0
    %121 = vmatpush1.bf16.msra.mxu0 0
    %122 = vmatprep.subr.bf16.mxu0 0
    %123 = vmatpush1.bf16.msra.mxu0 %v103
    %124 = vmatprep.subr.bf16.mxu0 0
    %125 = vmatpush1.bf16.msra.mxu0 %v102
    %126 = vmatprep.subr.bf16.mxu0 0
    %127 = vmatpush2.bf16.msra.mxu0 0
    %128 = vmatprep.subr.bf16.mxu0 0
    %129 = vmatpush2.bf16.msra.mxu0 0
    %130 = vmatprep.subr.bf16.mxu0 0
    %131 = vmatpush2.bf16.msra.mxu0 0
    %132 = vmatprep.subr.bf16.mxu0 0
    %133 = vmatpush2.bf16.msra.mxu0 0
    %134 = vmatprep.subr.bf16.mxu0 0
    %135 = vmatpush2.bf16.msra.mxu0 0
    %136 = vmatprep.subr.bf16.mxu0 0
    %137 = vmatpush2.bf16.msra.mxu0 0
    %138 = vmatprep.subr.bf16.mxu0 0
    %139 = vmatpush2.bf16.msra.mxu0 0
    %140 = vmatprep.subr.bf16.mxu0 0
    %141 = vmatpush2.bf16.msra.mxu0 0
    %142 = vmatprep.mubr.bf16.mxu0 0
    %143 = vmatmul.mubr.bf16.gmra.mxu0 %v108
    %v144 = vpop.f32.mrf.mxu0
    %v145 = vadd.f32 %v92, %v144
    %v146 = vpop.f32.mrf.mxu0
    %v147 = vpop.f32.mrf.mxu0
    %v148 = vadd.f32 %v93, %v147
    %v149 = vpop.f32.mrf.mxu0
    %150 = vdwg.mxu0
    %v151 = vld [vmem:[%s1] sm:$0xff]
    %v152 = vld [vmem:[%s1 + $0x8] sm:$0xff]
    %v153 = vpack.c.bf16 %v152, %v151
    %v154 = vld [vmem:[%s5] sm:$0x3]
    %vm155 = vcmask 31744
    %v157 = vsel %vm155, %v153, 0
    %vm159 = vcmask 1041408
    %v161 = vsel %vm159, %v154, 0
    %163 = vmatprep.subr.bf16.mxu0 0
    %164 = vmatpush1.bf16.msra.mxu0 0
    %165 = vmatprep.subr.bf16.mxu0 0
    %166 = vmatpush1.bf16.msra.mxu0 0
    %167 = vmatprep.subr.bf16.mxu0 0
    %168 = vmatpush1.bf16.msra.mxu0 0
    %169 = vmatprep.subr.bf16.mxu0 0
    %170 = vmatpush1.bf16.msra.mxu0 0
    %171 = vmatprep.subr.bf16.mxu0 0
    %172 = vmatpush1.bf16.msra.mxu0 0
    %173 = vmatprep.subr.bf16.mxu0 0
    %174 = vmatpush1.bf16.msra.mxu0 0
    %175 = vmatprep.subr.bf16.mxu0 0
    %176 = vmatpush1.bf16.msra.mxu0 0
    %177 = vmatprep.subr.bf16.mxu0 0
    %178 = vmatpush1.bf16.msra.mxu0 %v161
    %179 = vmatprep.subr.bf16.mxu0 0
    %180 = vmatpush2.bf16.msra.mxu0 0
    %181 = vmatprep.subr.bf16.mxu0 0
    %182 = vmatpush2.bf16.msra.mxu0 0
    %183 = vmatprep.subr.bf16.mxu0 0
    %184 = vmatpush2.bf16.msra.mxu0 0
    %185 = vmatprep.subr.bf16.mxu0 0
    %186 = vmatpush2.bf16.msra.mxu0 0
    %187 = vmatprep.subr.bf16.mxu0 0
    %188 = vmatpush2.bf16.msra.mxu0 0
    %189 = vmatprep.subr.bf16.mxu0 0
    %190 = vmatpush2.bf16.msra.mxu0 0
    %191 = vmatprep.subr.bf16.mxu0 0
    %192 = vmatpush2.bf16.msra.mxu0 0
    %193 = vmatprep.subr.bf16.mxu0 0
    %194 = vmatpush2.bf16.msra.mxu0 0
    %195 = vmatprep.mubr.bf16.mxu0 0
    %196 = vmatmul.mubr.bf16.gmra.mxu0 %v157
    %v197 = vpop.f32.mrf.mxu0
    %v198 = vadd.f32 0.0, %v197
    %v199 = vpop.f32.mrf.mxu0
    %v200 = vpop.f32.mrf.mxu0
    %v201 = vadd.f32 0.0, %v200
    %v202 = vpop.f32.mrf.mxu0
    %203 = vdwg.mxu0
    %v204 = vadd.f32 %v145, %v198
    %v205 = vadd.f32 %v148, %v201
    %v206 = vld [vmem:[%s6] sm:$0x1]
    %v208 = vlaneseq
    %v209 = vshrl.u32 %v208, 7
    %v210 = vsub.s32 0, %v209
    %v211 = vrot.slane %v206, %v210
    %v213 = vadd.f32 %v204, %v211
    %v214 = vadd.f32 %v205, %v211
    %v215 = vld [vmem:[%s2] sm:$0xff]
    %v216 = vld [vmem:[%s2 + $0x8] sm:$0xff]
    %v217 = vld [vmem:[%s7] sm:$0x1]
    %v218 = vld [vmem:[%s8] sm:$0x1]
    %v219 = vsel %vm106, %v213, 0.0
    %220 = vadd.xlane.f32.xlu0 %v219
    %v221 = vpop.xlane.xlu0 %220
    %v222 = vsel %vm106, %v214, 0.0
    %223 = vadd.xlane.f32.xlu0 %v222
    %v224 = vpop.xlane.xlu0 %223
    %v225 = vrcp.pop 32.0
    %v226 = vmul.f32 %v221, %v225
    %v227 = vmul.f32 %v224, %v225
    %v228 = vsub.f32 %v213, %v226
    %v229 = vsub.f32 %v214, %v227
    %v230 = vmul.f32 %v228, %v228
    %v231 = vmul.f32 %v229, %v229
    %v232 = vsel %vm106, %v230, 0.0
    %233 = vadd.xlane.f32.xlu0 %v232
    %v234 = vpop.xlane.xlu0 %233
    %v235 = vsel %vm106, %v231, 0.0
    %236 = vadd.xlane.f32.xlu0 %v235
    %v237 = vpop.xlane.xlu0 %236
    %v238 = vmul.f32 %v234, %v225
    %v239 = vmul.f32 %v237, %v225
    %v240 = vadd.f32 %v238, 1e-05
    %v241 = vadd.f32 %v239, 1e-05
    %v242 = vrsqrt.pop %v240
    %v243 = vrsqrt.pop %v241
    %v244 = vmul.f32 %v228, %v242
    %v245 = vmul.f32 %v229, %v243
    %v247 = vlaneseq
    %v248 = vshrl.u32 %v247, 7
    %v249 = vsub.s32 0, %v248
    %v250 = vrot.slane %v217, %v249
    %v252 = vmul.f32 %v244, %v250
    %v253 = vmul.f32 %v245, %v250
    %v255 = vlaneseq
    %v256 = vshrl.u32 %v255, 7
    %v257 = vsub.s32 0, %v256
    %v258 = vrot.slane %v218, %v257
    %v260 = vadd.f32 %v252, %v258
    %v261 = vadd.f32 %v253, %v258
    %v262 = vpack.c.bf16 %v261, %v260
    %v263 = vld [vmem:[%s12] sm:$0x1]
    %v265 = vlaneseq
    %v266 = vshrl.u32 %v265, 7
    %v267 = vsub.s32 0, %v266
    %v268 = vrot.slane %v263, %v267
    %v270 = vadd.f32 %v213, %v268
    %v271 = vadd.f32 %v214, %v268
    %v272 = vld [vmem:[%s9] sm:$0xf]
    %v273 = vld [vmem:[%s9 + $0x4] sm:$0xf]
    %v274 = vld [vmem:[%s9 + $0x8] sm:$0xf]
    %v275 = vld [vmem:[%s9 + $0xc] sm:$0xf]
    %v276 = vld [vmem:[%s10] sm:$0x1]
    %v278 = vlaneseq
    %v279 = vshrl.u32 %v278, 7
    %v280 = vsub.s32 0, %v279
    %v281 = vrot.slane %v276, %v280
    %v287 = vunpack.c.l.b16 %v272
    %v288 = vunpack.c.l.b16 %v273
    %v289 = vunpack.c.l.b16 %v274
    %v290 = vunpack.c.l.b16 %v275
    %v291 = vpack.c.b16 %v288, %v287
    %v292 = vpack.c.b16 %v290, %v289
    %v296 = vsel %vm106, %v262, 0
    %298 = vmatprep.subr.bf16.mxu0 0
    %299 = vmatpush1.bf16.msra.mxu0 0
    %300 = vmatprep.subr.bf16.mxu0 0
    %301 = vmatpush1.bf16.msra.mxu0 0
    %302 = vmatprep.subr.bf16.mxu0 0
    %303 = vmatpush1.bf16.msra.mxu0 0
    %304 = vmatprep.subr.bf16.mxu0 0
    %305 = vmatpush1.bf16.msra.mxu0 0
    %306 = vmatprep.subr.bf16.mxu0 0
    %307 = vmatpush1.bf16.msra.mxu0 0
    %308 = vmatprep.subr.bf16.mxu0 0
    %309 = vmatpush1.bf16.msra.mxu0 0
    %310 = vmatprep.subr.bf16.mxu0 0
    %311 = vmatpush1.bf16.msra.mxu0 %v292
    %312 = vmatprep.subr.bf16.mxu0 0
    %313 = vmatpush1.bf16.msra.mxu0 %v291
    %314 = vmatprep.subr.bf16.mxu0 0
    %315 = vmatpush2.bf16.msra.mxu0 0
    %316 = vmatprep.subr.bf16.mxu0 0
    %317 = vmatpush2.bf16.msra.mxu0 0
    %318 = vmatprep.subr.bf16.mxu0 0
    %319 = vmatpush2.bf16.msra.mxu0 0
    %320 = vmatprep.subr.bf16.mxu0 0
    %321 = vmatpush2.bf16.msra.mxu0 0
    %322 = vmatprep.subr.bf16.mxu0 0
    %323 = vmatpush2.bf16.msra.mxu0 0
    %324 = vmatprep.subr.bf16.mxu0 0
    %325 = vmatpush2.bf16.msra.mxu0 0
    %326 = vmatprep.subr.bf16.mxu0 0
    %327 = vmatpush2.bf16.msra.mxu0 0
    %328 = vmatprep.subr.bf16.mxu0 0
    %329 = vmatpush2.bf16.msra.mxu0 0
    %330 = vmatprep.mubr.bf16.mxu0 0
    %331 = vmatmul.mubr.bf16.gmra.mxu0 %v296
    %v332 = vpop.f32.mrf.mxu0
    %v333 = vadd.f32 %v281, %v332
    %v334 = vpop.f32.mrf.mxu0
    %v335 = vpop.f32.mrf.mxu0
    %v336 = vadd.f32 %v281, %v335
    %v337 = vpop.f32.mrf.mxu0
    %338 = vdwg.mxu0
    %s339 = scalar_lea.vmem %s9, 16
    %v340 = vld [vmem:[%s339] sm:$0xf]
    %v341 = vld [vmem:[%s339 + $0x4] sm:$0xf]
    %v342 = vld [vmem:[%s339 + $0x8] sm:$0xf]
    %v343 = vld [vmem:[%s339 + $0xc] sm:$0xf]
    %s344 = scalar_lea.vmem %s10, 1
    %v345 = vld [vmem:[%s344] sm:$0x1]
    %v347 = vlaneseq
    %v348 = vshrl.u32 %v347, 7
    %v349 = vsub.s32 0, %v348
    %v350 = vrot.slane %v345, %v349
    %v356 = vunpack.c.l.b16 %v340
    %v357 = vunpack.c.l.b16 %v341
    %v358 = vunpack.c.l.b16 %v342
    %v359 = vunpack.c.l.b16 %v343
    %v360 = vpack.c.b16 %v357, %v356
    %v361 = vpack.c.b16 %v359, %v358
    %364 = vmatprep.subr.bf16.mxu0 0
    %365 = vmatpush1.bf16.msra.mxu0 0
    %366 = vmatprep.subr.bf16.mxu0 0
    %367 = vmatpush1.bf16.msra.mxu0 0
    %368 = vmatprep.subr.bf16.mxu0 0
    %369 = vmatpush1.bf16.msra.mxu0 0
    %370 = vmatprep.subr.bf16.mxu0 0
    %371 = vmatpush1.bf16.msra.mxu0 0
    %372 = vmatprep.subr.bf16.mxu0 0
    %373 = vmatpush1.bf16.msra.mxu0 0
    %374 = vmatprep.subr.bf16.mxu0 0
    %375 = vmatpush1.bf16.msra.mxu0 0
    %376 = vmatprep.subr.bf16.mxu0 0
    %377 = vmatpush1.bf16.msra.mxu0 %v361
    %378 = vmatprep.subr.bf16.mxu0 0
    %379 = vmatpush1.bf16.msra.mxu0 %v360
    %380 = vmatprep.subr.bf16.mxu0 0
    %381 = vmatpush2.bf16.msra.mxu0 0
    %382 = vmatprep.subr.bf16.mxu0 0
    %383 = vmatpush2.bf16.msra.mxu0 0
    %384 = vmatprep.subr.bf16.mxu0 0
    %385 = vmatpush2.bf16.msra.mxu0 0
    %386 = vmatprep.subr.bf16.mxu0 0
    %387 = vmatpush2.bf16.msra.mxu0 0
    %388 = vmatprep.subr.bf16.mxu0 0
    %389 = vmatpush2.bf16.msra.mxu0 0
    %390 = vmatprep.subr.bf16.mxu0 0
    %391 = vmatpush2.bf16.msra.mxu0 0
    %392 = vmatprep.subr.bf16.mxu0 0
    %393 = vmatpush2.bf16.msra.mxu0 0
    %394 = vmatprep.subr.bf16.mxu0 0
    %395 = vmatpush2.bf16.msra.mxu0 0
    %396 = vmatprep.mubr.bf16.mxu0 0
    %397 = vmatmul.mubr.bf16.gmra.mxu0 %v296
    %v398 = vpop.f32.mrf.mxu0
    %v399 = vadd.f32 %v350, %v398
    %v400 = vpop.f32.mrf.mxu0
    %v401 = vpop.f32.mrf.mxu0
    %v402 = vadd.f32 %v350, %v401
    %v403 = vpop.f32.mrf.mxu0
    %404 = vdwg.mxu0
    %s405 = scalar_lea.vmem %s9, 32
    %v406 = vld [vmem:[%s405] sm:$0xf]
    %v407 = vld [vmem:[%s405 + $0x4] sm:$0xf]
    %v408 = vld [vmem:[%s405 + $0x8] sm:$0xf]
    %v409 = vld [vmem:[%s405 + $0xc] sm:$0xf]
    %s410 = scalar_lea.vmem %s10, 2
    %v411 = vld [vmem:[%s410] sm:$0x1]
    %v413 = vlaneseq
    %v414 = vshrl.u32 %v413, 7
    %v415 = vsub.s32 0, %v414
    %v416 = vrot.slane %v411, %v415
    %v422 = vunpack.c.l.b16 %v406
    %v423 = vunpack.c.l.b16 %v407
    %v424 = vunpack.c.l.b16 %v408
    %v425 = vunpack.c.l.b16 %v409
    %v426 = vpack.c.b16 %v423, %v422
    %v427 = vpack.c.b16 %v425, %v424
    %430 = vmatprep.subr.bf16.mxu0 0
    %431 = vmatpush1.bf16.msra.mxu0 0
    %432 = vmatprep.subr.bf16.mxu0 0
    %433 = vmatpush1.bf16.msra.mxu0 0
    %434 = vmatprep.subr.bf16.mxu0 0
    %435 = vmatpush1.bf16.msra.mxu0 0
    %436 = vmatprep.subr.bf16.mxu0 0
    %437 = vmatpush1.bf16.msra.mxu0 0
    %438 = vmatprep.subr.bf16.mxu0 0
    %439 = vmatpush1.bf16.msra.mxu0 0
    %440 = vmatprep.subr.bf16.mxu0 0
    %441 = vmatpush1.bf16.msra.mxu0 0
    %442 = vmatprep.subr.bf16.mxu0 0
    %443 = vmatpush1.bf16.msra.mxu0 %v427
    %444 = vmatprep.subr.bf16.mxu0 0
    %445 = vmatpush1.bf16.msra.mxu0 %v426
    %446 = vmatprep.subr.bf16.mxu0 0
    %447 = vmatpush2.bf16.msra.mxu0 0
    %448 = vmatprep.subr.bf16.mxu0 0
    %449 = vmatpush2.bf16.msra.mxu0 0
    %450 = vmatprep.subr.bf16.mxu0 0
    %451 = vmatpush2.bf16.msra.mxu0 0
    %452 = vmatprep.subr.bf16.mxu0 0
    %453 = vmatpush2.bf16.msra.mxu0 0
    %454 = vmatprep.subr.bf16.mxu0 0
    %455 = vmatpush2.bf16.msra.mxu0 0
    %456 = vmatprep.subr.bf16.mxu0 0
    %457 = vmatpush2.bf16.msra.mxu0 0
    %458 = vmatprep.subr.bf16.mxu0 0
    %459 = vmatpush2.bf16.msra.mxu0 0
    %460 = vmatprep.subr.bf16.mxu0 0
    %461 = vmatpush2.bf16.msra.mxu0 0
    %462 = vmatprep.mubr.bf16.mxu0 0
    %463 = vmatmul.mubr.bf16.gmra.mxu0 %v296
    %v464 = vpop.f32.mrf.mxu0
    %v465 = vadd.f32 %v416, %v464
    %v466 = vpop.f32.mrf.mxu0
    %v467 = vpop.f32.mrf.mxu0
    %v468 = vadd.f32 %v416, %v467
    %v469 = vpop.f32.mrf.mxu0
    %470 = vdwg.mxu0
    %v471 = vpack.c.bf16 %v336, %v333
    %v472 = vpack.c.bf16 %v402, %v399
    %vm473 = vcmask 130048
    %v475 = vsel %vm473, %v471, 0
    %v478 = vsel %vm473, %v472, 0
    %480 = vmatprep.subr.bf16.mxu0 0
    %481 = vmatpush1.bf16.xpose.msra.mxu0 0
    %482 = vmatprep.subr.bf16.mxu0 0
    %483 = vmatpush1.bf16.xpose.msra.mxu0 0
    %484 = vmatprep.subr.bf16.mxu0 0
    %485 = vmatpush1.bf16.xpose.msra.mxu0 0
    %486 = vmatprep.subr.bf16.mxu0 0
    %487 = vmatpush1.bf16.xpose.msra.mxu0 0
    %488 = vmatprep.subr.bf16.mxu0 0
    %489 = vmatpush1.bf16.xpose.msra.mxu0 0
    %490 = vmatprep.subr.bf16.mxu0 0
    %491 = vmatpush1.bf16.xpose.msra.mxu0 0
    %492 = vmatprep.subr.bf16.mxu0 0
    %493 = vmatpush1.bf16.xpose.msra.mxu0 0
    %494 = vmatprep.subr.bf16.mxu0 0
    %495 = vmatpush1.bf16.xpose.msra.mxu0 %v478
    %496 = vmatprep.subr.bf16.mxu0 0
    %497 = vmatpush2.bf16.xpose.msra.mxu0 0
    %498 = vmatprep.subr.bf16.mxu0 0
    %499 = vmatpush2.bf16.xpose.msra.mxu0 0
    %500 = vmatprep.subr.bf16.mxu0 0
    %501 = vmatpush2.bf16.xpose.msra.mxu0 0
    %502 = vmatprep.subr.bf16.mxu0 0
    %503 = vmatpush2.bf16.xpose.msra.mxu0 0
    %504 = vmatprep.subr.bf16.mxu0 0
    %505 = vmatpush2.bf16.xpose.msra.mxu0 0
    %506 = vmatprep.subr.bf16.mxu0 0
    %507 = vmatpush2.bf16.xpose.msra.mxu0 0
    %508 = vmatprep.subr.bf16.mxu0 0
    %509 = vmatpush2.bf16.xpose.msra.mxu0 0
    %510 = vmatprep.subr.bf16.mxu0 0
    %511 = vmatpush2.bf16.xpose.msra.mxu0 0
    %512 = vmatprep.mubr.bf16.mxu0 0
    %513 = vmatmul.mubr.bf16.gmra.mxu0 %v475
    %v514 = vpop.f32.mrf.mxu0
    %v515 = vadd.f32 %v215, %v514
    %v516 = vpop.f32.mrf.mxu0
    %v517 = vpop.f32.mrf.mxu0
    %v518 = vadd.f32 %v216, %v517
    %v519 = vpop.f32.mrf.mxu0
    %520 = vdwg.mxu0
    %v521 = vmul.f32 %v515, 1.442695
    %v522 = vpow.pop %v521
    %v523 = vmul.f32 %v518, 1.442695
    %v524 = vpow.pop %v523
    %v525 = vsel %vm473, %v522, 0.0
    %526 = vadd.xlane.f32.xlu0 %v525
    %v527 = vpop.xlane.xlu0 %526
    %v528 = vsel %vm473, %v524, 0.0
    %529 = vadd.xlane.f32.xlu0 %v528
    %v530 = vpop.xlane.xlu0 %529
    %v531 = vrcp.pop %v527
    %v532 = vrcp.pop %v530
    %v533 = vmul.f32 %v522, %v531
    %v534 = vmul.f32 %v524, %v532
    %v535 = vpack.c.bf16 %v534, %v533
    %v536 = vpack.c.bf16 %v468, %v465
    %v538 = vsel %vm473, %v535, 0
    %540 = vmatprep.subr.bf16.mxu0 0
    %541 = vmatpush1.bf16.msra.mxu0 0
    %542 = vmatprep.subr.bf16.mxu0 0
    %543 = vmatpush1.bf16.msra.mxu0 0
    %544 = vmatprep.subr.bf16.mxu0 0
    %545 = vmatpush1.bf16.msra.mxu0 0
    %546 = vmatprep.subr.bf16.mxu0 0
    %547 = vmatpush1.bf16.msra.mxu0 0
    %548 = vmatprep.subr.bf16.mxu0 0
    %549 = vmatpush1.bf16.msra.mxu0 0
    %550 = vmatprep.subr.bf16.mxu0 0
    %551 = vmatpush1.bf16.msra.mxu0 0
    %552 = vmatprep.subr.bf16.mxu0 0
    %553 = vmatpush1.bf16.msra.mxu0 0
    %554 = vmatprep.subr.bf16.mxu0 0
    %555 = vmatpush1.bf16.msra.mxu0 %v536
    %556 = vmatprep.subr.bf16.mxu0 0
    %557 = vmatpush2.bf16.msra.mxu0 0
    %558 = vmatprep.subr.bf16.mxu0 0
    %559 = vmatpush2.bf16.msra.mxu0 0
    %560 = vmatprep.subr.bf16.mxu0 0
    %561 = vmatpush2.bf16.msra.mxu0 0
    %562 = vmatprep.subr.bf16.mxu0 0
    %563 = vmatpush2.bf16.msra.mxu0 0
    %564 = vmatprep.subr.bf16.mxu0 0
    %565 = vmatpush2.bf16.msra.mxu0 0
    %566 = vmatprep.subr.bf16.mxu0 0
    %567 = vmatpush2.bf16.msra.mxu0 0
    %568 = vmatprep.subr.bf16.mxu0 0
    %569 = vmatpush2.bf16.msra.mxu0 0
    %570 = vmatprep.subr.bf16.mxu0 0
    %571 = vmatpush2.bf16.msra.mxu0 0
    %572 = vmatprep.mubr.bf16.mxu0 0
    %573 = vmatmul.mubr.bf16.gmra.mxu0 %v538
    %v574 = vpop.f32.mrf.mxu0
    %v575 = vadd.f32 0.0, %v574
    %v576 = vpop.f32.mrf.mxu0
    %v577 = vpop.f32.mrf.mxu0
    %v578 = vadd.f32 0.0, %v577
    %v579 = vpop.f32.mrf.mxu0
    %580 = vdwg.mxu0
    %v581 = vpack.c.bf16 %v578, %v575
    %v582 = vld [vmem:[%s11] sm:$0xf]
    %v583 = vld [vmem:[%s11 + $0x4] sm:$0xf]
    %v586 = vunpack.c.l.b16 %v582
    %v587 = vunpack.c.l.b16 %v583
    %v588 = vpack.c.b16 %v587, %v586
    %v591 = vsel %vm473, %v581, 0
    %593 = vmatprep.subr.bf16.mxu0 0
    %594 = vmatpush1.bf16.msra.mxu0 0
    %595 = vmatprep.subr.bf16.mxu0 0
    %596 = vmatpush1.bf16.msra.mxu0 0
    %597 = vmatprep.subr.bf16.mxu0 0
    %598 = vmatpush1.bf16.msra.mxu0 0
    %599 = vmatprep.subr.bf16.mxu0 0
    %600 = vmatpush1.bf16.msra.mxu0 0
    %601 = vmatprep.subr.bf16.mxu0 0
    %602 = vmatpush1.bf16.msra.mxu0 0
    %603 = vmatprep.subr.bf16.mxu0 0
    %604 = vmatpush1.bf16.msra.mxu0 0
    %605 = vmatprep.subr.bf16.mxu0 0
    %606 = vmatpush1.bf16.msra.mxu0 0
    %607 = vmatprep.subr.bf16.mxu0 0
    %608 = vmatpush1.bf16.msra.mxu0 %v588
    %609 = vmatprep.subr.bf16.mxu0 0
    %610 = vmatpush2.bf16.msra.mxu0 0
    %611 = vmatprep.subr.bf16.mxu0 0
    %612 = vmatpush2.bf16.msra.mxu0 0
    %613 = vmatprep.subr.bf16.mxu0 0
    %614 = vmatpush2.bf16.msra.mxu0 0
    %615 = vmatprep.subr.bf16.mxu0 0
    %616 = vmatpush2.bf16.msra.mxu0 0
    %617 = vmatprep.subr.bf16.mxu0 0
    %618 = vmatpush2.bf16.msra.mxu0 0
    %619 = vmatprep.subr.bf16.mxu0 0
    %620 = vmatpush2.bf16.msra.mxu0 0
    %621 = vmatprep.subr.bf16.mxu0 0
    %622 = vmatpush2.bf16.msra.mxu0 0
    %623 = vmatprep.subr.bf16.mxu0 0
    %624 = vmatpush2.bf16.msra.mxu0 0
    %625 = vmatprep.mubr.bf16.mxu0 0
    %626 = vmatmul.mubr.bf16.gmra.mxu0 %v591
    %v627 = vpop.f32.mrf.mxu0
    %v628 = vadd.f32 0.0, %v627
    %v629 = vpop.f32.mrf.mxu0
    %v630 = vpop.f32.mrf.mxu0
    %v631 = vadd.f32 0.0, %v630
    %v632 = vpop.f32.mrf.mxu0
    %633 = vdwg.mxu0
    %v634 = vadd.f32 %v270, %v628
    %v635 = vadd.f32 %v271, %v631
    %s636 = scalar_lea.vmem %s9, 48
    %v637 = vld [vmem:[%s636] sm:$0xf]
    %v638 = vld [vmem:[%s636 + $0x4] sm:$0xf]
    %v639 = vld [vmem:[%s636 + $0x8] sm:$0xf]
    %v640 = vld [vmem:[%s636 + $0xc] sm:$0xf]
    %s641 = scalar_lea.vmem %s10, 3
    %v642 = vld [vmem:[%s641] sm:$0x1]
    %v644 = vlaneseq
    %v645 = vshrl.u32 %v644, 7
    %v646 = vsub.s32 0, %v645
    %v647 = vrot.slane %v642, %v646
    %v653 = vunpack.c.l.b16 %v637
    %v654 = vunpack.c.l.b16 %v638
    %v655 = vunpack.c.l.b16 %v639
    %v656 = vunpack.c.l.b16 %v640
    %v657 = vpack.c.b16 %v654, %v653
    %v658 = vpack.c.b16 %v656, %v655
    %661 = vmatprep.subr.bf16.mxu0 0
    %662 = vmatpush1.bf16.msra.mxu0 0
    %663 = vmatprep.subr.bf16.mxu0 0
    %664 = vmatpush1.bf16.msra.mxu0 0
    %665 = vmatprep.subr.bf16.mxu0 0
    %666 = vmatpush1.bf16.msra.mxu0 0
    %667 = vmatprep.subr.bf16.mxu0 0
    %668 = vmatpush1.bf16.msra.mxu0 0
    %669 = vmatprep.subr.bf16.mxu0 0
    %670 = vmatpush1.bf16.msra.mxu0 0
    %671 = vmatprep.subr.bf16.mxu0 0
    %672 = vmatpush1.bf16.msra.mxu0 0
    %673 = vmatprep.subr.bf16.mxu0 0
    %674 = vmatpush1.bf16.msra.mxu0 %v658
    %675 = vmatprep.subr.bf16.mxu0 0
    %676 = vmatpush1.bf16.msra.mxu0 %v657
    %677 = vmatprep.subr.bf16.mxu0 0
    %678 = vmatpush2.bf16.msra.mxu0 0
    %679 = vmatprep.subr.bf16.mxu0 0
    %680 = vmatpush2.bf16.msra.mxu0 0
    %681 = vmatprep.subr.bf16.mxu0 0
    %682 = vmatpush2.bf16.msra.mxu0 0
    %683 = vmatprep.subr.bf16.mxu0 0
    %684 = vmatpush2.bf16.msra.mxu0 0
    %685 = vmatprep.subr.bf16.mxu0 0
    %686 = vmatpush2.bf16.msra.mxu0 0
    %687 = vmatprep.subr.bf16.mxu0 0
    %688 = vmatpush2.bf16.msra.mxu0 0
    %689 = vmatprep.subr.bf16.mxu0 0
    %690 = vmatpush2.bf16.msra.mxu0 0
    %691 = vmatprep.subr.bf16.mxu0 0
    %692 = vmatpush2.bf16.msra.mxu0 0
    %693 = vmatprep.mubr.bf16.mxu0 0
    %694 = vmatmul.mubr.bf16.gmra.mxu0 %v296
    %v695 = vpop.f32.mrf.mxu0
    %v696 = vadd.f32 %v647, %v695
    %v697 = vpop.f32.mrf.mxu0
    %v698 = vpop.f32.mrf.mxu0
    %v699 = vadd.f32 %v647, %v698
    %v700 = vpop.f32.mrf.mxu0
    %701 = vdwg.mxu0
    %s702 = scalar_lea.vmem %s9, 64
    %v703 = vld [vmem:[%s702] sm:$0xf]
    %v704 = vld [vmem:[%s702 + $0x4] sm:$0xf]
    %v705 = vld [vmem:[%s702 + $0x8] sm:$0xf]
    %v706 = vld [vmem:[%s702 + $0xc] sm:$0xf]
    %s707 = scalar_lea.vmem %s10, 4
    %v708 = vld [vmem:[%s707] sm:$0x1]
    %v710 = vlaneseq
    %v711 = vshrl.u32 %v710, 7
    %v712 = vsub.s32 0, %v711
    %v713 = vrot.slane %v708, %v712
    %v719 = vunpack.c.l.b16 %v703
    %v720 = vunpack.c.l.b16 %v704
    %v721 = vunpack.c.l.b16 %v705
    %v722 = vunpack.c.l.b16 %v706
    %v723 = vpack.c.b16 %v720, %v719
    %v724 = vpack.c.b16 %v722, %v721
    %727 = vmatprep.subr.bf16.mxu0 0
    %728 = vmatpush1.bf16.msra.mxu0 0
    %729 = vmatprep.subr.bf16.mxu0 0
    %730 = vmatpush1.bf16.msra.mxu0 0
    %731 = vmatprep.subr.bf16.mxu0 0
    %732 = vmatpush1.bf16.msra.mxu0 0
    %733 = vmatprep.subr.bf16.mxu0 0
    %734 = vmatpush1.bf16.msra.mxu0 0
    %735 = vmatprep.subr.bf16.mxu0 0
    %736 = vmatpush1.bf16.msra.mxu0 0
    %737 = vmatprep.subr.bf16.mxu0 0
    %738 = vmatpush1.bf16.msra.mxu0 0
    %739 = vmatprep.subr.bf16.mxu0 0
    %740 = vmatpush1.bf16.msra.mxu0 %v724
    %741 = vmatprep.subr.bf16.mxu0 0
    %742 = vmatpush1.bf16.msra.mxu0 %v723
    %743 = vmatprep.subr.bf16.mxu0 0
    %744 = vmatpush2.bf16.msra.mxu0 0
    %745 = vmatprep.subr.bf16.mxu0 0
    %746 = vmatpush2.bf16.msra.mxu0 0
    %747 = vmatprep.subr.bf16.mxu0 0
    %748 = vmatpush2.bf16.msra.mxu0 0
    %749 = vmatprep.subr.bf16.mxu0 0
    %750 = vmatpush2.bf16.msra.mxu0 0
    %751 = vmatprep.subr.bf16.mxu0 0
    %752 = vmatpush2.bf16.msra.mxu0 0
    %753 = vmatprep.subr.bf16.mxu0 0
    %754 = vmatpush2.bf16.msra.mxu0 0
    %755 = vmatprep.subr.bf16.mxu0 0
    %756 = vmatpush2.bf16.msra.mxu0 0
    %757 = vmatprep.subr.bf16.mxu0 0
    %758 = vmatpush2.bf16.msra.mxu0 0
    %759 = vmatprep.mubr.bf16.mxu0 0
    %760 = vmatmul.mubr.bf16.gmra.mxu0 %v296
    %v761 = vpop.f32.mrf.mxu0
    %v762 = vadd.f32 %v713, %v761
    %v763 = vpop.f32.mrf.mxu0
    %v764 = vpop.f32.mrf.mxu0
    %v765 = vadd.f32 %v713, %v764
    %v766 = vpop.f32.mrf.mxu0
    %767 = vdwg.mxu0
    %s768 = scalar_lea.vmem %s9, 80
    %v769 = vld [vmem:[%s768] sm:$0xf]
    %v770 = vld [vmem:[%s768 + $0x4] sm:$0xf]
    %v771 = vld [vmem:[%s768 + $0x8] sm:$0xf]
    %v772 = vld [vmem:[%s768 + $0xc] sm:$0xf]
    %s773 = scalar_lea.vmem %s10, 5
    %v774 = vld [vmem:[%s773] sm:$0x1]
    %v776 = vlaneseq
    %v777 = vshrl.u32 %v776, 7
    %v778 = vsub.s32 0, %v777
    %v779 = vrot.slane %v774, %v778
    %v785 = vunpack.c.l.b16 %v769
    %v786 = vunpack.c.l.b16 %v770
    %v787 = vunpack.c.l.b16 %v771
    %v788 = vunpack.c.l.b16 %v772
    %v789 = vpack.c.b16 %v786, %v785
    %v790 = vpack.c.b16 %v788, %v787
    %793 = vmatprep.subr.bf16.mxu0 0
    %794 = vmatpush1.bf16.msra.mxu0 0
    %795 = vmatprep.subr.bf16.mxu0 0
    %796 = vmatpush1.bf16.msra.mxu0 0
    %797 = vmatprep.subr.bf16.mxu0 0
    %798 = vmatpush1.bf16.msra.mxu0 0
    %799 = vmatprep.subr.bf16.mxu0 0
    %800 = vmatpush1.bf16.msra.mxu0 0
    %801 = vmatprep.subr.bf16.mxu0 0
    %802 = vmatpush1.bf16.msra.mxu0 0
    %803 = vmatprep.subr.bf16.mxu0 0
    %804 = vmatpush1.bf16.msra.mxu0 0
    %805 = vmatprep.subr.bf16.mxu0 0
    %806 = vmatpush1.bf16.msra.mxu0 %v790
    %807 = vmatprep.subr.bf16.mxu0 0
    %808 = vmatpush1.bf16.msra.mxu0 %v789
    %809 = vmatprep.subr.bf16.mxu0 0
    %810 = vmatpush2.bf16.msra.mxu0 0
    %811 = vmatprep.subr.bf16.mxu0 0
    %812 = vmatpush2.bf16.msra.mxu0 0
    %813 = vmatprep.subr.bf16.mxu0 0
    %814 = vmatpush2.bf16.msra.mxu0 0
    %815 = vmatprep.subr.bf16.mxu0 0
    %816 = vmatpush2.bf16.msra.mxu0 0
    %817 = vmatprep.subr.bf16.mxu0 0
    %818 = vmatpush2.bf16.msra.mxu0 0
    %819 = vmatprep.subr.bf16.mxu0 0
    %820 = vmatpush2.bf16.msra.mxu0 0
    %821 = vmatprep.subr.bf16.mxu0 0
    %822 = vmatpush2.bf16.msra.mxu0 0
    %823 = vmatprep.subr.bf16.mxu0 0
    %824 = vmatpush2.bf16.msra.mxu0 0
    %825 = vmatprep.mubr.bf16.mxu0 0
    %826 = vmatmul.mubr.bf16.gmra.mxu0 %v296
    %v827 = vpop.f32.mrf.mxu0
    %v828 = vadd.f32 %v779, %v827
    %v829 = vpop.f32.mrf.mxu0
    %v830 = vpop.f32.mrf.mxu0
    %v831 = vadd.f32 %v779, %v830
    %v832 = vpop.f32.mrf.mxu0
    %833 = vdwg.mxu0
    %v834 = vpack.c.bf16 %v699, %v696
    %v835 = vpack.c.bf16 %v765, %v762
    %v837 = vsel %vm473, %v834, 0
    %v840 = vsel %vm473, %v835, 0
    %842 = vmatprep.subr.bf16.mxu0 0
    %843 = vmatpush1.bf16.xpose.msra.mxu0 0
    %844 = vmatprep.subr.bf16.mxu0 0
    %845 = vmatpush1.bf16.xpose.msra.mxu0 0
    %846 = vmatprep.subr.bf16.mxu0 0
    %847 = vmatpush1.bf16.xpose.msra.mxu0 0
    %848 = vmatprep.subr.bf16.mxu0 0
    %849 = vmatpush1.bf16.xpose.msra.mxu0 0
    %850 = vmatprep.subr.bf16.mxu0 0
    %851 = vmatpush1.bf16.xpose.msra.mxu0 0
    %852 = vmatprep.subr.bf16.mxu0 0
    %853 = vmatpush1.bf16.xpose.msra.mxu0 0
    %854 = vmatprep.subr.bf16.mxu0 0
    %855 = vmatpush1.bf16.xpose.msra.mxu0 0
    %856 = vmatprep.subr.bf16.mxu0 0
    %857 = vmatpush1.bf16.xpose.msra.mxu0 %v840
    %858 = vmatprep.subr.bf16.mxu0 0
    %859 = vmatpush2.bf16.xpose.msra.mxu0 0
    %860 = vmatprep.subr.bf16.mxu0 0
    %861 = vmatpush2.bf16.xpose.msra.mxu0 0
    %862 = vmatprep.subr.bf16.mxu0 0
    %863 = vmatpush2.bf16.xpose.msra.mxu0 0
    %864 = vmatprep.subr.bf16.mxu0 0
    %865 = vmatpush2.bf16.xpose.msra.mxu0 0
    %866 = vmatprep.subr.bf16.mxu0 0
    %867 = vmatpush2.bf16.xpose.msra.mxu0 0
    %868 = vmatprep.subr.bf16.mxu0 0
    %869 = vmatpush2.bf16.xpose.msra.mxu0 0
    %870 = vmatprep.subr.bf16.mxu0 0
    %871 = vmatpush2.bf16.xpose.msra.mxu0 0
    %872 = vmatprep.subr.bf16.mxu0 0
    %873 = vmatpush2.bf16.xpose.msra.mxu0 0
    %874 = vmatprep.mubr.bf16.mxu0 0
    %875 = vmatmul.mubr.bf16.gmra.mxu0 %v837
    %v876 = vpop.f32.mrf.mxu0
    %v877 = vadd.f32 %v215, %v876
    %v878 = vpop.f32.mrf.mxu0
    %v879 = vpop.f32.mrf.mxu0
    %v880 = vadd.f32 %v216, %v879
    %v881 = vpop.f32.mrf.mxu0
    %882 = vdwg.mxu0
    %v883 = vmul.f32 %v877, 1.442695
    %v884 = vpow.pop %v883
    %v885 = vmul.f32 %v880, 1.442695
    %v886 = vpow.pop %v885
    %v887 = vsel %vm473, %v884, 0.0
    %888 = vadd.xlane.f32.xlu0 %v887
    %v889 = vpop.xlane.xlu0 %888
    %v890 = vsel %vm473, %v886, 0.0
    %891 = vadd.xlane.f32.xlu0 %v890
    %v892 = vpop.xlane.xlu0 %891
    %v893 = vrcp.pop %v889
    %v894 = vrcp.pop %v892
    %v895 = vmul.f32 %v884, %v893
    %v896 = vmul.f32 %v886, %v894
    %v897 = vpack.c.bf16 %v896, %v895
    %v898 = vpack.c.bf16 %v831, %v828
    %v900 = vsel %vm473, %v897, 0
    %902 = vmatprep.subr.bf16.mxu0 0
    %903 = vmatpush1.bf16.msra.mxu0 0
    %904 = vmatprep.subr.bf16.mxu0 0
    %905 = vmatpush1.bf16.msra.mxu0 0
    %906 = vmatprep.subr.bf16.mxu0 0
    %907 = vmatpush1.bf16.msra.mxu0 0
    %908 = vmatprep.subr.bf16.mxu0 0
    %909 = vmatpush1.bf16.msra.mxu0 0
    %910 = vmatprep.subr.bf16.mxu0 0
    %911 = vmatpush1.bf16.msra.mxu0 0
    %912 = vmatprep.subr.bf16.mxu0 0
    %913 = vmatpush1.bf16.msra.mxu0 0
    %914 = vmatprep.subr.bf16.mxu0 0
    %915 = vmatpush1.bf16.msra.mxu0 0
    %916 = vmatprep.subr.bf16.mxu0 0
    %917 = vmatpush1.bf16.msra.mxu0 %v898
    %918 = vmatprep.subr.bf16.mxu0 0
    %919 = vmatpush2.bf16.msra.mxu0 0
    %920 = vmatprep.subr.bf16.mxu0 0
    %921 = vmatpush2.bf16.msra.mxu0 0
    %922 = vmatprep.subr.bf16.mxu0 0
    %923 = vmatpush2.bf16.msra.mxu0 0
    %924 = vmatprep.subr.bf16.mxu0 0
    %925 = vmatpush2.bf16.msra.mxu0 0
    %926 = vmatprep.subr.bf16.mxu0 0
    %927 = vmatpush2.bf16.msra.mxu0 0
    %928 = vmatprep.subr.bf16.mxu0 0
    %929 = vmatpush2.bf16.msra.mxu0 0
    %930 = vmatprep.subr.bf16.mxu0 0
    %931 = vmatpush2.bf16.msra.mxu0 0
    %932 = vmatprep.subr.bf16.mxu0 0
    %933 = vmatpush2.bf16.msra.mxu0 0
    %934 = vmatprep.mubr.bf16.mxu0 0
    %935 = vmatmul.mubr.bf16.gmra.mxu0 %v900
    %v936 = vpop.f32.mrf.mxu0
    %v937 = vadd.f32 0.0, %v936
    %v938 = vpop.f32.mrf.mxu0
    %v939 = vpop.f32.mrf.mxu0
    %v940 = vadd.f32 0.0, %v939
    %v941 = vpop.f32.mrf.mxu0
    %942 = vdwg.mxu0
    %v943 = vpack.c.bf16 %v940, %v937
    %s944 = scalar_lea.vmem %s11, 8
    %v945 = vld [vmem:[%s944] sm:$0xf]
    %v946 = vld [vmem:[%s944 + $0x4] sm:$0xf]
    %v949 = vunpack.c.l.b16 %v945
    %v950 = vunpack.c.l.b16 %v946
    %v951 = vpack.c.b16 %v950, %v949
    %v954 = vsel %vm473, %v943, 0
    %956 = vmatprep.subr.bf16.mxu0 0
    %957 = vmatpush1.bf16.msra.mxu0 0
    %958 = vmatprep.subr.bf16.mxu0 0
    %959 = vmatpush1.bf16.msra.mxu0 0
    %960 = vmatprep.subr.bf16.mxu0 0
    %961 = vmatpush1.bf16.msra.mxu0 0
    %962 = vmatprep.subr.bf16.mxu0 0
    %963 = vmatpush1.bf16.msra.mxu0 0
    %964 = vmatprep.subr.bf16.mxu0 0
    %965 = vmatpush1.bf16.msra.mxu0 0
    %966 = vmatprep.subr.bf16.mxu0 0
    %967 = vmatpush1.bf16.msra.mxu0 0
    %968 = vmatprep.subr.bf16.mxu0 0
    %969 = vmatpush1.bf16.msra.mxu0 0
    %970 = vmatprep.subr.bf16.mxu0 0
    %971 = vmatpush1.bf16.msra.mxu0 %v951
    %972 = vmatprep.subr.bf16.mxu0 0
    %973 = vmatpush2.bf16.msra.mxu0 0
    %974 = vmatprep.subr.bf16.mxu0 0
    %975 = vmatpush2.bf16.msra.mxu0 0
    %976 = vmatprep.subr.bf16.mxu0 0
    %977 = vmatpush2.bf16.msra.mxu0 0
    %978 = vmatprep.subr.bf16.mxu0 0
    %979 = vmatpush2.bf16.msra.mxu0 0
    %980 = vmatprep.subr.bf16.mxu0 0
    %981 = vmatpush2.bf16.msra.mxu0 0
    %982 = vmatprep.subr.bf16.mxu0 0
    %983 = vmatpush2.bf16.msra.mxu0 0
    %984 = vmatprep.subr.bf16.mxu0 0
    %985 = vmatpush2.bf16.msra.mxu0 0
    %986 = vmatprep.subr.bf16.mxu0 0
    %987 = vmatpush2.bf16.msra.mxu0 0
    %988 = vmatprep.mubr.bf16.mxu0 0
    %989 = vmatmul.mubr.bf16.gmra.mxu0 %v954
    %v990 = vpop.f32.mrf.mxu0
    %v991 = vadd.f32 0.0, %v990
    %v992 = vpop.f32.mrf.mxu0
    %v993 = vpop.f32.mrf.mxu0
    %v994 = vadd.f32 0.0, %v993
    %v995 = vpop.f32.mrf.mxu0
    %996 = vdwg.mxu0
    %v997 = vadd.f32 %v634, %v991
    %v998 = vadd.f32 %v635, %v994
    %v999 = vld [vmem:[%s13] sm:$0x1]
    %v1000 = vld [vmem:[%s14] sm:$0x1]
    %v1001 = vsel %vm106, %v997, 0.0
    %1002 = vadd.xlane.f32.xlu0 %v1001
    %v1003 = vpop.xlane.xlu0 %1002
    %v1004 = vsel %vm106, %v998, 0.0
    %1005 = vadd.xlane.f32.xlu0 %v1004
    %v1006 = vpop.xlane.xlu0 %1005
    %v1007 = vmul.f32 %v1003, %v225
    %v1008 = vmul.f32 %v1006, %v225
    %v1009 = vsub.f32 %v997, %v1007
    %v1010 = vsub.f32 %v998, %v1008
    %v1011 = vmul.f32 %v1009, %v1009
    %v1012 = vmul.f32 %v1010, %v1010
    %v1013 = vsel %vm106, %v1011, 0.0
    %1014 = vadd.xlane.f32.xlu0 %v1013
    %v1015 = vpop.xlane.xlu0 %1014
    %v1016 = vsel %vm106, %v1012, 0.0
    %1017 = vadd.xlane.f32.xlu0 %v1016
    %v1018 = vpop.xlane.xlu0 %1017
    %v1019 = vmul.f32 %v1015, %v225
    %v1020 = vmul.f32 %v1018, %v225
    %v1021 = vadd.f32 %v1019, 1e-05
    %v1022 = vadd.f32 %v1020, 1e-05
    %v1023 = vrsqrt.pop %v1021
    %v1024 = vrsqrt.pop %v1022
    %v1025 = vmul.f32 %v1009, %v1023
    %v1026 = vmul.f32 %v1010, %v1024
    %v1028 = vlaneseq
    %v1029 = vshrl.u32 %v1028, 7
    %v1030 = vsub.s32 0, %v1029
    %v1031 = vrot.slane %v999, %v1030
    %v1033 = vmul.f32 %v1025, %v1031
    %v1034 = vmul.f32 %v1026, %v1031
    %v1036 = vlaneseq
    %v1037 = vshrl.u32 %v1036, 7
    %v1038 = vsub.s32 0, %v1037
    %v1039 = vrot.slane %v1000, %v1038
    %v1041 = vadd.f32 %v1033, %v1039
    %v1042 = vadd.f32 %v1034, %v1039
    %v1043 = vpack.c.bf16 %v1042, %v1041
    %v1044 = vld [vmem:[%s15] sm:$0xf]
    %v1045 = vld [vmem:[%s15 + $0x4] sm:$0xf]
    %v1046 = vld [vmem:[%s15 + $0x8] sm:$0xf]
    %v1047 = vld [vmem:[%s15 + $0xc] sm:$0xf]
    %v1048 = vld [vmem:[%s16] sm:$0x1]
    %v1050 = vlaneseq
    %v1051 = vshrl.u32 %v1050, 7
    %v1052 = vsub.s32 0, %v1051
    %v1053 = vrot.slane %v1048, %v1052
    %v1059 = vunpack.c.l.b16 %v1044
    %v1060 = vunpack.c.l.b16 %v1045
    %v1061 = vunpack.c.l.b16 %v1046
    %v1062 = vunpack.c.l.b16 %v1047
    %v1063 = vpack.c.b16 %v1060, %v1059
    %v1064 = vpack.c.b16 %v1062, %v1061
    %v1068 = vsel %vm106, %v1043, 0
    %1070 = vmatprep.subr.bf16.mxu0 0
    %1071 = vmatpush1.bf16.msra.mxu0 0
    %1072 = vmatprep.subr.bf16.mxu0 0
    %1073 = vmatpush1.bf16.msra.mxu0 0
    %1074 = vmatprep.subr.bf16.mxu0 0
    %1075 = vmatpush1.bf16.msra.mxu0 0
    %1076 = vmatprep.subr.bf16.mxu0 0
    %1077 = vmatpush1.bf16.msra.mxu0 0
    %1078 = vmatprep.subr.bf16.mxu0 0
    %1079 = vmatpush1.bf16.msra.mxu0 0
    %1080 = vmatprep.subr.bf16.mxu0 0
    %1081 = vmatpush1.bf16.msra.mxu0 0
    %1082 = vmatprep.subr.bf16.mxu0 0
    %1083 = vmatpush1.bf16.msra.mxu0 %v1064
    %1084 = vmatprep.subr.bf16.mxu0 0
    %1085 = vmatpush1.bf16.msra.mxu0 %v1063
    %1086 = vmatprep.subr.bf16.mxu0 0
    %1087 = vmatpush2.bf16.msra.mxu0 0
    %1088 = vmatprep.subr.bf16.mxu0 0
    %1089 = vmatpush2.bf16.msra.mxu0 0
    %1090 = vmatprep.subr.bf16.mxu0 0
    %1091 = vmatpush2.bf16.msra.mxu0 0
    %1092 = vmatprep.subr.bf16.mxu0 0
    %1093 = vmatpush2.bf16.msra.mxu0 0
    %1094 = vmatprep.subr.bf16.mxu0 0
    %1095 = vmatpush2.bf16.msra.mxu0 0
    %1096 = vmatprep.subr.bf16.mxu0 0
    %1097 = vmatpush2.bf16.msra.mxu0 0
    %1098 = vmatprep.subr.bf16.mxu0 0
    %1099 = vmatpush2.bf16.msra.mxu0 0
    %1100 = vmatprep.subr.bf16.mxu0 0
    %1101 = vmatpush2.bf16.msra.mxu0 0
    %1102 = vmatprep.mubr.bf16.mxu0 0
    %1103 = vmatmul.mubr.bf16.gmra.mxu0 %v1068
    %v1104 = vpop.f32.mrf.mxu0
    %v1105 = vadd.f32 %v1053, %v1104
    %v1106 = vpop.f32.mrf.mxu0
    %v1107 = vpop.f32.mrf.mxu0
    %v1108 = vadd.f32 %v1053, %v1107
    %v1109 = vpop.f32.mrf.mxu0
    %1110 = vdwg.mxu0
    %v1111 = vmul.f32 %v1105, 0.5
    %v1112 = vmul.f32 %v1108, 0.5
    %v1113 = vmul.f32 %v1105, 0.70710677
    %v1114 = vmul.f32 %v1108, 0.70710677
    %vm1115 = vcmp.ge.f32.partialorder %v1113, 0.0
    %vm1116 = vcmp.ge.f32.partialorder %v1114, 0.0
    %v1117 = vsel %vm1115, 1.0, -1.0
    %v1118 = vsel %vm1116, 1.0, -1.0
    %v1119 = vand.u32 2147483647, %v1113
    %v1120 = vand.u32 2147483647, %v1114
    %v1121 = vmul.f32 %v1119, 0.3275911
    %v1122 = vmul.f32 %v1120, 0.3275911
    %v1123 = vadd.f32 %v1121, 1.0
    %v1124 = vadd.f32 %v1122, 1.0
    %v1125 = vrcp.pop %v1123
    %v1126 = vmul.f32 1.0, %v1125
    %v1127 = vrcp.pop %v1124
    %v1128 = vmul.f32 1.0, %v1127
    %v1129 = vmul.f32 %v1126, 1.0614054
    %v1130 = vmul.f32 %v1128, 1.0614054
    %v1131 = vadd.f32 %v1129, -1.4531521
    %v1132 = vadd.f32 %v1130, -1.4531521
    %v1133 = vmul.f32 %v1131, %v1126
    %v1134 = vmul.f32 %v1132, %v1128
    %v1135 = vadd.f32 %v1133, 1.4214138
    %v1136 = vadd.f32 %v1134, 1.4214138
    %v1137 = vmul.f32 %v1135, %v1126
    %v1138 = vmul.f32 %v1136, %v1128
    %v1139 = vadd.f32 %v1137, -0.28449672
    %v1140 = vadd.f32 %v1138, -0.28449672
    %v1141 = vmul.f32 %v1139, %v1126
    %v1142 = vmul.f32 %v1140, %v1128
    %v1143 = vadd.f32 %v1141, 0.2548296
    %v1144 = vadd.f32 %v1142, 0.2548296
    %v1145 = vmul.f32 %v1143, %v1126
    %v1146 = vmul.f32 %v1144, %v1128
    %v1147 = vsub.f32 0.0, %v1119
    %v1148 = vsub.f32 0.0, %v1120
    %v1149 = vmul.f32 %v1147, %v1119
    %v1150 = vmul.f32 %v1148, %v1120
    %v1151 = vmul.f32 %v1149, 1.442695
    %v1152 = vpow.pop %v1151
    %v1153 = vmul.f32 %v1150, 1.442695
    %v1154 = vpow.pop %v1153
    %v1155 = vmul.f32 %v1145, %v1152
    %v1156 = vmul.f32 %v1146, %v1154
    %v1157 = vsub.f32 1.0, %v1155
    %v1158 = vsub.f32 1.0, %v1156
    %v1159 = vmul.f32 %v1117, %v1157
    %v1160 = vmul.f32 %v1118, %v1158
    %v1161 = vadd.f32 %v1159, 1.0
    %v1162 = vadd.f32 %v1160, 1.0
    %v1163 = vmul.f32 %v1111, %v1161
    %v1164 = vmul.f32 %v1112, %v1162
    %v1165 = vpack.c.bf16 %v1164, %v1163
    %v1166 = vld [vmem:[%s17] sm:$0xf]
    %v1167 = vld [vmem:[%s17 + $0x4] sm:$0xf]
    %v1168 = vld [vmem:[%s17 + $0x8] sm:$0xf]
    %v1169 = vld [vmem:[%s17 + $0xc] sm:$0xf]
    %v1170 = vld [vmem:[%s17 + $0x10] sm:$0xf]
    %v1171 = vld [vmem:[%s17 + $0x14] sm:$0xf]
    %v1172 = vld [vmem:[%s17 + $0x18] sm:$0xf]
    %v1173 = vld [vmem:[%s17 + $0x1c] sm:$0xf]
    %v1174 = vld [vmem:[%s17 + $0x20] sm:$0xf]
    %v1175 = vld [vmem:[%s17 + $0x24] sm:$0xf]
    %v1176 = vld [vmem:[%s17 + $0x28] sm:$0xf]
    %v1177 = vld [vmem:[%s17 + $0x2c] sm:$0xf]
    %v1178 = vld [vmem:[%s17 + $0x30] sm:$0xf]
    %v1179 = vld [vmem:[%s17 + $0x34] sm:$0xf]
    %v1180 = vld [vmem:[%s17 + $0x38] sm:$0xf]
    %v1181 = vld [vmem:[%s17 + $0x3c] sm:$0xf]
    %v1198 = vunpack.c.l.b16 %v1166
    %v1199 = vunpack.c.l.b16 %v1167
    %v1200 = vunpack.c.l.b16 %v1168
    %v1201 = vunpack.c.l.b16 %v1169
    %v1202 = vunpack.c.l.b16 %v1170
    %v1203 = vunpack.c.l.b16 %v1171
    %v1204 = vunpack.c.l.b16 %v1172
    %v1205 = vunpack.c.l.b16 %v1173
    %v1206 = vunpack.c.l.b16 %v1174
    %v1207 = vunpack.c.l.b16 %v1175
    %v1208 = vunpack.c.l.b16 %v1176
    %v1209 = vunpack.c.l.b16 %v1177
    %v1210 = vunpack.c.l.b16 %v1178
    %v1211 = vunpack.c.l.b16 %v1179
    %v1212 = vunpack.c.l.b16 %v1180
    %v1213 = vunpack.c.l.b16 %v1181
    %v1214 = vpack.c.b16 %v1199, %v1198
    %v1215 = vpack.c.b16 %v1201, %v1200
    %v1216 = vpack.c.b16 %v1203, %v1202
    %v1217 = vpack.c.b16 %v1205, %v1204
    %v1218 = vpack.c.b16 %v1207, %v1206
    %v1219 = vpack.c.b16 %v1209, %v1208
    %v1220 = vpack.c.b16 %v1211, %v1210
    %v1221 = vpack.c.b16 %v1213, %v1212
    %1230 = vmatprep.subr.bf16.mxu0 0
    %1231 = vmatpush1.bf16.msra.mxu0 %v1221
    %1232 = vmatprep.subr.bf16.mxu0 0
    %1233 = vmatpush1.bf16.msra.mxu0 %v1220
    %1234 = vmatprep.subr.bf16.mxu0 0
    %1235 = vmatpush1.bf16.msra.mxu0 %v1219
    %1236 = vmatprep.subr.bf16.mxu0 0
    %1237 = vmatpush1.bf16.msra.mxu0 %v1218
    %1238 = vmatprep.subr.bf16.mxu0 0
    %1239 = vmatpush1.bf16.msra.mxu0 %v1217
    %1240 = vmatprep.subr.bf16.mxu0 0
    %1241 = vmatpush1.bf16.msra.mxu0 %v1216
    %1242 = vmatprep.subr.bf16.mxu0 0
    %1243 = vmatpush1.bf16.msra.mxu0 %v1215
    %1244 = vmatprep.subr.bf16.mxu0 0
    %1245 = vmatpush1.bf16.msra.mxu0 %v1214
    %1246 = vmatprep.subr.bf16.mxu0 0
    %1247 = vmatpush2.bf16.msra.mxu0 0
    %1248 = vmatprep.subr.bf16.mxu0 0
    %1249 = vmatpush2.bf16.msra.mxu0 0
    %1250 = vmatprep.subr.bf16.mxu0 0
    %1251 = vmatpush2.bf16.msra.mxu0 0
    %1252 = vmatprep.subr.bf16.mxu0 0
    %1253 = vmatpush2.bf16.msra.mxu0 0
    %1254 = vmatprep.subr.bf16.mxu0 0
    %1255 = vmatpush2.bf16.msra.mxu0 0
    %1256 = vmatprep.subr.bf16.mxu0 0
    %1257 = vmatpush2.bf16.msra.mxu0 0
    %1258 = vmatprep.subr.bf16.mxu0 0
    %1259 = vmatpush2.bf16.msra.mxu0 0
    %1260 = vmatprep.subr.bf16.mxu0 0
    %1261 = vmatpush2.bf16.msra.mxu0 0
    %1262 = vmatprep.mubr.bf16.mxu0 0
    %1263 = vmatmul.mubr.bf16.gmra.mxu0 %v1165
    %v1264 = vpop.f32.mrf.mxu0
    %v1265 = vadd.f32 0.0, %v1264
    %v1266 = vpop.f32.mrf.mxu0
    %v1267 = vpop.f32.mrf.mxu0
    %v1268 = vadd.f32 0.0, %v1267
    %v1269 = vpop.f32.mrf.mxu0
    %1270 = vdwg.mxu0
    %v1271 = vadd.f32 %v997, %v1265
    %v1272 = vadd.f32 %v998, %v1268
    %v1273 = vld [vmem:[%s18] sm:$0x1]
    %v1275 = vlaneseq
    %v1276 = vshrl.u32 %v1275, 7
    %v1277 = vsub.s32 0, %v1276
    %v1278 = vrot.slane %v1273, %v1277
    %v1280 = vadd.f32 %v1271, %v1278
    %v1281 = vadd.f32 %v1272, %v1278
    %s1282 = scalar_lea.vmem %s7, 1
    %v1283 = vld [vmem:[%s1282] sm:$0x1]
    %s1284 = scalar_lea.vmem %s8, 1
    %v1285 = vld [vmem:[%s1284] sm:$0x1]
    %v1286 = vsel %vm106, %v1280, 0.0
    %1287 = vadd.xlane.f32.xlu0 %v1286
    %v1288 = vpop.xlane.xlu0 %1287
    %v1289 = vsel %vm106, %v1281, 0.0
    %1290 = vadd.xlane.f32.xlu0 %v1289
    %v1291 = vpop.xlane.xlu0 %1290
    %v1292 = vmul.f32 %v1288, %v225
    %v1293 = vmul.f32 %v1291, %v225
    %v1294 = vsub.f32 %v1280, %v1292
    %v1295 = vsub.f32 %v1281, %v1293
    %v1296 = vmul.f32 %v1294, %v1294
    %v1297 = vmul.f32 %v1295, %v1295
    %v1298 = vsel %vm106, %v1296, 0.0
    %1299 = vadd.xlane.f32.xlu0 %v1298
    %v1300 = vpop.xlane.xlu0 %1299
    %v1301 = vsel %vm106, %v1297, 0.0
    %1302 = vadd.xlane.f32.xlu0 %v1301
    %v1303 = vpop.xlane.xlu0 %1302
    %v1304 = vmul.f32 %v1300, %v225
    %v1305 = vmul.f32 %v1303, %v225
    %v1306 = vadd.f32 %v1304, 1e-05
    %v1307 = vadd.f32 %v1305, 1e-05
    %v1308 = vrsqrt.pop %v1306
    %v1309 = vrsqrt.pop %v1307
    %v1310 = vmul.f32 %v1294, %v1308
    %v1311 = vmul.f32 %v1295, %v1309
    %v1313 = vlaneseq
    %v1314 = vshrl.u32 %v1313, 7
    %v1315 = vsub.s32 0, %v1314
    %v1316 = vrot.slane %v1283, %v1315
    %v1318 = vmul.f32 %v1310, %v1316
    %v1319 = vmul.f32 %v1311, %v1316
    %v1321 = vlaneseq
    %v1322 = vshrl.u32 %v1321, 7
    %v1323 = vsub.s32 0, %v1322
    %v1324 = vrot.slane %v1285, %v1323
    %v1326 = vadd.f32 %v1318, %v1324
    %v1327 = vadd.f32 %v1319, %v1324
    %v1328 = vpack.c.bf16 %v1327, %v1326
    %s1329 = scalar_lea.vmem %s12, 1
    %v1330 = vld [vmem:[%s1329] sm:$0x1]
    %v1332 = vlaneseq
    %v1333 = vshrl.u32 %v1332, 7
    %v1334 = vsub.s32 0, %v1333
    %v1335 = vrot.slane %v1330, %v1334
    %v1337 = vadd.f32 %v1280, %v1335
    %v1338 = vadd.f32 %v1281, %v1335
    %s1339 = scalar_lea.vmem %s9, 96
    %v1340 = vld [vmem:[%s1339] sm:$0xf]
    %v1341 = vld [vmem:[%s1339 + $0x4] sm:$0xf]
    %v1342 = vld [vmem:[%s1339 + $0x8] sm:$0xf]
    %v1343 = vld [vmem:[%s1339 + $0xc] sm:$0xf]
    %s1344 = scalar_lea.vmem %s10, 6
    %v1345 = vld [vmem:[%s1344] sm:$0x1]
    %v1347 = vlaneseq
    %v1348 = vshrl.u32 %v1347, 7
    %v1349 = vsub.s32 0, %v1348
    %v1350 = vrot.slane %v1345, %v1349
    %v1356 = vunpack.c.l.b16 %v1340
    %v1357 = vunpack.c.l.b16 %v1341
    %v1358 = vunpack.c.l.b16 %v1342
    %v1359 = vunpack.c.l.b16 %v1343
    %v1360 = vpack.c.b16 %v1357, %v1356
    %v1361 = vpack.c.b16 %v1359, %v1358
    %v1365 = vsel %vm106, %v1328, 0
    %1367 = vmatprep.subr.bf16.mxu0 0
    %1368 = vmatpush1.bf16.msra.mxu0 0
    %1369 = vmatprep.subr.bf16.mxu0 0
    %1370 = vmatpush1.bf16.msra.mxu0 0
    %1371 = vmatprep.subr.bf16.mxu0 0
    %1372 = vmatpush1.bf16.msra.mxu0 0
    %1373 = vmatprep.subr.bf16.mxu0 0
    %1374 = vmatpush1.bf16.msra.mxu0 0
    %1375 = vmatprep.subr.bf16.mxu0 0
    %1376 = vmatpush1.bf16.msra.mxu0 0
    %1377 = vmatprep.subr.bf16.mxu0 0
    %1378 = vmatpush1.bf16.msra.mxu0 0
    %1379 = vmatprep.subr.bf16.mxu0 0
    %1380 = vmatpush1.bf16.msra.mxu0 %v1361
    %1381 = vmatprep.subr.bf16.mxu0 0
    %1382 = vmatpush1.bf16.msra.mxu0 %v1360
    %1383 = vmatprep.subr.bf16.mxu0 0
    %1384 = vmatpush2.bf16.msra.mxu0 0
    %1385 = vmatprep.subr.bf16.mxu0 0
    %1386 = vmatpush2.bf16.msra.mxu0 0
    %1387 = vmatprep.subr.bf16.mxu0 0
    %1388 = vmatpush2.bf16.msra.mxu0 0
    %1389 = vmatprep.subr.bf16.mxu0 0
    %1390 = vmatpush2.bf16.msra.mxu0 0
    %1391 = vmatprep.subr.bf16.mxu0 0
    %1392 = vmatpush2.bf16.msra.mxu0 0
    %1393 = vmatprep.subr.bf16.mxu0 0
    %1394 = vmatpush2.bf16.msra.mxu0 0
    %1395 = vmatprep.subr.bf16.mxu0 0
    %1396 = vmatpush2.bf16.msra.mxu0 0
    %1397 = vmatprep.subr.bf16.mxu0 0
    %1398 = vmatpush2.bf16.msra.mxu0 0
    %1399 = vmatprep.mubr.bf16.mxu0 0
    %1400 = vmatmul.mubr.bf16.gmra.mxu0 %v1365
    %v1401 = vpop.f32.mrf.mxu0
    %v1402 = vadd.f32 %v1350, %v1401
    %v1403 = vpop.f32.mrf.mxu0
    %v1404 = vpop.f32.mrf.mxu0
    %v1405 = vadd.f32 %v1350, %v1404
    %v1406 = vpop.f32.mrf.mxu0
    %1407 = vdwg.mxu0
    %s1408 = scalar_lea.vmem %s9, 112
    %v1409 = vld [vmem:[%s1408] sm:$0xf]
    %v1410 = vld [vmem:[%s1408 + $0x4] sm:$0xf]
    %v1411 = vld [vmem:[%s1408 + $0x8] sm:$0xf]
    %v1412 = vld [vmem:[%s1408 + $0xc] sm:$0xf]
    %s1413 = scalar_lea.vmem %s10, 7
    %v1414 = vld [vmem:[%s1413] sm:$0x1]
    %v1416 = vlaneseq
    %v1417 = vshrl.u32 %v1416, 7
    %v1418 = vsub.s32 0, %v1417
    %v1419 = vrot.slane %v1414, %v1418
    %v1425 = vunpack.c.l.b16 %v1409
    %v1426 = vunpack.c.l.b16 %v1410
    %v1427 = vunpack.c.l.b16 %v1411
    %v1428 = vunpack.c.l.b16 %v1412
    %v1429 = vpack.c.b16 %v1426, %v1425
    %v1430 = vpack.c.b16 %v1428, %v1427
    %1433 = vmatprep.subr.bf16.mxu0 0
    %1434 = vmatpush1.bf16.msra.mxu0 0
    %1435 = vmatprep.subr.bf16.mxu0 0
    %1436 = vmatpush1.bf16.msra.mxu0 0
    %1437 = vmatprep.subr.bf16.mxu0 0
    %1438 = vmatpush1.bf16.msra.mxu0 0
    %1439 = vmatprep.subr.bf16.mxu0 0
    %1440 = vmatpush1.bf16.msra.mxu0 0
    %1441 = vmatprep.subr.bf16.mxu0 0
    %1442 = vmatpush1.bf16.msra.mxu0 0
    %1443 = vmatprep.subr.bf16.mxu0 0
    %1444 = vmatpush1.bf16.msra.mxu0 0
    %1445 = vmatprep.subr.bf16.mxu0 0
    %1446 = vmatpush1.bf16.msra.mxu0 %v1430
    %1447 = vmatprep.subr.bf16.mxu0 0
    %1448 = vmatpush1.bf16.msra.mxu0 %v1429
    %1449 = vmatprep.subr.bf16.mxu0 0
    %1450 = vmatpush2.bf16.msra.mxu0 0
    %1451 = vmatprep.subr.bf16.mxu0 0
    %1452 = vmatpush2.bf16.msra.mxu0 0
    %1453 = vmatprep.subr.bf16.mxu0 0
    %1454 = vmatpush2.bf16.msra.mxu0 0
    %1455 = vmatprep.subr.bf16.mxu0 0
    %1456 = vmatpush2.bf16.msra.mxu0 0
    %1457 = vmatprep.subr.bf16.mxu0 0
    %1458 = vmatpush2.bf16.msra.mxu0 0
    %1459 = vmatprep.subr.bf16.mxu0 0
    %1460 = vmatpush2.bf16.msra.mxu0 0
    %1461 = vmatprep.subr.bf16.mxu0 0
    %1462 = vmatpush2.bf16.msra.mxu0 0
    %1463 = vmatprep.subr.bf16.mxu0 0
    %1464 = vmatpush2.bf16.msra.mxu0 0
    %1465 = vmatprep.mubr.bf16.mxu0 0
    %1466 = vmatmul.mubr.bf16.gmra.mxu0 %v1365
    %v1467 = vpop.f32.mrf.mxu0
    %v1468 = vadd.f32 %v1419, %v1467
    %v1469 = vpop.f32.mrf.mxu0
    %v1470 = vpop.f32.mrf.mxu0
    %v1471 = vadd.f32 %v1419, %v1470
    %v1472 = vpop.f32.mrf.mxu0
    %1473 = vdwg.mxu0
    %s1474 = scalar_lea.vmem %s9, 128
    %v1475 = vld [vmem:[%s1474] sm:$0xf]
    %v1476 = vld [vmem:[%s1474 + $0x4] sm:$0xf]
    %v1477 = vld [vmem:[%s1474 + $0x8] sm:$0xf]
    %v1478 = vld [vmem:[%s1474 + $0xc] sm:$0xf]
    %s1479 = scalar_lea.vmem %s10, 8
    %v1480 = vld [vmem:[%s1479] sm:$0x1]
    %v1482 = vlaneseq
    %v1483 = vshrl.u32 %v1482, 7
    %v1484 = vsub.s32 0, %v1483
    %v1485 = vrot.slane %v1480, %v1484
    %v1491 = vunpack.c.l.b16 %v1475
    %v1492 = vunpack.c.l.b16 %v1476
    %v1493 = vunpack.c.l.b16 %v1477
    %v1494 = vunpack.c.l.b16 %v1478
    %v1495 = vpack.c.b16 %v1492, %v1491
    %v1496 = vpack.c.b16 %v1494, %v1493
    %1499 = vmatprep.subr.bf16.mxu0 0
    %1500 = vmatpush1.bf16.msra.mxu0 0
    %1501 = vmatprep.subr.bf16.mxu0 0
    %1502 = vmatpush1.bf16.msra.mxu0 0
    %1503 = vmatprep.subr.bf16.mxu0 0
    %1504 = vmatpush1.bf16.msra.mxu0 0
    %1505 = vmatprep.subr.bf16.mxu0 0
    %1506 = vmatpush1.bf16.msra.mxu0 0
    %1507 = vmatprep.subr.bf16.mxu0 0
    %1508 = vmatpush1.bf16.msra.mxu0 0
    %1509 = vmatprep.subr.bf16.mxu0 0
    %1510 = vmatpush1.bf16.msra.mxu0 0
    %1511 = vmatprep.subr.bf16.mxu0 0
    %1512 = vmatpush1.bf16.msra.mxu0 %v1496
    %1513 = vmatprep.subr.bf16.mxu0 0
    %1514 = vmatpush1.bf16.msra.mxu0 %v1495
    %1515 = vmatprep.subr.bf16.mxu0 0
    %1516 = vmatpush2.bf16.msra.mxu0 0
    %1517 = vmatprep.subr.bf16.mxu0 0
    %1518 = vmatpush2.bf16.msra.mxu0 0
    %1519 = vmatprep.subr.bf16.mxu0 0
    %1520 = vmatpush2.bf16.msra.mxu0 0
    %1521 = vmatprep.subr.bf16.mxu0 0
    %1522 = vmatpush2.bf16.msra.mxu0 0
    %1523 = vmatprep.subr.bf16.mxu0 0
    %1524 = vmatpush2.bf16.msra.mxu0 0
    %1525 = vmatprep.subr.bf16.mxu0 0
    %1526 = vmatpush2.bf16.msra.mxu0 0
    %1527 = vmatprep.subr.bf16.mxu0 0
    %1528 = vmatpush2.bf16.msra.mxu0 0
    %1529 = vmatprep.subr.bf16.mxu0 0
    %1530 = vmatpush2.bf16.msra.mxu0 0
    %1531 = vmatprep.mubr.bf16.mxu0 0
    %1532 = vmatmul.mubr.bf16.gmra.mxu0 %v1365
    %v1533 = vpop.f32.mrf.mxu0
    %v1534 = vadd.f32 %v1485, %v1533
    %v1535 = vpop.f32.mrf.mxu0
    %v1536 = vpop.f32.mrf.mxu0
    %v1537 = vadd.f32 %v1485, %v1536
    %v1538 = vpop.f32.mrf.mxu0
    %1539 = vdwg.mxu0
    %v1540 = vpack.c.bf16 %v1405, %v1402
    %v1541 = vpack.c.bf16 %v1471, %v1468
    %v1543 = vsel %vm473, %v1540, 0
    %v1546 = vsel %vm473, %v1541, 0
    %1548 = vmatprep.subr.bf16.mxu0 0
    %1549 = vmatpush1.bf16.xpose.msra.mxu0 0
    %1550 = vmatprep.subr.bf16.mxu0 0
    %1551 = vmatpush1.bf16.xpose.msra.mxu0 0
    %1552 = vmatprep.subr.bf16.mxu0 0
    %1553 = vmatpush1.bf16.xpose.msra.mxu0 0
    %1554 = vmatprep.subr.bf16.mxu0 0
    %1555 = vmatpush1.bf16.xpose.msra.mxu0 0
    %1556 = vmatprep.subr.bf16.mxu0 0
    %1557 = vmatpush1.bf16.xpose.msra.mxu0 0
    %1558 = vmatprep.subr.bf16.mxu0 0
    %1559 = vmatpush1.bf16.xpose.msra.mxu0 0
    %1560 = vmatprep.subr.bf16.mxu0 0
    %1561 = vmatpush1.bf16.xpose.msra.mxu0 0
    %1562 = vmatprep.subr.bf16.mxu0 0
    %1563 = vmatpush1.bf16.xpose.msra.mxu0 %v1546
    %1564 = vmatprep.subr.bf16.mxu0 0
    %1565 = vmatpush2.bf16.xpose.msra.mxu0 0
    %1566 = vmatprep.subr.bf16.mxu0 0
    %1567 = vmatpush2.bf16.xpose.msra.mxu0 0
    %1568 = vmatprep.subr.bf16.mxu0 0
    %1569 = vmatpush2.bf16.xpose.msra.mxu0 0
    %1570 = vmatprep.subr.bf16.mxu0 0
    %1571 = vmatpush2.bf16.xpose.msra.mxu0 0
    %1572 = vmatprep.subr.bf16.mxu0 0
    %1573 = vmatpush2.bf16.xpose.msra.mxu0 0
    %1574 = vmatprep.subr.bf16.mxu0 0
    %1575 = vmatpush2.bf16.xpose.msra.mxu0 0
    %1576 = vmatprep.subr.bf16.mxu0 0
    %1577 = vmatpush2.bf16.xpose.msra.mxu0 0
    %1578 = vmatprep.subr.bf16.mxu0 0
    %1579 = vmatpush2.bf16.xpose.msra.mxu0 0
    %1580 = vmatprep.mubr.bf16.mxu0 0
    %1581 = vmatmul.mubr.bf16.gmra.mxu0 %v1543
    %v1582 = vpop.f32.mrf.mxu0
    %v1583 = vadd.f32 %v215, %v1582
    %v1584 = vpop.f32.mrf.mxu0
    %v1585 = vpop.f32.mrf.mxu0
    %v1586 = vadd.f32 %v216, %v1585
    %v1587 = vpop.f32.mrf.mxu0
    %1588 = vdwg.mxu0
    %v1589 = vmul.f32 %v1583, 1.442695
    %v1590 = vpow.pop %v1589
    %v1591 = vmul.f32 %v1586, 1.442695
    %v1592 = vpow.pop %v1591
    %v1593 = vsel %vm473, %v1590, 0.0
    %1594 = vadd.xlane.f32.xlu0 %v1593
    %v1595 = vpop.xlane.xlu0 %1594
    %v1596 = vsel %vm473, %v1592, 0.0
    %1597 = vadd.xlane.f32.xlu0 %v1596
    %v1598 = vpop.xlane.xlu0 %1597
    %v1599 = vrcp.pop %v1595
    %v1600 = vrcp.pop %v1598
    %v1601 = vmul.f32 %v1590, %v1599
    %v1602 = vmul.f32 %v1592, %v1600
    %v1603 = vpack.c.bf16 %v1602, %v1601
    %v1604 = vpack.c.bf16 %v1537, %v1534
    %v1606 = vsel %vm473, %v1603, 0
    %1608 = vmatprep.subr.bf16.mxu0 0
    %1609 = vmatpush1.bf16.msra.mxu0 0
    %1610 = vmatprep.subr.bf16.mxu0 0
    %1611 = vmatpush1.bf16.msra.mxu0 0
    %1612 = vmatprep.subr.bf16.mxu0 0
    %1613 = vmatpush1.bf16.msra.mxu0 0
    %1614 = vmatprep.subr.bf16.mxu0 0
    %1615 = vmatpush1.bf16.msra.mxu0 0
    %1616 = vmatprep.subr.bf16.mxu0 0
    %1617 = vmatpush1.bf16.msra.mxu0 0
    %1618 = vmatprep.subr.bf16.mxu0 0
    %1619 = vmatpush1.bf16.msra.mxu0 0
    %1620 = vmatprep.subr.bf16.mxu0 0
    %1621 = vmatpush1.bf16.msra.mxu0 0
    %1622 = vmatprep.subr.bf16.mxu0 0
    %1623 = vmatpush1.bf16.msra.mxu0 %v1604
    %1624 = vmatprep.subr.bf16.mxu0 0
    %1625 = vmatpush2.bf16.msra.mxu0 0
    %1626 = vmatprep.subr.bf16.mxu0 0
    %1627 = vmatpush2.bf16.msra.mxu0 0
    %1628 = vmatprep.subr.bf16.mxu0 0
    %1629 = vmatpush2.bf16.msra.mxu0 0
    %1630 = vmatprep.subr.bf16.mxu0 0
    %1631 = vmatpush2.bf16.msra.mxu0 0
    %1632 = vmatprep.subr.bf16.mxu0 0
    %1633 = vmatpush2.bf16.msra.mxu0 0
    %1634 = vmatprep.subr.bf16.mxu0 0
    %1635 = vmatpush2.bf16.msra.mxu0 0
    %1636 = vmatprep.subr.bf16.mxu0 0
    %1637 = vmatpush2.bf16.msra.mxu0 0
    %1638 = vmatprep.subr.bf16.mxu0 0
    %1639 = vmatpush2.bf16.msra.mxu0 0
    %1640 = vmatprep.mubr.bf16.mxu0 0
    %1641 = vmatmul.mubr.bf16.gmra.mxu0 %v1606
    %v1642 = vpop.f32.mrf.mxu0
    %v1643 = vadd.f32 0.0, %v1642
    %v1644 = vpop.f32.mrf.mxu0
    %v1645 = vpop.f32.mrf.mxu0
    %v1646 = vadd.f32 0.0, %v1645
    %v1647 = vpop.f32.mrf.mxu0
    %1648 = vdwg.mxu0
    %v1649 = vpack.c.bf16 %v1646, %v1643
    %s1650 = scalar_lea.vmem %s11, 16
    %v1651 = vld [vmem:[%s1650] sm:$0xf]
    %v1652 = vld [vmem:[%s1650 + $0x4] sm:$0xf]
    %v1655 = vunpack.c.l.b16 %v1651
    %v1656 = vunpack.c.l.b16 %v1652
    %v1657 = vpack.c.b16 %v1656, %v1655
    %v1660 = vsel %vm473, %v1649, 0
    %1662 = vmatprep.subr.bf16.mxu0 0
    %1663 = vmatpush1.bf16.msra.mxu0 0
    %1664 = vmatprep.subr.bf16.mxu0 0
    %1665 = vmatpush1.bf16.msra.mxu0 0
    %1666 = vmatprep.subr.bf16.mxu0 0
    %1667 = vmatpush1.bf16.msra.mxu0 0
    %1668 = vmatprep.subr.bf16.mxu0 0
    %1669 = vmatpush1.bf16.msra.mxu0 0
    %1670 = vmatprep.subr.bf16.mxu0 0
    %1671 = vmatpush1.bf16.msra.mxu0 0
    %1672 = vmatprep.subr.bf16.mxu0 0
    %1673 = vmatpush1.bf16.msra.mxu0 0
    %1674 = vmatprep.subr.bf16.mxu0 0
    %1675 = vmatpush1.bf16.msra.mxu0 0
    %1676 = vmatprep.subr.bf16.mxu0 0
    %1677 = vmatpush1.bf16.msra.mxu0 %v1657
    %1678 = vmatprep.subr.bf16.mxu0 0
    %1679 = vmatpush2.bf16.msra.mxu0 0
    %1680 = vmatprep.subr.bf16.mxu0 0
    %1681 = vmatpush2.bf16.msra.mxu0 0
    %1682 = vmatprep.subr.bf16.mxu0 0
    %1683 = vmatpush2.bf16.msra.mxu0 0
    %1684 = vmatprep.subr.bf16.mxu0 0
    %1685 = vmatpush2.bf16.msra.mxu0 0
    %1686 = vmatprep.subr.bf16.mxu0 0
    %1687 = vmatpush2.bf16.msra.mxu0 0
    %1688 = vmatprep.subr.bf16.mxu0 0
    %1689 = vmatpush2.bf16.msra.mxu0 0
    %1690 = vmatprep.subr.bf16.mxu0 0
    %1691 = vmatpush2.bf16.msra.mxu0 0
    %1692 = vmatprep.subr.bf16.mxu0 0
    %1693 = vmatpush2.bf16.msra.mxu0 0
    %1694 = vmatprep.mubr.bf16.mxu0 0
    %1695 = vmatmul.mubr.bf16.gmra.mxu0 %v1660
    %v1696 = vpop.f32.mrf.mxu0
    %v1697 = vadd.f32 0.0, %v1696
    %v1698 = vpop.f32.mrf.mxu0
    %v1699 = vpop.f32.mrf.mxu0
    %v1700 = vadd.f32 0.0, %v1699
    %v1701 = vpop.f32.mrf.mxu0
    %1702 = vdwg.mxu0
    %v1703 = vadd.f32 %v1337, %v1697
    %v1704 = vadd.f32 %v1338, %v1700
    %s1705 = scalar_lea.vmem %s9, 144
    %v1706 = vld [vmem:[%s1705] sm:$0xf]
    %v1707 = vld [vmem:[%s1705 + $0x4] sm:$0xf]
    %v1708 = vld [vmem:[%s1705 + $0x8] sm:$0xf]
    %v1709 = vld [vmem:[%s1705 + $0xc] sm:$0xf]
    %s1710 = scalar_lea.vmem %s10, 9
    %v1711 = vld [vmem:[%s1710] sm:$0x1]
    %v1713 = vlaneseq
    %v1714 = vshrl.u32 %v1713, 7
    %v1715 = vsub.s32 0, %v1714
    %v1716 = vrot.slane %v1711, %v1715
    %v1722 = vunpack.c.l.b16 %v1706
    %v1723 = vunpack.c.l.b16 %v1707
    %v1724 = vunpack.c.l.b16 %v1708
    %v1725 = vunpack.c.l.b16 %v1709
    %v1726 = vpack.c.b16 %v1723, %v1722
    %v1727 = vpack.c.b16 %v1725, %v1724
    %1730 = vmatprep.subr.bf16.mxu0 0
    %1731 = vmatpush1.bf16.msra.mxu0 0
    %1732 = vmatprep.subr.bf16.mxu0 0
    %1733 = vmatpush1.bf16.msra.mxu0 0
    %1734 = vmatprep.subr.bf16.mxu0 0
    %1735 = vmatpush1.bf16.msra.mxu0 0
    %1736 = vmatprep.subr.bf16.mxu0 0
    %1737 = vmatpush1.bf16.msra.mxu0 0
    %1738 = vmatprep.subr.bf16.mxu0 0
    %1739 = vmatpush1.bf16.msra.mxu0 0
    %1740 = vmatprep.subr.bf16.mxu0 0
    %1741 = vmatpush1.bf16.msra.mxu0 0
    %1742 = vmatprep.subr.bf16.mxu0 0
    %1743 = vmatpush1.bf16.msra.mxu0 %v1727
    %1744 = vmatprep.subr.bf16.mxu0 0
    %1745 = vmatpush1.bf16.msra.mxu0 %v1726
    %1746 = vmatprep.subr.bf16.mxu0 0
    %1747 = vmatpush2.bf16.msra.mxu0 0
    %1748 = vmatprep.subr.bf16.mxu0 0
    %1749 = vmatpush2.bf16.msra.mxu0 0
    %1750 = vmatprep.subr.bf16.mxu0 0
    %1751 = vmatpush2.bf16.msra.mxu0 0
    %1752 = vmatprep.subr.bf16.mxu0 0
    %1753 = vmatpush2.bf16.msra.mxu0 0
    %1754 = vmatprep.subr.bf16.mxu0 0
    %1755 = vmatpush2.bf16.msra.mxu0 0
    %1756 = vmatprep.subr.bf16.mxu0 0
    %1757 = vmatpush2.bf16.msra.mxu0 0
    %1758 = vmatprep.subr.bf16.mxu0 0
    %1759 = vmatpush2.bf16.msra.mxu0 0
    %1760 = vmatprep.subr.bf16.mxu0 0
    %1761 = vmatpush2.bf16.msra.mxu0 0
    %1762 = vmatprep.mubr.bf16.mxu0 0
    %1763 = vmatmul.mubr.bf16.gmra.mxu0 %v1365
    %v1764 = vpop.f32.mrf.mxu0
    %v1765 = vadd.f32 %v1716, %v1764
    %v1766 = vpop.f32.mrf.mxu0
    %v1767 = vpop.f32.mrf.mxu0
    %v1768 = vadd.f32 %v1716, %v1767
    %v1769 = vpop.f32.mrf.mxu0
    %1770 = vdwg.mxu0
    %s1771 = scalar_lea.vmem %s9, 160
    %v1772 = vld [vmem:[%s1771] sm:$0xf]
    %v1773 = vld [vmem:[%s1771 + $0x4] sm:$0xf]
    %v1774 = vld [vmem:[%s1771 + $0x8] sm:$0xf]
    %v1775 = vld [vmem:[%s1771 + $0xc] sm:$0xf]
    %s1776 = scalar_lea.vmem %s10, 10
    %v1777 = vld [vmem:[%s1776] sm:$0x1]
    %v1779 = vlaneseq
    %v1780 = vshrl.u32 %v1779, 7
    %v1781 = vsub.s32 0, %v1780
    %v1782 = vrot.slane %v1777, %v1781
    %v1788 = vunpack.c.l.b16 %v1772
    %v1789 = vunpack.c.l.b16 %v1773
    %v1790 = vunpack.c.l.b16 %v1774
    %v1791 = vunpack.c.l.b16 %v1775
    %v1792 = vpack.c.b16 %v1789, %v1788
    %v1793 = vpack.c.b16 %v1791, %v1790
    %1796 = vmatprep.subr.bf16.mxu0 0
    %1797 = vmatpush1.bf16.msra.mxu0 0
    %1798 = vmatprep.subr.bf16.mxu0 0
    %1799 = vmatpush1.bf16.msra.mxu0 0
    %1800 = vmatprep.subr.bf16.mxu0 0
    %1801 = vmatpush1.bf16.msra.mxu0 0
    %1802 = vmatprep.subr.bf16.mxu0 0
    %1803 = vmatpush1.bf16.msra.mxu0 0
    %1804 = vmatprep.subr.bf16.mxu0 0
    %1805 = vmatpush1.bf16.msra.mxu0 0
    %1806 = vmatprep.subr.bf16.mxu0 0
    %1807 = vmatpush1.bf16.msra.mxu0 0
    %1808 = vmatprep.subr.bf16.mxu0 0
    %1809 = vmatpush1.bf16.msra.mxu0 %v1793
    %1810 = vmatprep.subr.bf16.mxu0 0
    %1811 = vmatpush1.bf16.msra.mxu0 %v1792
    %1812 = vmatprep.subr.bf16.mxu0 0
    %1813 = vmatpush2.bf16.msra.mxu0 0
    %1814 = vmatprep.subr.bf16.mxu0 0
    %1815 = vmatpush2.bf16.msra.mxu0 0
    %1816 = vmatprep.subr.bf16.mxu0 0
    %1817 = vmatpush2.bf16.msra.mxu0 0
    %1818 = vmatprep.subr.bf16.mxu0 0
    %1819 = vmatpush2.bf16.msra.mxu0 0
    %1820 = vmatprep.subr.bf16.mxu0 0
    %1821 = vmatpush2.bf16.msra.mxu0 0
    %1822 = vmatprep.subr.bf16.mxu0 0
    %1823 = vmatpush2.bf16.msra.mxu0 0
    %1824 = vmatprep.subr.bf16.mxu0 0
    %1825 = vmatpush2.bf16.msra.mxu0 0
    %1826 = vmatprep.subr.bf16.mxu0 0
    %1827 = vmatpush2.bf16.msra.mxu0 0
    %1828 = vmatprep.mubr.bf16.mxu0 0
    %1829 = vmatmul.mubr.bf16.gmra.mxu0 %v1365
    %v1830 = vpop.f32.mrf.mxu0
    %v1831 = vadd.f32 %v1782, %v1830
    %v1832 = vpop.f32.mrf.mxu0
    %v1833 = vpop.f32.mrf.mxu0
    %v1834 = vadd.f32 %v1782, %v1833
    %v1835 = vpop.f32.mrf.mxu0
    %1836 = vdwg.mxu0
    %s1837 = scalar_lea.vmem %s9, 176
    %v1838 = vld [vmem:[%s1837] sm:$0xf]
    %v1839 = vld [vmem:[%s1837 + $0x4] sm:$0xf]
    %v1840 = vld [vmem:[%s1837 + $0x8] sm:$0xf]
    %v1841 = vld [vmem:[%s1837 + $0xc] sm:$0xf]
    %s1842 = scalar_lea.vmem %s10, 11
    %v1843 = vld [vmem:[%s1842] sm:$0x1]
    %v1845 = vlaneseq
    %v1846 = vshrl.u32 %v1845, 7
    %v1847 = vsub.s32 0, %v1846
    %v1848 = vrot.slane %v1843, %v1847
    %v1854 = vunpack.c.l.b16 %v1838
    %v1855 = vunpack.c.l.b16 %v1839
    %v1856 = vunpack.c.l.b16 %v1840
    %v1857 = vunpack.c.l.b16 %v1841
    %v1858 = vpack.c.b16 %v1855, %v1854
    %v1859 = vpack.c.b16 %v1857, %v1856
    %1862 = vmatprep.subr.bf16.mxu0 0
    %1863 = vmatpush1.bf16.msra.mxu0 0
    %1864 = vmatprep.subr.bf16.mxu0 0
    %1865 = vmatpush1.bf16.msra.mxu0 0
    %1866 = vmatprep.subr.bf16.mxu0 0
    %1867 = vmatpush1.bf16.msra.mxu0 0
    %1868 = vmatprep.subr.bf16.mxu0 0
    %1869 = vmatpush1.bf16.msra.mxu0 0
    %1870 = vmatprep.subr.bf16.mxu0 0
    %1871 = vmatpush1.bf16.msra.mxu0 0
    %1872 = vmatprep.subr.bf16.mxu0 0
    %1873 = vmatpush1.bf16.msra.mxu0 0
    %1874 = vmatprep.subr.bf16.mxu0 0
    %1875 = vmatpush1.bf16.msra.mxu0 %v1859
    %1876 = vmatprep.subr.bf16.mxu0 0
    %1877 = vmatpush1.bf16.msra.mxu0 %v1858
    %1878 = vmatprep.subr.bf16.mxu0 0
    %1879 = vmatpush2.bf16.msra.mxu0 0
    %1880 = vmatprep.subr.bf16.mxu0 0
    %1881 = vmatpush2.bf16.msra.mxu0 0
    %1882 = vmatprep.subr.bf16.mxu0 0
    %1883 = vmatpush2.bf16.msra.mxu0 0
    %1884 = vmatprep.subr.bf16.mxu0 0
    %1885 = vmatpush2.bf16.msra.mxu0 0
    %1886 = vmatprep.subr.bf16.mxu0 0
    %1887 = vmatpush2.bf16.msra.mxu0 0
    %1888 = vmatprep.subr.bf16.mxu0 0
    %1889 = vmatpush2.bf16.msra.mxu0 0
    %1890 = vmatprep.subr.bf16.mxu0 0
    %1891 = vmatpush2.bf16.msra.mxu0 0
    %1892 = vmatprep.subr.bf16.mxu0 0
    %1893 = vmatpush2.bf16.msra.mxu0 0
    %1894 = vmatprep.mubr.bf16.mxu0 0
    %1895 = vmatmul.mubr.bf16.gmra.mxu0 %v1365
    %v1896 = vpop.f32.mrf.mxu0
    %v1897 = vadd.f32 %v1848, %v1896
    %v1898 = vpop.f32.mrf.mxu0
    %v1899 = vpop.f32.mrf.mxu0
    %v1900 = vadd.f32 %v1848, %v1899
    %v1901 = vpop.f32.mrf.mxu0
    %1902 = vdwg.mxu0
    %v1903 = vpack.c.bf16 %v1768, %v1765
    %v1904 = vpack.c.bf16 %v1834, %v1831
    %v1906 = vsel %vm473, %v1903, 0
    %v1909 = vsel %vm473, %v1904, 0
    %1911 = vmatprep.subr.bf16.mxu0 0
    %1912 = vmatpush1.bf16.xpose.msra.mxu0 0
    %1913 = vmatprep.subr.bf16.mxu0 0
    %1914 = vmatpush1.bf16.xpose.msra.mxu0 0
    %1915 = vmatprep.subr.bf16.mxu0 0
    %1916 = vmatpush1.bf16.xpose.msra.mxu0 0
    %1917 = vmatprep.subr.bf16.mxu0 0
    %1918 = vmatpush1.bf16.xpose.msra.mxu0 0
    %1919 = vmatprep.subr.bf16.mxu0 0
    %1920 = vmatpush1.bf16.xpose.msra.mxu0 0
    %1921 = vmatprep.subr.bf16.mxu0 0
    %1922 = vmatpush1.bf16.xpose.msra.mxu0 0
    %1923 = vmatprep.subr.bf16.mxu0 0
    %1924 = vmatpush1.bf16.xpose.msra.mxu0 0
    %1925 = vmatprep.subr.bf16.mxu0 0
    %1926 = vmatpush1.bf16.xpose.msra.mxu0 %v1909
    %1927 = vmatprep.subr.bf16.mxu0 0
    %1928 = vmatpush2.bf16.xpose.msra.mxu0 0
    %1929 = vmatprep.subr.bf16.mxu0 0
    %1930 = vmatpush2.bf16.xpose.msra.mxu0 0
    %1931 = vmatprep.subr.bf16.mxu0 0
    %1932 = vmatpush2.bf16.xpose.msra.mxu0 0
    %1933 = vmatprep.subr.bf16.mxu0 0
    %1934 = vmatpush2.bf16.xpose.msra.mxu0 0
    %1935 = vmatprep.subr.bf16.mxu0 0
    %1936 = vmatpush2.bf16.xpose.msra.mxu0 0
    %1937 = vmatprep.subr.bf16.mxu0 0
    %1938 = vmatpush2.bf16.xpose.msra.mxu0 0
    %1939 = vmatprep.subr.bf16.mxu0 0
    %1940 = vmatpush2.bf16.xpose.msra.mxu0 0
    %1941 = vmatprep.subr.bf16.mxu0 0
    %1942 = vmatpush2.bf16.xpose.msra.mxu0 0
    %1943 = vmatprep.mubr.bf16.mxu0 0
    %1944 = vmatmul.mubr.bf16.gmra.mxu0 %v1906
    %v1945 = vpop.f32.mrf.mxu0
    %v1946 = vadd.f32 %v215, %v1945
    %v1947 = vpop.f32.mrf.mxu0
    %v1948 = vpop.f32.mrf.mxu0
    %v1949 = vadd.f32 %v216, %v1948
    %v1950 = vpop.f32.mrf.mxu0
    %1951 = vdwg.mxu0
    %v1952 = vmul.f32 %v1946, 1.442695
    %v1953 = vpow.pop %v1952
    %v1954 = vmul.f32 %v1949, 1.442695
    %v1955 = vpow.pop %v1954
    %v1956 = vsel %vm473, %v1953, 0.0
    %1957 = vadd.xlane.f32.xlu0 %v1956
    %v1958 = vpop.xlane.xlu0 %1957
    %v1959 = vsel %vm473, %v1955, 0.0
    %1960 = vadd.xlane.f32.xlu0 %v1959
    %v1961 = vpop.xlane.xlu0 %1960
    %v1962 = vrcp.pop %v1958
    %v1963 = vrcp.pop %v1961
    %v1964 = vmul.f32 %v1953, %v1962
    %v1965 = vmul.f32 %v1955, %v1963
    %v1966 = vpack.c.bf16 %v1965, %v1964
    %v1967 = vpack.c.bf16 %v1900, %v1897
    %v1969 = vsel %vm473, %v1966, 0
    %1971 = vmatprep.subr.bf16.mxu0 0
    %1972 = vmatpush1.bf16.msra.mxu0 0
    %1973 = vmatprep.subr.bf16.mxu0 0
    %1974 = vmatpush1.bf16.msra.mxu0 0
    %1975 = vmatprep.subr.bf16.mxu0 0
    %1976 = vmatpush1.bf16.msra.mxu0 0
    %1977 = vmatprep.subr.bf16.mxu0 0
    %1978 = vmatpush1.bf16.msra.mxu0 0
    %1979 = vmatprep.subr.bf16.mxu0 0
    %1980 = vmatpush1.bf16.msra.mxu0 0
    %1981 = vmatprep.subr.bf16.mxu0 0
    %1982 = vmatpush1.bf16.msra.mxu0 0
    %1983 = vmatprep.subr.bf16.mxu0 0
    %1984 = vmatpush1.bf16.msra.mxu0 0
    %1985 = vmatprep.subr.bf16.mxu0 0
    %1986 = vmatpush1.bf16.msra.mxu0 %v1967
    %1987 = vmatprep.subr.bf16.mxu0 0
    %1988 = vmatpush2.bf16.msra.mxu0 0
    %1989 = vmatprep.subr.bf16.mxu0 0
    %1990 = vmatpush2.bf16.msra.mxu0 0
    %1991 = vmatprep.subr.bf16.mxu0 0
    %1992 = vmatpush2.bf16.msra.mxu0 0
    %1993 = vmatprep.subr.bf16.mxu0 0
    %1994 = vmatpush2.bf16.msra.mxu0 0
    %1995 = vmatprep.subr.bf16.mxu0 0
    %1996 = vmatpush2.bf16.msra.mxu0 0
    %1997 = vmatprep.subr.bf16.mxu0 0
    %1998 = vmatpush2.bf16.msra.mxu0 0
    %1999 = vmatprep.subr.bf16.mxu0 0
    %2000 = vmatpush2.bf16.msra.mxu0 0
    %2001 = vmatprep.subr.bf16.mxu0 0
    %2002 = vmatpush2.bf16.msra.mxu0 0
    %2003 = vmatprep.mubr.bf16.mxu0 0
    %2004 = vmatmul.mubr.bf16.gmra.mxu0 %v1969
    %v2005 = vpop.f32.mrf.mxu0
    %v2006 = vadd.f32 0.0, %v2005
    %v2007 = vpop.f32.mrf.mxu0
    %v2008 = vpop.f32.mrf.mxu0
    %v2009 = vadd.f32 0.0, %v2008
    %v2010 = vpop.f32.mrf.mxu0
    %2011 = vdwg.mxu0
    %v2012 = vpack.c.bf16 %v2009, %v2006
    %s2013 = scalar_lea.vmem %s11, 24
    %v2014 = vld [vmem:[%s2013] sm:$0xf]
    %v2015 = vld [vmem:[%s2013 + $0x4] sm:$0xf]
    %v2018 = vunpack.c.l.b16 %v2014
    %v2019 = vunpack.c.l.b16 %v2015
    %v2020 = vpack.c.b16 %v2019, %v2018
    %v2023 = vsel %vm473, %v2012, 0
    %2025 = vmatprep.subr.bf16.mxu0 0
    %2026 = vmatpush1.bf16.msra.mxu0 0
    %2027 = vmatprep.subr.bf16.mxu0 0
    %2028 = vmatpush1.bf16.msra.mxu0 0
    %2029 = vmatprep.subr.bf16.mxu0 0
    %2030 = vmatpush1.bf16.msra.mxu0 0
    %2031 = vmatprep.subr.bf16.mxu0 0
    %2032 = vmatpush1.bf16.msra.mxu0 0
    %2033 = vmatprep.subr.bf16.mxu0 0
    %2034 = vmatpush1.bf16.msra.mxu0 0
    %2035 = vmatprep.subr.bf16.mxu0 0
    %2036 = vmatpush1.bf16.msra.mxu0 0
    %2037 = vmatprep.subr.bf16.mxu0 0
    %2038 = vmatpush1.bf16.msra.mxu0 0
    %2039 = vmatprep.subr.bf16.mxu0 0
    %2040 = vmatpush1.bf16.msra.mxu0 %v2020
    %2041 = vmatprep.subr.bf16.mxu0 0
    %2042 = vmatpush2.bf16.msra.mxu0 0
    %2043 = vmatprep.subr.bf16.mxu0 0
    %2044 = vmatpush2.bf16.msra.mxu0 0
    %2045 = vmatprep.subr.bf16.mxu0 0
    %2046 = vmatpush2.bf16.msra.mxu0 0
    %2047 = vmatprep.subr.bf16.mxu0 0
    %2048 = vmatpush2.bf16.msra.mxu0 0
    %2049 = vmatprep.subr.bf16.mxu0 0
    %2050 = vmatpush2.bf16.msra.mxu0 0
    %2051 = vmatprep.subr.bf16.mxu0 0
    %2052 = vmatpush2.bf16.msra.mxu0 0
    %2053 = vmatprep.subr.bf16.mxu0 0
    %2054 = vmatpush2.bf16.msra.mxu0 0
    %2055 = vmatprep.subr.bf16.mxu0 0
    %2056 = vmatpush2.bf16.msra.mxu0 0
    %2057 = vmatprep.mubr.bf16.mxu0 0
    %2058 = vmatmul.mubr.bf16.gmra.mxu0 %v2023
    %v2059 = vpop.f32.mrf.mxu0
    %v2060 = vadd.f32 0.0, %v2059
    %v2061 = vpop.f32.mrf.mxu0
    %v2062 = vpop.f32.mrf.mxu0
    %v2063 = vadd.f32 0.0, %v2062
    %v2064 = vpop.f32.mrf.mxu0
    %2065 = vdwg.mxu0
    %v2066 = vadd.f32 %v1703, %v2060
    %v2067 = vadd.f32 %v1704, %v2063
    %s2068 = scalar_lea.vmem %s13, 1
    %v2069 = vld [vmem:[%s2068] sm:$0x1]
    %s2070 = scalar_lea.vmem %s14, 1
    %v2071 = vld [vmem:[%s2070] sm:$0x1]
    %v2072 = vsel %vm106, %v2066, 0.0
    %2073 = vadd.xlane.f32.xlu0 %v2072
    %v2074 = vpop.xlane.xlu0 %2073
    %v2075 = vsel %vm106, %v2067, 0.0
    %2076 = vadd.xlane.f32.xlu0 %v2075
    %v2077 = vpop.xlane.xlu0 %2076
    %v2078 = vmul.f32 %v2074, %v225
    %v2079 = vmul.f32 %v2077, %v225
    %v2080 = vsub.f32 %v2066, %v2078
    %v2081 = vsub.f32 %v2067, %v2079
    %v2082 = vmul.f32 %v2080, %v2080
    %v2083 = vmul.f32 %v2081, %v2081
    %v2084 = vsel %vm106, %v2082, 0.0
    %2085 = vadd.xlane.f32.xlu0 %v2084
    %v2086 = vpop.xlane.xlu0 %2085
    %v2087 = vsel %vm106, %v2083, 0.0
    %2088 = vadd.xlane.f32.xlu0 %v2087
    %v2089 = vpop.xlane.xlu0 %2088
    %v2090 = vmul.f32 %v2086, %v225
    %v2091 = vmul.f32 %v2089, %v225
    %v2092 = vadd.f32 %v2090, 1e-05
    %v2093 = vadd.f32 %v2091, 1e-05
    %v2094 = vrsqrt.pop %v2092
    %v2095 = vrsqrt.pop %v2093
    %v2096 = vmul.f32 %v2080, %v2094
    %v2097 = vmul.f32 %v2081, %v2095
    %v2099 = vlaneseq
    %v2100 = vshrl.u32 %v2099, 7
    %v2101 = vsub.s32 0, %v2100
    %v2102 = vrot.slane %v2069, %v2101
    %v2104 = vmul.f32 %v2096, %v2102
    %v2105 = vmul.f32 %v2097, %v2102
    %v2107 = vlaneseq
    %v2108 = vshrl.u32 %v2107, 7
    %v2109 = vsub.s32 0, %v2108
    %v2110 = vrot.slane %v2071, %v2109
    %v2112 = vadd.f32 %v2104, %v2110
    %v2113 = vadd.f32 %v2105, %v2110
    %v2114 = vpack.c.bf16 %v2113, %v2112
    %s2115 = scalar_lea.vmem %s15, 16
    %v2116 = vld [vmem:[%s2115] sm:$0xf]
    %v2117 = vld [vmem:[%s2115 + $0x4] sm:$0xf]
    %v2118 = vld [vmem:[%s2115 + $0x8] sm:$0xf]
    %v2119 = vld [vmem:[%s2115 + $0xc] sm:$0xf]
    %s2120 = scalar_lea.vmem %s16, 1
    %v2121 = vld [vmem:[%s2120] sm:$0x1]
    %v2123 = vlaneseq
    %v2124 = vshrl.u32 %v2123, 7
    %v2125 = vsub.s32 0, %v2124
    %v2126 = vrot.slane %v2121, %v2125
    %v2132 = vunpack.c.l.b16 %v2116
    %v2133 = vunpack.c.l.b16 %v2117
    %v2134 = vunpack.c.l.b16 %v2118
    %v2135 = vunpack.c.l.b16 %v2119
    %v2136 = vpack.c.b16 %v2133, %v2132
    %v2137 = vpack.c.b16 %v2135, %v2134
    %v2141 = vsel %vm106, %v2114, 0
    %2143 = vmatprep.subr.bf16.mxu0 0
    %2144 = vmatpush1.bf16.msra.mxu0 0
    %2145 = vmatprep.subr.bf16.mxu0 0
    %2146 = vmatpush1.bf16.msra.mxu0 0
    %2147 = vmatprep.subr.bf16.mxu0 0
    %2148 = vmatpush1.bf16.msra.mxu0 0
    %2149 = vmatprep.subr.bf16.mxu0 0
    %2150 = vmatpush1.bf16.msra.mxu0 0
    %2151 = vmatprep.subr.bf16.mxu0 0
    %2152 = vmatpush1.bf16.msra.mxu0 0
    %2153 = vmatprep.subr.bf16.mxu0 0
    %2154 = vmatpush1.bf16.msra.mxu0 0
    %2155 = vmatprep.subr.bf16.mxu0 0
    %2156 = vmatpush1.bf16.msra.mxu0 %v2137
    %2157 = vmatprep.subr.bf16.mxu0 0
    %2158 = vmatpush1.bf16.msra.mxu0 %v2136
    %2159 = vmatprep.subr.bf16.mxu0 0
    %2160 = vmatpush2.bf16.msra.mxu0 0
    %2161 = vmatprep.subr.bf16.mxu0 0
    %2162 = vmatpush2.bf16.msra.mxu0 0
    %2163 = vmatprep.subr.bf16.mxu0 0
    %2164 = vmatpush2.bf16.msra.mxu0 0
    %2165 = vmatprep.subr.bf16.mxu0 0
    %2166 = vmatpush2.bf16.msra.mxu0 0
    %2167 = vmatprep.subr.bf16.mxu0 0
    %2168 = vmatpush2.bf16.msra.mxu0 0
    %2169 = vmatprep.subr.bf16.mxu0 0
    %2170 = vmatpush2.bf16.msra.mxu0 0
    %2171 = vmatprep.subr.bf16.mxu0 0
    %2172 = vmatpush2.bf16.msra.mxu0 0
    %2173 = vmatprep.subr.bf16.mxu0 0
    %2174 = vmatpush2.bf16.msra.mxu0 0
    %2175 = vmatprep.mubr.bf16.mxu0 0
    %2176 = vmatmul.mubr.bf16.gmra.mxu0 %v2141
    %v2177 = vpop.f32.mrf.mxu0
    %v2178 = vadd.f32 %v2126, %v2177
    %v2179 = vpop.f32.mrf.mxu0
    %v2180 = vpop.f32.mrf.mxu0
    %v2181 = vadd.f32 %v2126, %v2180
    %v2182 = vpop.f32.mrf.mxu0
    %2183 = vdwg.mxu0
    %v2184 = vmul.f32 %v2178, 0.5
    %v2185 = vmul.f32 %v2181, 0.5
    %v2186 = vmul.f32 %v2178, 0.70710677
    %v2187 = vmul.f32 %v2181, 0.70710677
    %vm2188 = vcmp.ge.f32.partialorder %v2186, 0.0
    %vm2189 = vcmp.ge.f32.partialorder %v2187, 0.0
    %v2190 = vsel %vm2188, 1.0, -1.0
    %v2191 = vsel %vm2189, 1.0, -1.0
    %v2192 = vand.u32 2147483647, %v2186
    %v2193 = vand.u32 2147483647, %v2187
    %v2194 = vmul.f32 %v2192, 0.3275911
    %v2195 = vmul.f32 %v2193, 0.3275911
    %v2196 = vadd.f32 %v2194, 1.0
    %v2197 = vadd.f32 %v2195, 1.0
    %v2198 = vrcp.pop %v2196
    %v2199 = vmul.f32 1.0, %v2198
    %v2200 = vrcp.pop %v2197
    %v2201 = vmul.f32 1.0, %v2200
    %v2202 = vmul.f32 %v2199, 1.0614054
    %v2203 = vmul.f32 %v2201, 1.0614054
    %v2204 = vadd.f32 %v2202, -1.4531521
    %v2205 = vadd.f32 %v2203, -1.4531521
    %v2206 = vmul.f32 %v2204, %v2199
    %v2207 = vmul.f32 %v2205, %v2201
    %v2208 = vadd.f32 %v2206, 1.4214138
    %v2209 = vadd.f32 %v2207, 1.4214138
    %v2210 = vmul.f32 %v2208, %v2199
    %v2211 = vmul.f32 %v2209, %v2201
    %v2212 = vadd.f32 %v2210, -0.28449672
    %v2213 = vadd.f32 %v2211, -0.28449672
    %v2214 = vmul.f32 %v2212, %v2199
    %v2215 = vmul.f32 %v2213, %v2201
    %v2216 = vadd.f32 %v2214, 0.2548296
    %v2217 = vadd.f32 %v2215, 0.2548296
    %v2218 = vmul.f32 %v2216, %v2199
    %v2219 = vmul.f32 %v2217, %v2201
    %v2220 = vsub.f32 0.0, %v2192
    %v2221 = vsub.f32 0.0, %v2193
    %v2222 = vmul.f32 %v2220, %v2192
    %v2223 = vmul.f32 %v2221, %v2193
    %v2224 = vmul.f32 %v2222, 1.442695
    %v2225 = vpow.pop %v2224
    %v2226 = vmul.f32 %v2223, 1.442695
    %v2227 = vpow.pop %v2226
    %v2228 = vmul.f32 %v2218, %v2225
    %v2229 = vmul.f32 %v2219, %v2227
    %v2230 = vsub.f32 1.0, %v2228
    %v2231 = vsub.f32 1.0, %v2229
    %v2232 = vmul.f32 %v2190, %v2230
    %v2233 = vmul.f32 %v2191, %v2231
    %v2234 = vadd.f32 %v2232, 1.0
    %v2235 = vadd.f32 %v2233, 1.0
    %v2236 = vmul.f32 %v2184, %v2234
    %v2237 = vmul.f32 %v2185, %v2235
    %v2238 = vpack.c.bf16 %v2237, %v2236
    %s2239 = scalar_lea.vmem %s17, 64
    %v2240 = vld [vmem:[%s2239] sm:$0xf]
    %v2241 = vld [vmem:[%s2239 + $0x4] sm:$0xf]
    %v2242 = vld [vmem:[%s2239 + $0x8] sm:$0xf]
    %v2243 = vld [vmem:[%s2239 + $0xc] sm:$0xf]
    %v2244 = vld [vmem:[%s2239 + $0x10] sm:$0xf]
    %v2245 = vld [vmem:[%s2239 + $0x14] sm:$0xf]
    %v2246 = vld [vmem:[%s2239 + $0x18] sm:$0xf]
    %v2247 = vld [vmem:[%s2239 + $0x1c] sm:$0xf]
    %v2248 = vld [vmem:[%s2239 + $0x20] sm:$0xf]
    %v2249 = vld [vmem:[%s2239 + $0x24] sm:$0xf]
    %v2250 = vld [vmem:[%s2239 + $0x28] sm:$0xf]
    %v2251 = vld [vmem:[%s2239 + $0x2c] sm:$0xf]
    %v2252 = vld [vmem:[%s2239 + $0x30] sm:$0xf]
    %v2253 = vld [vmem:[%s2239 + $0x34] sm:$0xf]
    %v2254 = vld [vmem:[%s2239 + $0x38] sm:$0xf]
    %v2255 = vld [vmem:[%s2239 + $0x3c] sm:$0xf]
    %v2272 = vunpack.c.l.b16 %v2240
    %v2273 = vunpack.c.l.b16 %v2241
    %v2274 = vunpack.c.l.b16 %v2242
    %v2275 = vunpack.c.l.b16 %v2243
    %v2276 = vunpack.c.l.b16 %v2244
    %v2277 = vunpack.c.l.b16 %v2245
    %v2278 = vunpack.c.l.b16 %v2246
    %v2279 = vunpack.c.l.b16 %v2247
    %v2280 = vunpack.c.l.b16 %v2248
    %v2281 = vunpack.c.l.b16 %v2249
    %v2282 = vunpack.c.l.b16 %v2250
    %v2283 = vunpack.c.l.b16 %v2251
    %v2284 = vunpack.c.l.b16 %v2252
    %v2285 = vunpack.c.l.b16 %v2253
    %v2286 = vunpack.c.l.b16 %v2254
    %v2287 = vunpack.c.l.b16 %v2255
    %v2288 = vpack.c.b16 %v2273, %v2272
    %v2289 = vpack.c.b16 %v2275, %v2274
    %v2290 = vpack.c.b16 %v2277, %v2276
    %v2291 = vpack.c.b16 %v2279, %v2278
    %v2292 = vpack.c.b16 %v2281, %v2280
    %v2293 = vpack.c.b16 %v2283, %v2282
    %v2294 = vpack.c.b16 %v2285, %v2284
    %v2295 = vpack.c.b16 %v2287, %v2286
    %2304 = vmatprep.subr.bf16.mxu0 0
    %2305 = vmatpush1.bf16.msra.mxu0 %v2295
    %2306 = vmatprep.subr.bf16.mxu0 0
    %2307 = vmatpush1.bf16.msra.mxu0 %v2294
    %2308 = vmatprep.subr.bf16.mxu0 0
    %2309 = vmatpush1.bf16.msra.mxu0 %v2293
    %2310 = vmatprep.subr.bf16.mxu0 0
    %2311 = vmatpush1.bf16.msra.mxu0 %v2292
    %2312 = vmatprep.subr.bf16.mxu0 0
    %2313 = vmatpush1.bf16.msra.mxu0 %v2291
    %2314 = vmatprep.subr.bf16.mxu0 0
    %2315 = vmatpush1.bf16.msra.mxu0 %v2290
    %2316 = vmatprep.subr.bf16.mxu0 0
    %2317 = vmatpush1.bf16.msra.mxu0 %v2289
    %2318 = vmatprep.subr.bf16.mxu0 0
    %2319 = vmatpush1.bf16.msra.mxu0 %v2288
    %2320 = vmatprep.subr.bf16.mxu0 0
    %2321 = vmatpush2.bf16.msra.mxu0 0
    %2322 = vmatprep.subr.bf16.mxu0 0
    %2323 = vmatpush2.bf16.msra.mxu0 0
    %2324 = vmatprep.subr.bf16.mxu0 0
    %2325 = vmatpush2.bf16.msra.mxu0 0
    %2326 = vmatprep.subr.bf16.mxu0 0
    %2327 = vmatpush2.bf16.msra.mxu0 0
    %2328 = vmatprep.subr.bf16.mxu0 0
    %2329 = vmatpush2.bf16.msra.mxu0 0
    %2330 = vmatprep.subr.bf16.mxu0 0
    %2331 = vmatpush2.bf16.msra.mxu0 0
    %2332 = vmatprep.subr.bf16.mxu0 0
    %2333 = vmatpush2.bf16.msra.mxu0 0
    %2334 = vmatprep.subr.bf16.mxu0 0
    %2335 = vmatpush2.bf16.msra.mxu0 0
    %2336 = vmatprep.mubr.bf16.mxu0 0
    %2337 = vmatmul.mubr.bf16.gmra.mxu0 %v2238
    %v2338 = vpop.f32.mrf.mxu0
    %v2339 = vadd.f32 0.0, %v2338
    %v2340 = vpop.f32.mrf.mxu0
    %v2341 = vpop.f32.mrf.mxu0
    %v2342 = vadd.f32 0.0, %v2341
    %v2343 = vpop.f32.mrf.mxu0
    %2344 = vdwg.mxu0
    %v2345 = vadd.f32 %v2066, %v2339
    %v2346 = vadd.f32 %v2067, %v2342
    %s2347 = scalar_lea.vmem %s18, 1
    %v2348 = vld [vmem:[%s2347] sm:$0x1]
    %v2350 = vlaneseq
    %v2351 = vshrl.u32 %v2350, 7
    %v2352 = vsub.s32 0, %v2351
    %v2353 = vrot.slane %v2348, %v2352
    %v2355 = vadd.f32 %v2345, %v2353
    %v2356 = vadd.f32 %v2346, %v2353
    %v2357 = vld [vmem:[%s19] sm:$0x1]
    %v2358 = vld [vmem:[%s20] sm:$0x1]
    %v2359 = vsel %vm106, %v2355, 0.0
    %2360 = vadd.xlane.f32.xlu0 %v2359
    %v2361 = vpop.xlane.xlu0 %2360
    %v2362 = vsel %vm106, %v2356, 0.0
    %2363 = vadd.xlane.f32.xlu0 %v2362
    %v2364 = vpop.xlane.xlu0 %2363
    %v2365 = vmul.f32 %v2361, %v225
    %v2366 = vmul.f32 %v2364, %v225
    %v2367 = vsub.f32 %v2355, %v2365
    %v2368 = vsub.f32 %v2356, %v2366
    %v2369 = vmul.f32 %v2367, %v2367
    %v2370 = vmul.f32 %v2368, %v2368
    %v2371 = vsel %vm106, %v2369, 0.0
    %2372 = vadd.xlane.f32.xlu0 %v2371
    %v2373 = vpop.xlane.xlu0 %2372
    %v2374 = vsel %vm106, %v2370, 0.0
    %2375 = vadd.xlane.f32.xlu0 %v2374
    %v2376 = vpop.xlane.xlu0 %2375
    %v2377 = vmul.f32 %v2373, %v225
    %v2378 = vmul.f32 %v2376, %v225
    %v2379 = vadd.f32 %v2377, 1e-05
    %v2380 = vadd.f32 %v2378, 1e-05
    %v2381 = vrsqrt.pop %v2379
    %v2382 = vrsqrt.pop %v2380
    %v2383 = vmul.f32 %v2367, %v2381
    %v2384 = vmul.f32 %v2368, %v2382
    %v2386 = vlaneseq
    %v2387 = vshrl.u32 %v2386, 7
    %v2388 = vsub.s32 0, %v2387
    %v2389 = vrot.slane %v2357, %v2388
    %v2391 = vmul.f32 %v2383, %v2389
    %v2392 = vmul.f32 %v2384, %v2389
    %v2394 = vlaneseq
    %v2395 = vshrl.u32 %v2394, 7
    %v2396 = vsub.s32 0, %v2395
    %v2397 = vrot.slane %v2358, %v2396
    %v2399 = vadd.f32 %v2391, %v2397
    %v2400 = vadd.f32 %v2392, %v2397
    %v2401 = vpack.c.bf16 %v2400, %v2399
    %v2402 = vld [vmem:[%s21] sm:$0xf]
    %v2403 = vld [vmem:[%s21 + $0x4] sm:$0xf]
    %v2404 = vld [vmem:[%s21 + $0x8] sm:$0xf]
    %v2405 = vld [vmem:[%s21 + $0xc] sm:$0xf]
    %v2410 = vunpack.c.l.b16 %v2402
    %v2411 = vunpack.c.l.b16 %v2403
    %v2412 = vunpack.c.l.b16 %v2404
    %v2413 = vunpack.c.l.b16 %v2405
    %v2414 = vpack.c.b16 %v2411, %v2410
    %v2415 = vpack.c.b16 %v2413, %v2412
    %v2419 = vsel %vm106, %v2401, 0
    %2421 = vmatprep.subr.bf16.mxu0 0
    %2422 = vmatpush1.bf16.msra.mxu0 0
    %2423 = vmatprep.subr.bf16.mxu0 0
    %2424 = vmatpush1.bf16.msra.mxu0 0
    %2425 = vmatprep.subr.bf16.mxu0 0
    %2426 = vmatpush1.bf16.msra.mxu0 0
    %2427 = vmatprep.subr.bf16.mxu0 0
    %2428 = vmatpush1.bf16.msra.mxu0 0
    %2429 = vmatprep.subr.bf16.mxu0 0
    %2430 = vmatpush1.bf16.msra.mxu0 0
    %2431 = vmatprep.subr.bf16.mxu0 0
    %2432 = vmatpush1.bf16.msra.mxu0 0
    %2433 = vmatprep.subr.bf16.mxu0 0
    %2434 = vmatpush1.bf16.msra.mxu0 %v2415
    %2435 = vmatprep.subr.bf16.mxu0 0
    %2436 = vmatpush1.bf16.msra.mxu0 %v2414
    %2437 = vmatprep.subr.bf16.mxu0 0
    %2438 = vmatpush2.bf16.msra.mxu0 0
    %2439 = vmatprep.subr.bf16.mxu0 0
    %2440 = vmatpush2.bf16.msra.mxu0 0
    %2441 = vmatprep.subr.bf16.mxu0 0
    %2442 = vmatpush2.bf16.msra.mxu0 0
    %2443 = vmatprep.subr.bf16.mxu0 0
    %2444 = vmatpush2.bf16.msra.mxu0 0
    %2445 = vmatprep.subr.bf16.mxu0 0
    %2446 = vmatpush2.bf16.msra.mxu0 0
    %2447 = vmatprep.subr.bf16.mxu0 0
    %2448 = vmatpush2.bf16.msra.mxu0 0
    %2449 = vmatprep.subr.bf16.mxu0 0
    %2450 = vmatpush2.bf16.msra.mxu0 0
    %2451 = vmatprep.subr.bf16.mxu0 0
    %2452 = vmatpush2.bf16.msra.mxu0 0
    %2453 = vmatprep.mubr.bf16.mxu0 0
    %2454 = vmatmul.mubr.bf16.gmra.mxu0 %v2419
    %v2455 = vpop.f32.mrf.mxu0
    %v2456 = vadd.f32 0.0, %v2455
    %v2457 = vpop.f32.mrf.mxu0
    %v2458 = vpop.f32.mrf.mxu0
    %v2459 = vadd.f32 0.0, %v2458
    %v2460 = vpop.f32.mrf.mxu0
    %2461 = vdwg.mxu0
    %2462 = vst.msk [vmem:[#allocation2] sm:$0xff] %vm106, %v2456
    %2463 = vst.msk [vmem:[#allocation2 + $0x8] sm:$0xff] %vm106, %v2459
    // Predicated region
    $region90: #{forward.1} parent=1 // pred_check
      _
    $region91: #{forward.1} parent=1 // pred_check_branch
      %2465 = sbr.rel (0) target = $region93
    $region92: #{forward.1} parent=1 // pred_region
      %s2467 = ssub.s32 256, 256
      %2468 = vsyncadd [#allocation3], %s2467
      %s2469 = sshll.u32 [#allocation2], 4
      %s2470 = int_to_ptr.vmem [resolvable:$true] %s2469
      %2475 = dma.vmem_to_hbm [thread:$0]  %s2470, 256, %s22, [#allocation3], 128, 128, 8
    $region93: #{forward.1} parent=1 // pred_fallthru
      _
    // Predicated region
    $region94: #{forward.1} parent=1 // pred_check
      _
    $region95: #{forward.1} parent=1 // pred_check_branch
      %2477 = sbr.rel (0) target = $region97
    $region96: #{forward.1} parent=1 // pred_region
      %2478 = dma.done [#allocation3], 256
    $region97: #{forward.1} parent=1 // pred_fallthru
      _
    %2479 = vsyncpa [#allocation3], 1

</llo_original>
